<compile_context>
chip_gen: v7x
topology: tpu7x:2x2x1
jax: 0.10.0
libtpu: 0.0.40
codegen_flags: <defaults>
</compile_context>

<pallas_src>
import functools
import math

import jax
import jax.numpy as jnp
from jax.experimental import pallas as pl
from jax.experimental.pallas import tpu as pltpu

_INV_SQRT2 = 1.0 / math.sqrt(2.0)


def _round_up(x, m):
    return ((x + m - 1) // m) * m


def _gelu_exact_f32(x):
    # matches torch.nn.GELU(approximate='none')
    return 0.5 * x * (1.0 + jax.lax.erf(x * _INV_SQRT2))


# ---------------------------------------------------------------------------
# Kernel 1: rmsnorm1 -> multi-head causal self-attention -> out proj -> residual
# ---------------------------------------------------------------------------
def _attn_block_kernel(x_ref, g1_ref, wq_ref, bq_ref, wk_ref, bk_ref,
                       wv_ref, bv_ref, wo_ref, bo_ref, o_ref,
                       *, n_heads, h_dim, eps):
    x = x_ref[...]                                        # (T, E), native dtype
    xf = x.astype(jnp.float32)

    # RMSNorm1 in f32 (torch does x.float())
    rms = jnp.sqrt(jnp.mean(xf * xf, axis=-1, keepdims=True) + eps)
    xn_f = (xf / rms) * g1_ref[...].astype(jnp.float32)
    xn = xn_f.astype(wq_ref.dtype)                        # native dtype into the MXU

    T = x.shape[0]
    row = jax.lax.broadcasted_iota(jnp.int32, (T, T), 0)
    col = jax.lax.broadcasted_iota(jnp.int32, (T, T), 1)
    causal = row >= col
    scale = 1.0 / math.sqrt(h_dim)

    acc = jnp.zeros_like(xf)                              # (T, E) f32
    for h in range(n_heads):                              # static unroll over heads
        q = jnp.dot(xn, wq_ref[h], preferred_element_type=jnp.float32) \
            + bq_ref[h].astype(jnp.float32)
        k = jnp.dot(xn, wk_ref[h], preferred_element_type=jnp.float32) \
            + bk_ref[h].astype(jnp.float32)
        v = jnp.dot(xn, wv_ref[h], preferred_element_type=jnp.float32) \
            + bv_ref[h].astype(jnp.float32)

        s = jnp.einsum("td,sd->ts", q, k, preferred_element_type=jnp.float32) * scale
        s = jnp.where(causal, s, jnp.float32(-1e30))
        s = s - jnp.max(s, axis=-1, keepdims=True)
        p = jnp.exp(s)
        p = p / jnp.sum(p, axis=-1, keepdims=True)

        o_h = jnp.dot(p, v, preferred_element_type=jnp.float32)          # (T, h_dim)
        # concat(heads) @ Wo  ==  sum_h o_h @ Wo[h*hd:(h+1)*hd, :]
        acc = acc + jnp.dot(o_h.astype(wo_ref.dtype), wo_ref[h],
                            preferred_element_type=jnp.float32)

    o_ref[...] = (xf + acc + bo_ref[...].astype(jnp.float32)).astype(o_ref.dtype)


def attention_block(x, g1, wq, bq, wk, bk, wv, bv, wo, bo, *, eps=1e-8):
    B, T, E = x.shape
    n_heads, _, h_dim = wq.shape
    g1_2d = g1.reshape(1, E)
    bo_2d = bo.reshape(1, E)

    return pl.pallas_call(
        functools.partial(_attn_block_kernel, n_heads=n_heads, h_dim=h_dim, eps=eps),
        out_shape=jax.ShapeDtypeStruct((B, T, E), x.dtype),
        grid_spec=pltpu.PrefetchScalarGridSpec(
            num_scalar_prefetch=0,
            grid=(B,),
            in_specs=[
                pl.BlockSpec((None, T, E), lambda b: (b, 0, 0)),           # x[b]
                pl.BlockSpec((1, E), lambda b: (0, 0)),                    # rmsnorm1 scale
                pl.BlockSpec((n_heads, E, h_dim), lambda b: (0, 0, 0)),    # Wq (per head)
                pl.BlockSpec((n_heads, 1, h_dim), lambda b: (0, 0, 0)),    # bq
                pl.BlockSpec((n_heads, E, h_dim), lambda b: (0, 0, 0)),    # Wk
                pl.BlockSpec((n_heads, 1, h_dim), lambda b: (0, 0, 0)),    # bk
                pl.BlockSpec((n_heads, E, h_dim), lambda b: (0, 0, 0)),    # Wv
                pl.BlockSpec((n_heads, 1, h_dim), lambda b: (0, 0, 0)),    # bv
                pl.BlockSpec((n_heads, h_dim, E), lambda b: (0, 0, 0)),    # Wo (per-head rows)
                pl.BlockSpec((1, E), lambda b: (0, 0)),                    # bo
            ],
            out_specs=pl.BlockSpec((None, T, E), lambda b: (b, 0, 0)),
        ),
        compiler_params=pltpu.CompilerParams(dimension_semantics=("parallel",)),
    )(x, g1_2d, wq, bq, wk, bk, wv, bv, wo, bo_2d)


# ---------------------------------------------------------------------------
# Kernel 2: rmsnorm2 -> fc1 -> GELU -> fc2 -> (eval dropout) -> residual
# tiled over rows (parallel) and the hidden dim (arbitrary, f32 accumulator)
# ---------------------------------------------------------------------------
def _ffn_block_kernel(x_ref, g2_ref, w1_ref, b1_ref, w2_ref, b2_ref, o_ref,
                      acc_ref, *, eps):
    h_idx = pl.program_id(1)

    @pl.when(h_idx == 0)
    def _init():
        acc_ref[...] = jnp.zeros_like(acc_ref)

    x = x_ref[...]                                        # (TM, E), native dtype
    xf = x.astype(jnp.float32)

    # RMSNorm2 in f32, then back to native dtype for the MXU
    rms = jnp.sqrt(jnp.mean(xf * xf, axis=-1, keepdims=True) + eps)
    xn = ((xf / rms) * g2_ref[...].astype(jnp.float32)).astype(w1_ref.dtype)

    # fc1 hidden block: (TM, E) @ (E, TH), f32 accumulation, bias + exact GELU in f32
    hact = jnp.dot(xn, w1_ref[...], preferred_element_type=jnp.float32) \
           + b1_ref[...].astype(jnp.float32)
    hact = _gelu_exact_f32(hact)

    # fc2 hidden block: (TM, TH) @ (TH, E), accumulated over hidden blocks
    acc_ref[...] += jnp.dot(hact.astype(w2_ref.dtype), w2_ref[...],
                            preferred_element_type=jnp.float32)

    @pl.when(h_idx == pl.num_programs(1) - 1)
    def _finalize():
        y = xf + acc_ref[...] + b2_ref[...].astype(jnp.float32)
        # TODO(synk): training-mode dropout not implemented (identity / eval mode).
        o_ref[...] = y.astype(o_ref.dtype)


def ffn_block(x, g2, w1, b1, w2, b2, *, eps=1e-8, tile_m=256, tile_h=512):
    B, T, E = x.shape
    H = w1.shape[1]
    M = B * T
    dtype = x.dtype
    itemsize = jnp.dtype(dtype).itemsize

    # dtype-aware sublane minimum for the row tile (f32: 8, bf16: 16, int8/fp8: 32)
    sub = {4: 8, 2: 16, 1: 32}.get(itemsize, 8)
    tile_m = _round_up(max(sub, min(tile_m, _round_up(M, sub))), sub)
    M_pad = _round_up(M, tile_m)

    # hidden tile: a multiple of 128 lanes that divides H (or full H if H % 128 != 0)
    if H % 128 == 0:
        tile_h = max(128, (min(tile_h, H) // 128) * 128)
        while H % tile_h != 0:
            tile_h -= 128
    else:
        tile_h = H

    x2d = x.reshape(M, E)
    if M_pad != M:
        x2d = jnp.pad(x2d, ((0, M_pad - M), (0, 0)))

    g2_2d = g2.reshape(1, E)
    b1_2d = b1.reshape(1, H)
    b2_2d = b2.reshape(1, E)

    grid = (M_pad // tile_m, H // tile_h)

    cost = pl.CostEstimate(
        flops=4 * M_pad * E * H,                # fc1 + fc2, 2 flops per MAC each
        transcendentals=M_pad * H,              # erf
        bytes_accessed=itemsize * (2 * M_pad * E + 2 * E * H + H + 2 * E),
    )

    out2d = pl.pallas_call(
        functools.partial(_ffn_block_kernel, eps=eps),
        out_shape=jax.ShapeDtypeStruct((M_pad, E), dtype),
        grid_spec=pltpu.PrefetchScalarGridSpec(
            num_scalar_prefetch=0,
            grid=grid,
            in_specs=[
                pl.BlockSpec((tile_m, E), lambda i, h: (i, 0)),   # rows (resident over h)
                pl.BlockSpec((1, E), lambda i, h: (0, 0)),        # rmsnorm2 scale
                pl.BlockSpec((E, tile_h), lambda i, h: (0, h)),   # w1 hidden block
                pl.BlockSpec((1, tile_h), lambda i, h: (0, h)),   # b1 hidden block
                pl.BlockSpec((tile_h, E), lambda i, h: (h, 0)),   # w2 hidden block
                pl.BlockSpec((1, E), lambda i, h: (0, 0)),        # b2
            ],
            out_specs=pl.BlockSpec((tile_m, E), lambda i, h: (i, 0)),
            scratch_shapes=[pltpu.VMEM((tile_m, E), jnp.float32)],
        ),
        compiler_params=pltpu.CompilerParams(
            dimension_semantics=("parallel", "arbitrary"),
        ),
        cost_estimate=cost,
    )(x2d, g2_2d, w1, b1_2d, w2, b2_2d)

    return out2d[:M].reshape(B, T, E)


def block_forward(x, p, *, eps=1e-8, tile_m=256, tile_h=512):
    y1 = attention_block(x, p["g1"], p["wq"], p["bq"], p["wk"], p["bk"],
                         p["wv"], p["bv"], p["wo"], p["bo"], eps=eps)
    y2 = ffn_block(y1, p["g2"], p["w1"], p["b1"], p["w2"], p["b2"],
                   eps=eps, tile_m=tile_m, tile_h=tile_h)
    return y2


# ---------------------------------------------------------------------------
# Parameter init (nn.Linear layouts, stored pre-transposed as (in, out))
# ---------------------------------------------------------------------------
def init_block_params(key, e_dim, n_heads, dtype=jnp.float32):
    h_dim = e_dim // n_heads
    hidden = 4 * e_dim
    ks = jax.random.split(key, 12)
    lim_e = 1.0 / math.sqrt(e_dim)
    lim_h = 1.0 / math.sqrt(hidden)

    def u(k, shape, lim):
        return jax.random.uniform(k, shape, dtype, minval=-lim, maxval=lim)

    return {
        "g1": jnp.ones((e_dim,), dtype),
        "g2": jnp.ones((e_dim,), dtype),
        "wq": u(ks[0], (n_heads, e_dim, h_dim), lim_e),
        "bq": u(ks[1], (n_heads, 1, h_dim), lim_e),
        "wk": u(ks[2], (n_heads, e_dim, h_dim), lim_e),
        "bk": u(ks[3], (n_heads, 1, h_dim), lim_e),
        "wv": u(ks[4], (n_heads, e_dim, h_dim), lim_e),
        "bv": u(ks[5], (n_heads, 1, h_dim), lim_e),
        "wo": u(ks[6], (n_heads, h_dim, e_dim), lim_e),
        "bo": u(ks[7], (e_dim,), lim_e),
        "w1": u(ks[8], (e_dim, hidden), lim_e),
        "b1": u(ks[9], (hidden,), lim_e),
        "w2": u(ks[10], (hidden, e_dim), lim_h),
        "b2": u(ks[11], (e_dim,), lim_h),
    }


# ---------------------------------------------------------------------------
# Pure-JAX reference (same math as the torch Block forward, eval mode)
# ---------------------------------------------------------------------------
def _rmsnorm_ref(x, scale, eps):
    xf = x.astype(jnp.float32)
    rms = jnp.sqrt(jnp.mean(xf * xf, axis=-1, keepdims=True) + eps)
    return scale.astype(jnp.float32) * (xf / rms)


def block_reference(x, p, eps=1e-8):
    P = jax.lax.Precision.HIGHEST
    B, T, E = x.shape
    n_heads, _, h_dim = p["wq"].shape
    xf = x.astype(jnp.float32)

    xn1 = _rmsnorm_ref(x, p["g1"], eps)
    causal = jnp.arange(T)[:, None] >= jnp.arange(T)[None, :]
    attn = jnp.zeros((B, T, E), jnp.float32)
    for h in range(n_heads):
        q = jnp.einsum("bte,ed->btd", xn1, p["wq"][h], precision=P) + p["bq"][h]
        k = jnp.einsum("bte,ed->btd", xn1, p["wk"][h], precision=P) + p["bk"][h]
        v = jnp.einsum("bte,ed->btd", xn1, p["wv"][h], precision=P) + p["bv"][h]
        s = jnp.einsum("btd,bsd->bts", q, k, precision=P) / math.sqrt(h_dim)
        s = jnp.where(causal[None], s, jnp.float32(-1e30))
        s = s - jnp.max(s, axis=-1, keepdims=True)
        w = jnp.exp(s)
        w = w / jnp.sum(w, axis=-1, keepdims=True)
        o = jnp.einsum("bts,bsd->btd", w, v, precision=P)
        attn = attn + jnp.einsum("btd,de->bte", o, p["wo"][h], precision=P)
    y1 = xf + attn + p["bo"]

    xn2 = _rmsnorm_ref(y1, p["g2"], eps)
    h1 = jnp.einsum("bte,eh->bth", xn2, p["w1"], precision=P) + p["b1"]
    h1 = _gelu_exact_f32(h1)
    ffn = jnp.einsum("bth,he->bte", h1, p["w2"], precision=P) + p["b2"]
    return y1 + ffn


if __name__ == "__main__":
    # small but lane-aligned shapes: E and 4E are multiples of 128
    batch, seq, e_dim, n_heads = 2, 128, 128, 4          # hidden = 512, M = 256

    key = jax.random.PRNGKey(0)
    kx, kp = jax.random.split(key)
    x = jax.random.normal(kx, (batch, seq, e_dim), jnp.float32)
    params = init_block_params(kp, e_dim, n_heads, jnp.float32)

    # Run 1: default (large) tiles -> single M / hidden grid step at this small size.
    out_a = block_forward(x, params)
    jax.block_until_ready(out_a)

    # Run 2: small tiles -> exercises multi-step grid, hidden accumulation and M padding
    # (M=256 padded to 288 with tile_m=96).
    out_b = block_forward(x, params, tile_m=96, tile_h=128)
    jax.block_until_ready(out_b)

    ref = block_reference(x, params)

    assert jnp.allclose(out_a, ref, atol=2e-3, rtol=2e-3), "mismatch vs reference (default tiles)"
    assert jnp.allclose(out_b, ref, atol=2e-3, rtol=2e-3), "mismatch vs reference (small tiles)"
    assert jnp.allclose(out_a, out_b, atol=2e-3, rtol=2e-3), "tile-size dependence"

    print("KERNEL_OK")
</pallas_src>

<mosaic_0001>
module attributes {stable_mosaic.version = 11 : i64} {
  func.func @_attn_block_kernel(%arg0: i32, %arg1: memref<1x128x128xf32, #tpu.memory_space<vmem>>, %arg2: memref<1x128xf32, #tpu.memory_space<vmem>>, %arg3: memref<4x128x32xf32, #tpu.memory_space<vmem>>, %arg4: memref<4x1x32xf32, #tpu.memory_space<vmem>>, %arg5: memref<4x128x32xf32, #tpu.memory_space<vmem>>, %arg6: memref<4x1x32xf32, #tpu.memory_space<vmem>>, %arg7: memref<4x128x32xf32, #tpu.memory_space<vmem>>, %arg8: memref<4x1x32xf32, #tpu.memory_space<vmem>>, %arg9: memref<4x32x128xf32, #tpu.memory_space<vmem>>, %arg10: memref<1x128xf32, #tpu.memory_space<vmem>>, %arg11: memref<1x128x128xf32, #tpu.memory_space<vmem>>) attributes {dimension_semantics = [#tpu.dimension_semantics<parallel>], iteration_bounds = array<i64: 2>, scalar_prefetch = 0 : i64, scratch_operands = 0 : i64, tpu.core_type = #tpu.core_type<tc>, window_params = [{transform_indices = @transform_0, window_bounds = array<i64: 1, 128, 128>}, {pipeline_mode = #tpu.pipeline_mode<synchronous>, transform_indices = @transform_1, window_bounds = array<i64: 1, 128>}, {pipeline_mode = #tpu.pipeline_mode<synchronous>, transform_indices = @transform_2, window_bounds = array<i64: 4, 128, 32>}, {pipeline_mode = #tpu.pipeline_mode<synchronous>, transform_indices = @transform_3, window_bounds = array<i64: 4, 1, 32>}, {pipeline_mode = #tpu.pipeline_mode<synchronous>, transform_indices = @transform_4, window_bounds = array<i64: 4, 128, 32>}, {pipeline_mode = #tpu.pipeline_mode<synchronous>, transform_indices = @transform_5, window_bounds = array<i64: 4, 1, 32>}, {pipeline_mode = #tpu.pipeline_mode<synchronous>, transform_indices = @transform_6, window_bounds = array<i64: 4, 128, 32>}, {pipeline_mode = #tpu.pipeline_mode<synchronous>, transform_indices = @transform_7, window_bounds = array<i64: 4, 1, 32>}, {pipeline_mode = #tpu.pipeline_mode<synchronous>, transform_indices = @transform_8, window_bounds = array<i64: 4, 32, 128>}, {pipeline_mode = #tpu.pipeline_mode<synchronous>, transform_indices = @transform_9, window_bounds = array<i64: 1, 128>}, {transform_indices = @transform_10, window_bounds = array<i64: 1, 128, 128>}]} {
    %c0 = arith.constant 0 : index
    %c0_0 = arith.constant 0 : index
    %c0_1 = arith.constant 0 : index
    %0 = vector.load %arg1[%c0, %c0_0, %c0_1] : memref<1x128x128xf32, #tpu.memory_space<vmem>>, vector<1x128x128xf32>
    %1 = vector.shape_cast %0 : vector<1x128x128xf32> to vector<128x128xf32>
    %2 = arith.mulf %1, %1 : vector<128x128xf32>
    %cst = arith.constant dense<0.000000e+00> : vector<128xf32>
    %3 = vector.multi_reduction <add>, %2, %cst [1] : vector<128x128xf32> to vector<128xf32>
    %4 = vector.shape_cast %3 : vector<128xf32> to vector<128x1xf32>
    %cst_2 = arith.constant 1.280000e+02 : f32
    %5 = vector.broadcast %cst_2 : f32 to vector<128x1xf32>
    %6 = arith.divf %4, %5 : vector<128x1xf32>
    %cst_3 = arith.constant 9.99999993E-9 : f32
    %7 = vector.broadcast %cst_3 : f32 to vector<128x1xf32>
    %8 = arith.addf %6, %7 : vector<128x1xf32>
    %9 = math.sqrt %8 : vector<128x1xf32>
    %10 = vector.broadcast %9 : vector<128x1xf32> to vector<128x128xf32>
    %11 = arith.divf %1, %10 : vector<128x128xf32>
    %c0_4 = arith.constant 0 : index
    %c0_5 = arith.constant 0 : index
    %12 = vector.load %arg2[%c0_4, %c0_5] : memref<1x128xf32, #tpu.memory_space<vmem>>, vector<1x128xf32>
    %13 = vector.broadcast %12 : vector<1x128xf32> to vector<128x128xf32>
    %14 = arith.mulf %11, %13 : vector<128x128xf32>
    %15 = tpu.iota {dimensions = array<i32: 0>} : vector<128x128xi32>
    %16 = tpu.iota {dimensions = array<i32: 1>} : vector<128x128xi32>
    %17 = arith.cmpi sge, %15, %16 : vector<128x128xi32>
    %cst_6 = arith.constant 0.000000e+00 : f32
    %18 = vector.broadcast %cst_6 : f32 to vector<128x128xf32>
    %c0_7 = arith.constant 0 : index
    %c0_8 = arith.constant 0 : index
    %c0_9 = arith.constant 0 : index
    %19 = vector.load %arg3[%c0_7, %c0_8, %c0_9] : memref<4x128x32xf32, #tpu.memory_space<vmem>>, vector<1x128x32xf32>
    %20 = vector.shape_cast %19 : vector<1x128x32xf32> to vector<128x32xf32>
    %cst_10 = arith.constant dense<0.000000e+00> : vector<128x32xf32>
    %21 = tpu.matmul %14, %20, %cst_10 {dimension_numbers = #tpu.dot_dimension_numbers<[1], [0], [0], [1], [0, 0, 1, 1], [], []>} : vector<128x128xf32>, vector<128x32xf32>, vector<128x32xf32> -> vector<128x32xf32>
    %c0_11 = arith.constant 0 : index
    %c0_12 = arith.constant 0 : index
    %c0_13 = arith.constant 0 : index
    %22 = vector.load %arg4[%c0_11, %c0_12, %c0_13] : memref<4x1x32xf32, #tpu.memory_space<vmem>>, vector<1x1x32xf32>
    %23 = vector.shape_cast %22 : vector<1x1x32xf32> to vector<1x32xf32>
    %24 = vector.broadcast %23 : vector<1x32xf32> to vector<128x32xf32>
    %25 = arith.addf %21, %24 : vector<128x32xf32>
    %c0_14 = arith.constant 0 : index
    %c0_15 = arith.constant 0 : index
    %c0_16 = arith.constant 0 : index
    %26 = vector.load %arg5[%c0_14, %c0_15, %c0_16] : memref<4x128x32xf32, #tpu.memory_space<vmem>>, vector<1x128x32xf32>
    %27 = vector.shape_cast %26 : vector<1x128x32xf32> to vector<128x32xf32>
    %cst_17 = arith.constant dense<0.000000e+00> : vector<128x32xf32>
    %28 = tpu.matmul %14, %27, %cst_17 {dimension_numbers = #tpu.dot_dimension_numbers<[1], [0], [0], [1], [0, 0, 1, 1], [], []>} : vector<128x128xf32>, vector<128x32xf32>, vector<128x32xf32> -> vector<128x32xf32>
    %c0_18 = arith.constant 0 : index
    %c0_19 = arith.constant 0 : index
    %c0_20 = arith.constant 0 : index
    %29 = vector.load %arg6[%c0_18, %c0_19, %c0_20] : memref<4x1x32xf32, #tpu.memory_space<vmem>>, vector<1x1x32xf32>
    %30 = vector.shape_cast %29 : vector<1x1x32xf32> to vector<1x32xf32>
    %31 = vector.broadcast %30 : vector<1x32xf32> to vector<128x32xf32>
    %32 = arith.addf %28, %31 : vector<128x32xf32>
    %c0_21 = arith.constant 0 : index
    %c0_22 = arith.constant 0 : index
    %c0_23 = arith.constant 0 : index
    %33 = vector.load %arg7[%c0_21, %c0_22, %c0_23] : memref<4x128x32xf32, #tpu.memory_space<vmem>>, vector<1x128x32xf32>
    %34 = vector.shape_cast %33 : vector<1x128x32xf32> to vector<128x32xf32>
    %cst_24 = arith.constant dense<0.000000e+00> : vector<128x32xf32>
    %35 = tpu.matmul %14, %34, %cst_24 {dimension_numbers = #tpu.dot_dimension_numbers<[1], [0], [0], [1], [0, 0, 1, 1], [], []>} : vector<128x128xf32>, vector<128x32xf32>, vector<128x32xf32> -> vector<128x32xf32>
    %c0_25 = arith.constant 0 : index
    %c0_26 = arith.constant 0 : index
    %c0_27 = arith.constant 0 : index
    %36 = vector.load %arg8[%c0_25, %c0_26, %c0_27] : memref<4x1x32xf32, #tpu.memory_space<vmem>>, vector<1x1x32xf32>
    %37 = vector.shape_cast %36 : vector<1x1x32xf32> to vector<1x32xf32>
    %38 = vector.broadcast %37 : vector<1x32xf32> to vector<128x32xf32>
    %39 = arith.addf %35, %38 : vector<128x32xf32>
    "tpu.trace_start"() <{level = 10 : i32, message = "td,sd->ts"}> : () -> ()
    %cst_28 = arith.constant dense<0.000000e+00> : vector<128x128xf32>
    %40 = tpu.matmul %25, %32, %cst_28 {dimension_numbers = #tpu.dot_dimension_numbers<[1], [1], [0], [0], [0, 0, 1, 0], [], []>} : vector<128x32xf32>, vector<128x32xf32>, vector<128x128xf32> -> vector<128x128xf32>
    "tpu.trace_stop"() : () -> ()
    %cst_29 = arith.constant 0.176776692 : f32
    %41 = vector.broadcast %cst_29 : f32 to vector<128x128xf32>
    %42 = arith.mulf %40, %41 : vector<128x128xf32>
    %cst_30 = arith.constant -1.000000e+30 : f32
    %43 = vector.broadcast %cst_30 : f32 to vector<128x128xf32>
    %44 = arith.select %17, %42, %43 : vector<128x128xi1>, vector<128x128xf32>
    %cst_31 = arith.constant dense<0xFF800000> : vector<128xf32>
    %45 = vector.multi_reduction <maximumf>, %44, %cst_31 [1] : vector<128x128xf32> to vector<128xf32>
    %46 = vector.shape_cast %45 : vector<128xf32> to vector<128x1xf32>
    %47 = vector.broadcast %46 : vector<128x1xf32> to vector<128x128xf32>
    %48 = arith.subf %44, %47 : vector<128x128xf32>
    %49 = math.exp %48 : vector<128x128xf32>
    %cst_32 = arith.constant dense<0.000000e+00> : vector<128xf32>
    %50 = vector.multi_reduction <add>, %49, %cst_32 [1] : vector<128x128xf32> to vector<128xf32>
    %51 = vector.shape_cast %50 : vector<128xf32> to vector<128x1xf32>
    %52 = vector.broadcast %51 : vector<128x1xf32> to vector<128x128xf32>
    %53 = arith.divf %49, %52 : vector<128x128xf32>
    %cst_33 = arith.constant dense<0.000000e+00> : vector<128x32xf32>
    %54 = tpu.matmul %53, %39, %cst_33 {dimension_numbers = #tpu.dot_dimension_numbers<[1], [0], [0], [1], [0, 0, 1, 1], [], []>} : vector<128x128xf32>, vector<128x32xf32>, vector<128x32xf32> -> vector<128x32xf32>
    %c0_34 = arith.constant 0 : index
    %c0_35 = arith.constant 0 : index
    %c0_36 = arith.constant 0 : index
    %55 = vector.load %arg9[%c0_34, %c0_35, %c0_36] : memref<4x32x128xf32, #tpu.memory_space<vmem>>, vector<1x32x128xf32>
    %56 = vector.shape_cast %55 : vector<1x32x128xf32> to vector<32x128xf32>
    %cst_37 = arith.constant dense<0.000000e+00> : vector<128x128xf32>
    %57 = tpu.matmul %54, %56, %cst_37 {dimension_numbers = #tpu.dot_dimension_numbers<[1], [0], [0], [1], [0, 0, 1, 1], [], []>} : vector<128x32xf32>, vector<32x128xf32>, vector<128x128xf32> -> vector<128x128xf32>
    %58 = arith.addf %18, %57 : vector<128x128xf32>
    %c1 = arith.constant 1 : index
    %c0_38 = arith.constant 0 : index
    %c0_39 = arith.constant 0 : index
    %59 = vector.load %arg3[%c1, %c0_38, %c0_39] : memref<4x128x32xf32, #tpu.memory_space<vmem>>, vector<1x128x32xf32>
    %60 = vector.shape_cast %59 : vector<1x128x32xf32> to vector<128x32xf32>
    %cst_40 = arith.constant dense<0.000000e+00> : vector<128x32xf32>
    %61 = tpu.matmul %14, %60, %cst_40 {dimension_numbers = #tpu.dot_dimension_numbers<[1], [0], [0], [1], [0, 0, 1, 1], [], []>} : vector<128x128xf32>, vector<128x32xf32>, vector<128x32xf32> -> vector<128x32xf32>
    %c1_41 = arith.constant 1 : index
    %c0_42 = arith.constant 0 : index
    %c0_43 = arith.constant 0 : index
    %62 = vector.load %arg4[%c1_41, %c0_42, %c0_43] : memref<4x1x32xf32, #tpu.memory_space<vmem>>, vector<1x1x32xf32>
    %63 = vector.shape_cast %62 : vector<1x1x32xf32> to vector<1x32xf32>
    %64 = vector.broadcast %63 : vector<1x32xf32> to vector<128x32xf32>
    %65 = arith.addf %61, %64 : vector<128x32xf32>
    %c1_44 = arith.constant 1 : index
    %c0_45 = arith.constant 0 : index
    %c0_46 = arith.constant 0 : index
    %66 = vector.load %arg5[%c1_44, %c0_45, %c0_46] : memref<4x128x32xf32, #tpu.memory_space<vmem>>, vector<1x128x32xf32>
    %67 = vector.shape_cast %66 : vector<1x128x32xf32> to vector<128x32xf32>
    %cst_47 = arith.constant dense<0.000000e+00> : vector<128x32xf32>
    %68 = tpu.matmul %14, %67, %cst_47 {dimension_numbers = #tpu.dot_dimension_numbers<[1], [0], [0], [1], [0, 0, 1, 1], [], []>} : vector<128x128xf32>, vector<128x32xf32>, vector<128x32xf32> -> vector<128x32xf32>
    %c1_48 = arith.constant 1 : index
    %c0_49 = arith.constant 0 : index
    %c0_50 = arith.constant 0 : index
    %69 = vector.load %arg6[%c1_48, %c0_49, %c0_50] : memref<4x1x32xf32, #tpu.memory_space<vmem>>, vector<1x1x32xf32>
    %70 = vector.shape_cast %69 : vector<1x1x32xf32> to vector<1x32xf32>
    %71 = vector.broadcast %70 : vector<1x32xf32> to vector<128x32xf32>
    %72 = arith.addf %68, %71 : vector<128x32xf32>
    %c1_51 = arith.constant 1 : index
    %c0_52 = arith.constant 0 : index
    %c0_53 = arith.constant 0 : index
    %73 = vector.load %arg7[%c1_51, %c0_52, %c0_53] : memref<4x128x32xf32, #tpu.memory_space<vmem>>, vector<1x128x32xf32>
    %74 = vector.shape_cast %73 : vector<1x128x32xf32> to vector<128x32xf32>
    %cst_54 = arith.constant dense<0.000000e+00> : vector<128x32xf32>
    %75 = tpu.matmul %14, %74, %cst_54 {dimension_numbers = #tpu.dot_dimension_numbers<[1], [0], [0], [1], [0, 0, 1, 1], [], []>} : vector<128x128xf32>, vector<128x32xf32>, vector<128x32xf32> -> vector<128x32xf32>
    %c1_55 = arith.constant 1 : index
    %c0_56 = arith.constant 0 : index
    %c0_57 = arith.constant 0 : index
    %76 = vector.load %arg8[%c1_55, %c0_56, %c0_57] : memref<4x1x32xf32, #tpu.memory_space<vmem>>, vector<1x1x32xf32>
    %77 = vector.shape_cast %76 : vector<1x1x32xf32> to vector<1x32xf32>
    %78 = vector.broadcast %77 : vector<1x32xf32> to vector<128x32xf32>
    %79 = arith.addf %75, %78 : vector<128x32xf32>
    "tpu.trace_start"() <{level = 10 : i32, message = "td,sd->ts"}> : () -> ()
    %cst_58 = arith.constant dense<0.000000e+00> : vector<128x128xf32>
    %80 = tpu.matmul %65, %72, %cst_58 {dimension_numbers = #tpu.dot_dimension_numbers<[1], [1], [0], [0], [0, 0, 1, 0], [], []>} : vector<128x32xf32>, vector<128x32xf32>, vector<128x128xf32> -> vector<128x128xf32>
    "tpu.trace_stop"() : () -> ()
    %cst_59 = arith.constant 0.176776692 : f32
    %81 = vector.broadcast %cst_59 : f32 to vector<128x128xf32>
    %82 = arith.mulf %80, %81 : vector<128x128xf32>
    %cst_60 = arith.constant -1.000000e+30 : f32
    %83 = vector.broadcast %cst_60 : f32 to vector<128x128xf32>
    %84 = arith.select %17, %82, %83 : vector<128x128xi1>, vector<128x128xf32>
    %cst_61 = arith.constant dense<0xFF800000> : vector<128xf32>
    %85 = vector.multi_reduction <maximumf>, %84, %cst_61 [1] : vector<128x128xf32> to vector<128xf32>
    %86 = vector.shape_cast %85 : vector<128xf32> to vector<128x1xf32>
    %87 = vector.broadcast %86 : vector<128x1xf32> to vector<128x128xf32>
    %88 = arith.subf %84, %87 : vector<128x128xf32>
    %89 = math.exp %88 : vector<128x128xf32>
    %cst_62 = arith.constant dense<0.000000e+00> : vector<128xf32>
    %90 = vector.multi_reduction <add>, %89, %cst_62 [1] : vector<128x128xf32> to vector<128xf32>
    %91 = vector.shape_cast %90 : vector<128xf32> to vector<128x1xf32>
    %92 = vector.broadcast %91 : vector<128x1xf32> to vector<128x128xf32>
    %93 = arith.divf %89, %92 : vector<128x128xf32>
    %cst_63 = arith.constant dense<0.000000e+00> : vector<128x32xf32>
    %94 = tpu.matmul %93, %79, %cst_63 {dimension_numbers = #tpu.dot_dimension_numbers<[1], [0], [0], [1], [0, 0, 1, 1], [], []>} : vector<128x128xf32>, vector<128x32xf32>, vector<128x32xf32> -> vector<128x32xf32>
    %c1_64 = arith.constant 1 : index
    %c0_65 = arith.constant 0 : index
    %c0_66 = arith.constant 0 : index
    %95 = vector.load %arg9[%c1_64, %c0_65, %c0_66] : memref<4x32x128xf32, #tpu.memory_space<vmem>>, vector<1x32x128xf32>
    %96 = vector.shape_cast %95 : vector<1x32x128xf32> to vector<32x128xf32>
    %cst_67 = arith.constant dense<0.000000e+00> : vector<128x128xf32>
    %97 = tpu.matmul %94, %96, %cst_67 {dimension_numbers = #tpu.dot_dimension_numbers<[1], [0], [0], [1], [0, 0, 1, 1], [], []>} : vector<128x32xf32>, vector<32x128xf32>, vector<128x128xf32> -> vector<128x128xf32>
    %98 = arith.addf %58, %97 : vector<128x128xf32>
    %c2 = arith.constant 2 : index
    %c0_68 = arith.constant 0 : index
    %c0_69 = arith.constant 0 : index
    %99 = vector.load %arg3[%c2, %c0_68, %c0_69] : memref<4x128x32xf32, #tpu.memory_space<vmem>>, vector<1x128x32xf32>
    %100 = vector.shape_cast %99 : vector<1x128x32xf32> to vector<128x32xf32>
    %cst_70 = arith.constant dense<0.000000e+00> : vector<128x32xf32>
    %101 = tpu.matmul %14, %100, %cst_70 {dimension_numbers = #tpu.dot_dimension_numbers<[1], [0], [0], [1], [0, 0, 1, 1], [], []>} : vector<128x128xf32>, vector<128x32xf32>, vector<128x32xf32> -> vector<128x32xf32>
    %c2_71 = arith.constant 2 : index
    %c0_72 = arith.constant 0 : index
    %c0_73 = arith.constant 0 : index
    %102 = vector.load %arg4[%c2_71, %c0_72, %c0_73] : memref<4x1x32xf32, #tpu.memory_space<vmem>>, vector<1x1x32xf32>
    %103 = vector.shape_cast %102 : vector<1x1x32xf32> to vector<1x32xf32>
    %104 = vector.broadcast %103 : vector<1x32xf32> to vector<128x32xf32>
    %105 = arith.addf %101, %104 : vector<128x32xf32>
    %c2_74 = arith.constant 2 : index
    %c0_75 = arith.constant 0 : index
    %c0_76 = arith.constant 0 : index
    %106 = vector.load %arg5[%c2_74, %c0_75, %c0_76] : memref<4x128x32xf32, #tpu.memory_space<vmem>>, vector<1x128x32xf32>
    %107 = vector.shape_cast %106 : vector<1x128x32xf32> to vector<128x32xf32>
    %cst_77 = arith.constant dense<0.000000e+00> : vector<128x32xf32>
    %108 = tpu.matmul %14, %107, %cst_77 {dimension_numbers = #tpu.dot_dimension_numbers<[1], [0], [0], [1], [0, 0, 1, 1], [], []>} : vector<128x128xf32>, vector<128x32xf32>, vector<128x32xf32> -> vector<128x32xf32>
    %c2_78 = arith.constant 2 : index
    %c0_79 = arith.constant 0 : index
    %c0_80 = arith.constant 0 : index
    %109 = vector.load %arg6[%c2_78, %c0_79, %c0_80] : memref<4x1x32xf32, #tpu.memory_space<vmem>>, vector<1x1x32xf32>
    %110 = vector.shape_cast %109 : vector<1x1x32xf32> to vector<1x32xf32>
    %111 = vector.broadcast %110 : vector<1x32xf32> to vector<128x32xf32>
    %112 = arith.addf %108, %111 : vector<128x32xf32>
    %c2_81 = arith.constant 2 : index
    %c0_82 = arith.constant 0 : index
    %c0_83 = arith.constant 0 : index
    %113 = vector.load %arg7[%c2_81, %c0_82, %c0_83] : memref<4x128x32xf32, #tpu.memory_space<vmem>>, vector<1x128x32xf32>
    %114 = vector.shape_cast %113 : vector<1x128x32xf32> to vector<128x32xf32>
    %cst_84 = arith.constant dense<0.000000e+00> : vector<128x32xf32>
    %115 = tpu.matmul %14, %114, %cst_84 {dimension_numbers = #tpu.dot_dimension_numbers<[1], [0], [0], [1], [0, 0, 1, 1], [], []>} : vector<128x128xf32>, vector<128x32xf32>, vector<128x32xf32> -> vector<128x32xf32>
    %c2_85 = arith.constant 2 : index
    %c0_86 = arith.constant 0 : index
    %c0_87 = arith.constant 0 : index
    %116 = vector.load %arg8[%c2_85, %c0_86, %c0_87] : memref<4x1x32xf32, #tpu.memory_space<vmem>>, vector<1x1x32xf32>
    %117 = vector.shape_cast %116 : vector<1x1x32xf32> to vector<1x32xf32>
    %118 = vector.broadcast %117 : vector<1x32xf32> to vector<128x32xf32>
    %119 = arith.addf %115, %118 : vector<128x32xf32>
    "tpu.trace_start"() <{level = 10 : i32, message = "td,sd->ts"}> : () -> ()
    %cst_88 = arith.constant dense<0.000000e+00> : vector<128x128xf32>
    %120 = tpu.matmul %105, %112, %cst_88 {dimension_numbers = #tpu.dot_dimension_numbers<[1], [1], [0], [0], [0, 0, 1, 0], [], []>} : vector<128x32xf32>, vector<128x32xf32>, vector<128x128xf32> -> vector<128x128xf32>
    "tpu.trace_stop"() : () -> ()
    %cst_89 = arith.constant 0.176776692 : f32
    %121 = vector.broadcast %cst_89 : f32 to vector<128x128xf32>
    %122 = arith.mulf %120, %121 : vector<128x128xf32>
    %cst_90 = arith.constant -1.000000e+30 : f32
    %123 = vector.broadcast %cst_90 : f32 to vector<128x128xf32>
    %124 = arith.select %17, %122, %123 : vector<128x128xi1>, vector<128x128xf32>
    %cst_91 = arith.constant dense<0xFF800000> : vector<128xf32>
    %125 = vector.multi_reduction <maximumf>, %124, %cst_91 [1] : vector<128x128xf32> to vector<128xf32>
    %126 = vector.shape_cast %125 : vector<128xf32> to vector<128x1xf32>
    %127 = vector.broadcast %126 : vector<128x1xf32> to vector<128x128xf32>
    %128 = arith.subf %124, %127 : vector<128x128xf32>
    %129 = math.exp %128 : vector<128x128xf32>
    %cst_92 = arith.constant dense<0.000000e+00> : vector<128xf32>
    %130 = vector.multi_reduction <add>, %129, %cst_92 [1] : vector<128x128xf32> to vector<128xf32>
    %131 = vector.shape_cast %130 : vector<128xf32> to vector<128x1xf32>
    %132 = vector.broadcast %131 : vector<128x1xf32> to vector<128x128xf32>
    %133 = arith.divf %129, %132 : vector<128x128xf32>
    %cst_93 = arith.constant dense<0.000000e+00> : vector<128x32xf32>
    %134 = tpu.matmul %133, %119, %cst_93 {dimension_numbers = #tpu.dot_dimension_numbers<[1], [0], [0], [1], [0, 0, 1, 1], [], []>} : vector<128x128xf32>, vector<128x32xf32>, vector<128x32xf32> -> vector<128x32xf32>
    %c2_94 = arith.constant 2 : index
    %c0_95 = arith.constant 0 : index
    %c0_96 = arith.constant 0 : index
    %135 = vector.load %arg9[%c2_94, %c0_95, %c0_96] : memref<4x32x128xf32, #tpu.memory_space<vmem>>, vector<1x32x128xf32>
    %136 = vector.shape_cast %135 : vector<1x32x128xf32> to vector<32x128xf32>
    %cst_97 = arith.constant dense<0.000000e+00> : vector<128x128xf32>
    %137 = tpu.matmul %134, %136, %cst_97 {dimension_numbers = #tpu.dot_dimension_numbers<[1], [0], [0], [1], [0, 0, 1, 1], [], []>} : vector<128x32xf32>, vector<32x128xf32>, vector<128x128xf32> -> vector<128x128xf32>
    %138 = arith.addf %98, %137 : vector<128x128xf32>
    %c3 = arith.constant 3 : index
    %c0_98 = arith.constant 0 : index
    %c0_99 = arith.constant 0 : index
    %139 = vector.load %arg3[%c3, %c0_98, %c0_99] : memref<4x128x32xf32, #tpu.memory_space<vmem>>, vector<1x128x32xf32>
    %140 = vector.shape_cast %139 : vector<1x128x32xf32> to vector<128x32xf32>
    %cst_100 = arith.constant dense<0.000000e+00> : vector<128x32xf32>
    %141 = tpu.matmul %14, %140, %cst_100 {dimension_numbers = #tpu.dot_dimension_numbers<[1], [0], [0], [1], [0, 0, 1, 1], [], []>} : vector<128x128xf32>, vector<128x32xf32>, vector<128x32xf32> -> vector<128x32xf32>
    %c3_101 = arith.constant 3 : index
    %c0_102 = arith.constant 0 : index
    %c0_103 = arith.constant 0 : index
    %142 = vector.load %arg4[%c3_101, %c0_102, %c0_103] : memref<4x1x32xf32, #tpu.memory_space<vmem>>, vector<1x1x32xf32>
    %143 = vector.shape_cast %142 : vector<1x1x32xf32> to vector<1x32xf32>
    %144 = vector.broadcast %143 : vector<1x32xf32> to vector<128x32xf32>
    %145 = arith.addf %141, %144 : vector<128x32xf32>
    %c3_104 = arith.constant 3 : index
    %c0_105 = arith.constant 0 : index
    %c0_106 = arith.constant 0 : index
    %146 = vector.load %arg5[%c3_104, %c0_105, %c0_106] : memref<4x128x32xf32, #tpu.memory_space<vmem>>, vector<1x128x32xf32>
    %147 = vector.shape_cast %146 : vector<1x128x32xf32> to vector<128x32xf32>
    %cst_107 = arith.constant dense<0.000000e+00> : vector<128x32xf32>
    %148 = tpu.matmul %14, %147, %cst_107 {dimension_numbers = #tpu.dot_dimension_numbers<[1], [0], [0], [1], [0, 0, 1, 1], [], []>} : vector<128x128xf32>, vector<128x32xf32>, vector<128x32xf32> -> vector<128x32xf32>
    %c3_108 = arith.constant 3 : index
    %c0_109 = arith.constant 0 : index
    %c0_110 = arith.constant 0 : index
    %149 = vector.load %arg6[%c3_108, %c0_109, %c0_110] : memref<4x1x32xf32, #tpu.memory_space<vmem>>, vector<1x1x32xf32>
    %150 = vector.shape_cast %149 : vector<1x1x32xf32> to vector<1x32xf32>
    %151 = vector.broadcast %150 : vector<1x32xf32> to vector<128x32xf32>
    %152 = arith.addf %148, %151 : vector<128x32xf32>
    %c3_111 = arith.constant 3 : index
    %c0_112 = arith.constant 0 : index
    %c0_113 = arith.constant 0 : index
    %153 = vector.load %arg7[%c3_111, %c0_112, %c0_113] : memref<4x128x32xf32, #tpu.memory_space<vmem>>, vector<1x128x32xf32>
    %154 = vector.shape_cast %153 : vector<1x128x32xf32> to vector<128x32xf32>
    %cst_114 = arith.constant dense<0.000000e+00> : vector<128x32xf32>
    %155 = tpu.matmul %14, %154, %cst_114 {dimension_numbers = #tpu.dot_dimension_numbers<[1], [0], [0], [1], [0, 0, 1, 1], [], []>} : vector<128x128xf32>, vector<128x32xf32>, vector<128x32xf32> -> vector<128x32xf32>
    %c3_115 = arith.constant 3 : index
    %c0_116 = arith.constant 0 : index
    %c0_117 = arith.constant 0 : index
    %156 = vector.load %arg8[%c3_115, %c0_116, %c0_117] : memref<4x1x32xf32, #tpu.memory_space<vmem>>, vector<1x1x32xf32>
    %157 = vector.shape_cast %156 : vector<1x1x32xf32> to vector<1x32xf32>
    %158 = vector.broadcast %157 : vector<1x32xf32> to vector<128x32xf32>
    %159 = arith.addf %155, %158 : vector<128x32xf32>
    "tpu.trace_start"() <{level = 10 : i32, message = "td,sd->ts"}> : () -> ()
    %cst_118 = arith.constant dense<0.000000e+00> : vector<128x128xf32>
    %160 = tpu.matmul %145, %152, %cst_118 {dimension_numbers = #tpu.dot_dimension_numbers<[1], [1], [0], [0], [0, 0, 1, 0], [], []>} : vector<128x32xf32>, vector<128x32xf32>, vector<128x128xf32> -> vector<128x128xf32>
    "tpu.trace_stop"() : () -> ()
    %cst_119 = arith.constant 0.176776692 : f32
    %161 = vector.broadcast %cst_119 : f32 to vector<128x128xf32>
    %162 = arith.mulf %160, %161 : vector<128x128xf32>
    %cst_120 = arith.constant -1.000000e+30 : f32
    %163 = vector.broadcast %cst_120 : f32 to vector<128x128xf32>
    %164 = arith.select %17, %162, %163 : vector<128x128xi1>, vector<128x128xf32>
    %cst_121 = arith.constant dense<0xFF800000> : vector<128xf32>
    %165 = vector.multi_reduction <maximumf>, %164, %cst_121 [1] : vector<128x128xf32> to vector<128xf32>
    %166 = vector.shape_cast %165 : vector<128xf32> to vector<128x1xf32>
    %167 = vector.broadcast %166 : vector<128x1xf32> to vector<128x128xf32>
    %168 = arith.subf %164, %167 : vector<128x128xf32>
    %169 = math.exp %168 : vector<128x128xf32>
    %cst_122 = arith.constant dense<0.000000e+00> : vector<128xf32>
    %170 = vector.multi_reduction <add>, %169, %cst_122 [1] : vector<128x128xf32> to vector<128xf32>
    %171 = vector.shape_cast %170 : vector<128xf32> to vector<128x1xf32>
    %172 = vector.broadcast %171 : vector<128x1xf32> to vector<128x128xf32>
    %173 = arith.divf %169, %172 : vector<128x128xf32>
    %cst_123 = arith.constant dense<0.000000e+00> : vector<128x32xf32>
    %174 = tpu.matmul %173, %159, %cst_123 {dimension_numbers = #tpu.dot_dimension_numbers<[1], [0], [0], [1], [0, 0, 1, 1], [], []>} : vector<128x128xf32>, vector<128x32xf32>, vector<128x32xf32> -> vector<128x32xf32>
    %c3_124 = arith.constant 3 : index
    %c0_125 = arith.constant 0 : index
    %c0_126 = arith.constant 0 : index
    %175 = vector.load %arg9[%c3_124, %c0_125, %c0_126] : memref<4x32x128xf32, #tpu.memory_space<vmem>>, vector<1x32x128xf32>
    %176 = vector.shape_cast %175 : vector<1x32x128xf32> to vector<32x128xf32>
    %cst_127 = arith.constant dense<0.000000e+00> : vector<128x128xf32>
    %177 = tpu.matmul %174, %176, %cst_127 {dimension_numbers = #tpu.dot_dimension_numbers<[1], [0], [0], [1], [0, 0, 1, 1], [], []>} : vector<128x32xf32>, vector<32x128xf32>, vector<128x128xf32> -> vector<128x128xf32>
    %178 = arith.addf %138, %177 : vector<128x128xf32>
    %179 = arith.addf %1, %178 : vector<128x128xf32>
    %c0_128 = arith.constant 0 : index
    %c0_129 = arith.constant 0 : index
    %180 = vector.load %arg10[%c0_128, %c0_129] : memref<1x128xf32, #tpu.memory_space<vmem>>, vector<1x128xf32>
    %181 = vector.broadcast %180 : vector<1x128xf32> to vector<128x128xf32>
    %182 = arith.addf %179, %181 : vector<128x128xf32>
    %c0_130 = arith.constant 0 : index
    %c0_131 = arith.constant 0 : index
    %c0_132 = arith.constant 0 : index
    %183 = vector.load %arg11[%c0_130, %c0_131, %c0_132] : memref<1x128x128xf32, #tpu.memory_space<vmem>>, vector<1x128x128xf32>
    %184 = vector.shape_cast %183 : vector<1x128x128xf32> to vector<128x128xf32>
    %185 = vector.shape_cast %182 : vector<128x128xf32> to vector<1x128x128xf32>
    tpu.vector_store %arg11[%c0_130, %c0_131, %c0_132], %185 {strides = array<i32>} : memref<1x128x128xf32, #tpu.memory_space<vmem>>, vector<1x128x128xf32>,
    return
  }
  func.func @transform_0(%arg0: i32) -> (i32, i32, i32) {
    %c0_i32 = arith.constant 0 : i32
    %c0_i32_0 = arith.constant 0 : i32
    %c0_i32_1 = arith.constant 0 : i32
    return %arg0, %c0_i32, %c0_i32_0 : i32, i32, i32
  }
  func.func @transform_1(%arg0: i32) -> (i32, i32) {
    %c0_i32 = arith.constant 0 : i32
    %c0_i32_0 = arith.constant 0 : i32
    %c0_i32_1 = arith.constant 0 : i32
    return %c0_i32, %c0_i32_0 : i32, i32
  }
  func.func @transform_2(%arg0: i32) -> (i32, i32, i32) {
    %c0_i32 = arith.constant 0 : i32
    %c0_i32_0 = arith.constant 0 : i32
    %c0_i32_1 = arith.constant 0 : i32
    %c0_i32_2 = arith.constant 0 : i32
    return %c0_i32, %c0_i32_0, %c0_i32_1 : i32, i32, i32
  }
  func.func @transform_3(%arg0: i32) -> (i32, i32, i32) {
    %c0_i32 = arith.constant 0 : i32
    %c0_i32_0 = arith.constant 0 : i32
    %c0_i32_1 = arith.constant 0 : i32
    %c0_i32_2 = arith.constant 0 : i32
    return %c0_i32, %c0_i32_0, %c0_i32_1 : i32, i32, i32
  }
  func.func @transform_4(%arg0: i32) -> (i32, i32, i32) {
    %c0_i32 = arith.constant 0 : i32
    %c0_i32_0 = arith.constant 0 : i32
    %c0_i32_1 = arith.constant 0 : i32
    %c0_i32_2 = arith.constant 0 : i32
    return %c0_i32, %c0_i32_0, %c0_i32_1 : i32, i32, i32
  }
  func.func @transform_5(%arg0: i32) -> (i32, i32, i32) {
    %c0_i32 = arith.constant 0 : i32
    %c0_i32_0 = arith.constant 0 : i32
    %c0_i32_1 = arith.constant 0 : i32
    %c0_i32_2 = arith.constant 0 : i32
    return %c0_i32, %c0_i32_0, %c0_i32_1 : i32, i32, i32
  }
  func.func @transform_6(%arg0: i32) -> (i32, i32, i32) {
    %c0_i32 = arith.constant 0 : i32
    %c0_i32_0 = arith.constant 0 : i32
    %c0_i32_1 = arith.constant 0 : i32
    %c0_i32_2 = arith.constant 0 : i32
    return %c0_i32, %c0_i32_0, %c0_i32_1 : i32, i32, i32
  }
  func.func @transform_7(%arg0: i32) -> (i32, i32, i32) {
    %c0_i32 = arith.constant 0 : i32
    %c0_i32_0 = arith.constant 0 : i32
    %c0_i32_1 = arith.constant 0 : i32
    %c0_i32_2 = arith.constant 0 : i32
    return %c0_i32, %c0_i32_0, %c0_i32_1 : i32, i32, i32
  }
  func.func @transform_8(%arg0: i32) -> (i32, i32, i32) {
    %c0_i32 = arith.constant 0 : i32
    %c0_i32_0 = arith.constant 0 : i32
    %c0_i32_1 = arith.constant 0 : i32
    %c0_i32_2 = arith.constant 0 : i32
    return %c0_i32, %c0_i32_0, %c0_i32_1 : i32, i32, i32
  }
  func.func @transform_9(%arg0: i32) -> (i32, i32) {
    %c0_i32 = arith.constant 0 : i32
    %c0_i32_0 = arith.constant 0 : i32
    %c0_i32_1 = arith.constant 0 : i32
    return %c0_i32, %c0_i32_0 : i32, i32
  }
  func.func @transform_10(%arg0: i32) -> (i32, i32, i32) {
    %c0_i32 = arith.constant 0 : i32
    %c0_i32_0 = arith.constant 0 : i32
    %c0_i32_1 = arith.constant 0 : i32
    return %arg0, %c0_i32, %c0_i32_0 : i32, i32, i32
  }
}

</mosaic_0001>

<llo_original>
// kernel: tpu_custom_call.1
$region0: #{tpu_custom_call.1}
  #allocation0 [shape = 'u32[]', space=smem, size = 0x4, offset = 0x4, fixed_abs, tag = 'smem constant byte address 0x4 - core index']
  #allocation1 [shape = 'u32[144,128]{1,0:T(1,128)}', space=vmem, size = 0x12000, scoped, tag = 'internal scratch']
  %s0 = inlined_call_operand.vmem [shape: f32[2,128,128], index: 0, kind: input, shape index: {}]
  %s1 = inlined_call_operand.vmem [shape: f32[1,128], index: 1, kind: input, shape index: {}]
  %s2 = inlined_call_operand.vmem [shape: f32[4,128,32], index: 2, kind: input, shape index: {}]
  %s3 = inlined_call_operand.vmem [shape: f32[4,1,32], index: 3, kind: input, shape index: {}]
  %s4 = inlined_call_operand.vmem [shape: f32[4,128,32], index: 4, kind: input, shape index: {}]
  %s5 = inlined_call_operand.vmem [shape: f32[4,1,32], index: 5, kind: input, shape index: {}]
  %s6 = inlined_call_operand.vmem [shape: f32[4,128,32], index: 6, kind: input, shape index: {}]
  %s7 = inlined_call_operand.vmem [shape: f32[4,1,32], index: 7, kind: input, shape index: {}]
  %s8 = inlined_call_operand.vmem [shape: f32[4,32,128], index: 8, kind: input, shape index: {}]
  %s9 = inlined_call_operand.vmem [shape: f32[1,128], index: 9, kind: input, shape index: {}]
  %s10 = inlined_call_operand.hbm [shape: f32[2,128,128], index: 10, kind: output, shape index: {}]
  %s11 = sld [smem:[#allocation0]]
  $region73: #{tpu_custom_call.1} parent=0
    _
  %s13 = ssub.s32 1, %s11
  %s14 = scalar_select 0, %s13, %s11
  $region1: #{tpu_custom_call.1} parent=0
    #allocation2 [shape = 'u8[131072]{0}', space=vmem, size = 0x20000, scoped, tag = 'output window, operand 0']
    #allocation3 [shape = 's32[2]{0}', space=sflag, size = 0x8, scoped, tag = 'scoped memory for tpu_custom_call.1']
    %15 = vsyncpa [#allocation3], 0
    %s16 = scalar_lea.sflag [#allocation3], 1
    %17 = vsyncpa %s16, 0
    loop: start=0, step=1, limit=4
    $region2: #{tpu_custom_call.1} parent=1 // loop_pre_header
      _
    $region3: #{tpu_custom_call.1} parent=1 // loop_header
      %s19 = sphi 0, %s23
      %p20 = scmp.ge.s32.totalorder %s19, 4
      %s29 = sphi 0, %s31
      %s32 = sphi 0, %s29
      %s33 = sphi 0, %s32
      %s49 = sphi 0, %s33
      %s53 = sphi 0, %s53
      %s55 = sphi 0, %s53
      %s56 = sphi 0, %s55
      %s70 = sphi 0, %s56
      %s74 = sphi 0, %s74
      %s76 = sphi 0, %s74
      %s77 = sphi 0, %s76
      %s91 = sphi 0, %s77
      %s95 = sphi 0, %s95
      %s97 = sphi 0, %s95
      %s98 = sphi 0, %s97
      %s112 = sphi 0, %s98
      %s116 = sphi 0, %s116
      %s118 = sphi 0, %s116
      %s119 = sphi 0, %s118
      %s133 = sphi 0, %s119
      %s137 = sphi 0, %s137
      %s139 = sphi 0, %s137
      %s140 = sphi 0, %s139
      %s154 = sphi 0, %s140
      %s158 = sphi 0, %s158
      %s160 = sphi 0, %s158
      %s161 = sphi 0, %s160
      %s175 = sphi 0, %s161
      %s179 = sphi 0, %s179
      %s181 = sphi 0, %s179
      %s182 = sphi 0, %s181
      %s196 = sphi 0, %s182
      %s200 = sphi 0, %s200
      %s202 = sphi 0, %s200
      %s203 = sphi 0, %s202
      %s217 = sphi 0, %s203
      %s221 = sphi 0, %s221
      %s223 = sphi 0, %s221
      %s224 = sphi 0, %s223
      %s238 = sphi 0, %s224
      %s244 = sphi 0, %s246
      %s247 = sphi 0, %s244
      %s248 = sphi 0, %s247
      %s264 = sphi 0, %s248
    $region4: #{tpu_custom_call.1} parent=1 // loop_header_branch
      %22 = sbr.rel (%p20) target = $region8
    $region5: #{tpu_custom_call.1} parent=1 // loop_body
      %s24 = ssub.s32 %s19, 1
      %s25 = ssub.s32 %s19, 2
      %s26 = sadd.s32 %s19, 1
      %s27 = ssub.s32 %s19, %s26
      %p28 = scmp.eq.s32.totalorder %s27, 0
      %s30 = sadd.s32 %s29, 1
      %s31 = scalar_select %p28, %s29, %s30
      %p34 = pneg %p28
      %p35 = scmp.eq.s32.totalorder %s19, 1
      %p36 = por %p34, %p35
      %p37 = scmp.ne.s32.totalorder %s29, %s32
      %p38 = scmp.eq.s32.totalorder %s19, 0
      %p39 = por %p37, %p38
      %p40 = scmp.ne.s32.totalorder %s29, %s32
      %p41 = scmp.eq.s32.totalorder %s24, 1
      %p42 = por %p40, %p41
      %p43 = scmp.ne.s32.totalorder %s32, %s33
      %p44 = scmp.eq.s32.totalorder %s24, 0
      %p45 = por %p43, %p44
      %p46 = scmp.ne.s32.totalorder %s32, %s33
      %p47 = scmp.eq.s32.totalorder %s25, 1
      %p48 = por %p46, %p47
      %p50 = scmp.ne.s32.totalorder %s33, %s49
      %p51 = scmp.eq.s32.totalorder %s25, 0
      %p52 = por %p50, %p51
      %s54 = sadd.s32 %s53, 1
      %p57 = scmp.eq.s32.totalorder %s19, 1
      %p58 = scmp.ne.s32.totalorder %s53, %s55
      %p59 = scmp.eq.s32.totalorder %s19, 0
      %p60 = por %p58, %p59
      %p61 = scmp.ne.s32.totalorder %s53, %s55
      %p62 = scmp.eq.s32.totalorder %s24, 1
      %p63 = por %p61, %p62
      %p64 = scmp.ne.s32.totalorder %s55, %s56
      %p65 = scmp.eq.s32.totalorder %s24, 0
      %p66 = por %p64, %p65
      %p67 = scmp.ne.s32.totalorder %s55, %s56
      %p68 = scmp.eq.s32.totalorder %s25, 1
      %p69 = por %p67, %p68
      %p71 = scmp.ne.s32.totalorder %s56, %s70
      %p72 = scmp.eq.s32.totalorder %s25, 0
      %p73 = por %p71, %p72
      %s75 = sadd.s32 %s74, 1
      %p78 = scmp.eq.s32.totalorder %s19, 1
      %p79 = scmp.ne.s32.totalorder %s74, %s76
      %p80 = scmp.eq.s32.totalorder %s19, 0
      %p81 = por %p79, %p80
      %p82 = scmp.ne.s32.totalorder %s74, %s76
      %p83 = scmp.eq.s32.totalorder %s24, 1
      %p84 = por %p82, %p83
      %p85 = scmp.ne.s32.totalorder %s76, %s77
      %p86 = scmp.eq.s32.totalorder %s24, 0
      %p87 = por %p85, %p86
      %p88 = scmp.ne.s32.totalorder %s76, %s77
      %p89 = scmp.eq.s32.totalorder %s25, 1
      %p90 = por %p88, %p89
      %p92 = scmp.ne.s32.totalorder %s77, %s91
      %p93 = scmp.eq.s32.totalorder %s25, 0
      %p94 = por %p92, %p93
      %s96 = sadd.s32 %s95, 1
      %p99 = scmp.eq.s32.totalorder %s19, 1
      %p100 = scmp.ne.s32.totalorder %s95, %s97
      %p101 = scmp.eq.s32.totalorder %s19, 0
      %p102 = por %p100, %p101
      %p103 = scmp.ne.s32.totalorder %s95, %s97
      %p104 = scmp.eq.s32.totalorder %s24, 1
      %p105 = por %p103, %p104
      %p106 = scmp.ne.s32.totalorder %s97, %s98
      %p107 = scmp.eq.s32.totalorder %s24, 0
      %p108 = por %p106, %p107
      %p109 = scmp.ne.s32.totalorder %s97, %s98
      %p110 = scmp.eq.s32.totalorder %s25, 1
      %p111 = por %p109, %p110
      %p113 = scmp.ne.s32.totalorder %s98, %s112
      %p114 = scmp.eq.s32.totalorder %s25, 0
      %p115 = por %p113, %p114
      %s117 = sadd.s32 %s116, 1
      %p120 = scmp.eq.s32.totalorder %s19, 1
      %p121 = scmp.ne.s32.totalorder %s116, %s118
      %p122 = scmp.eq.s32.totalorder %s19, 0
      %p123 = por %p121, %p122
      %p124 = scmp.ne.s32.totalorder %s116, %s118
      %p125 = scmp.eq.s32.totalorder %s24, 1
      %p126 = por %p124, %p125
      %p127 = scmp.ne.s32.totalorder %s118, %s119
      %p128 = scmp.eq.s32.totalorder %s24, 0
      %p129 = por %p127, %p128
      %p130 = scmp.ne.s32.totalorder %s118, %s119
      %p131 = scmp.eq.s32.totalorder %s25, 1
      %p132 = por %p130, %p131
      %p134 = scmp.ne.s32.totalorder %s119, %s133
      %p135 = scmp.eq.s32.totalorder %s25, 0
      %p136 = por %p134, %p135
      %s138 = sadd.s32 %s137, 1
      %p141 = scmp.eq.s32.totalorder %s19, 1
      %p142 = scmp.ne.s32.totalorder %s137, %s139
      %p143 = scmp.eq.s32.totalorder %s19, 0
      %p144 = por %p142, %p143
      %p145 = scmp.ne.s32.totalorder %s137, %s139
      %p146 = scmp.eq.s32.totalorder %s24, 1
      %p147 = por %p145, %p146
      %p148 = scmp.ne.s32.totalorder %s139, %s140
      %p149 = scmp.eq.s32.totalorder %s24, 0
      %p150 = por %p148, %p149
      %p151 = scmp.ne.s32.totalorder %s139, %s140
      %p152 = scmp.eq.s32.totalorder %s25, 1
      %p153 = por %p151, %p152
      %p155 = scmp.ne.s32.totalorder %s140, %s154
      %p156 = scmp.eq.s32.totalorder %s25, 0
      %p157 = por %p155, %p156
      %s159 = sadd.s32 %s158, 1
      %p162 = scmp.eq.s32.totalorder %s19, 1
      %p163 = scmp.ne.s32.totalorder %s158, %s160
      %p164 = scmp.eq.s32.totalorder %s19, 0
      %p165 = por %p163, %p164
      %p166 = scmp.ne.s32.totalorder %s158, %s160
      %p167 = scmp.eq.s32.totalorder %s24, 1
      %p168 = por %p166, %p167
      %p169 = scmp.ne.s32.totalorder %s160, %s161
      %p170 = scmp.eq.s32.totalorder %s24, 0
      %p171 = por %p169, %p170
      %p172 = scmp.ne.s32.totalorder %s160, %s161
      %p173 = scmp.eq.s32.totalorder %s25, 1
      %p174 = por %p172, %p173
      %p176 = scmp.ne.s32.totalorder %s161, %s175
      %p177 = scmp.eq.s32.totalorder %s25, 0
      %p178 = por %p176, %p177
      %s180 = sadd.s32 %s179, 1
      %p183 = scmp.eq.s32.totalorder %s19, 1
      %p184 = scmp.ne.s32.totalorder %s179, %s181
      %p185 = scmp.eq.s32.totalorder %s19, 0
      %p186 = por %p184, %p185
      %p187 = scmp.ne.s32.totalorder %s179, %s181
      %p188 = scmp.eq.s32.totalorder %s24, 1
      %p189 = por %p187, %p188
      %p190 = scmp.ne.s32.totalorder %s181, %s182
      %p191 = scmp.eq.s32.totalorder %s24, 0
      %p192 = por %p190, %p191
      %p193 = scmp.ne.s32.totalorder %s181, %s182
      %p194 = scmp.eq.s32.totalorder %s25, 1
      %p195 = por %p193, %p194
      %p197 = scmp.ne.s32.totalorder %s182, %s196
      %p198 = scmp.eq.s32.totalorder %s25, 0
      %p199 = por %p197, %p198
      %s201 = sadd.s32 %s200, 1
      %p204 = scmp.eq.s32.totalorder %s19, 1
      %p205 = scmp.ne.s32.totalorder %s200, %s202
      %p206 = scmp.eq.s32.totalorder %s19, 0
      %p207 = por %p205, %p206
      %p208 = scmp.ne.s32.totalorder %s200, %s202
      %p209 = scmp.eq.s32.totalorder %s24, 1
      %p210 = por %p208, %p209
      %p211 = scmp.ne.s32.totalorder %s202, %s203
      %p212 = scmp.eq.s32.totalorder %s24, 0
      %p213 = por %p211, %p212
      %p214 = scmp.ne.s32.totalorder %s202, %s203
      %p215 = scmp.eq.s32.totalorder %s25, 1
      %p216 = por %p214, %p215
      %p218 = scmp.ne.s32.totalorder %s203, %s217
      %p219 = scmp.eq.s32.totalorder %s25, 0
      %p220 = por %p218, %p219
      %s222 = sadd.s32 %s221, 1
      %p225 = scmp.eq.s32.totalorder %s19, 1
      %p226 = scmp.ne.s32.totalorder %s221, %s223
      %p227 = scmp.eq.s32.totalorder %s19, 0
      %p228 = por %p226, %p227
      %p229 = scmp.ne.s32.totalorder %s221, %s223
      %p230 = scmp.eq.s32.totalorder %s24, 1
      %p231 = por %p229, %p230
      %p232 = scmp.ne.s32.totalorder %s223, %s224
      %p233 = scmp.eq.s32.totalorder %s24, 0
      %p234 = por %p232, %p233
      %p235 = scmp.ne.s32.totalorder %s223, %s224
      %p236 = scmp.eq.s32.totalorder %s25, 1
      %p237 = por %p235, %p236
      %p239 = scmp.ne.s32.totalorder %s224, %s238
      %p240 = scmp.eq.s32.totalorder %s25, 0
      %p241 = por %p239, %p240
      %s242 = ssub.s32 %s19, %s26
      %p243 = scmp.eq.s32.totalorder %s242, 0
      %s245 = sadd.s32 %s244, 1
      %s246 = scalar_select %p243, %s244, %s245
      %p249 = pneg %p243
      %p250 = scmp.eq.s32.totalorder %s19, 1
      %p251 = por %p249, %p250
      %p252 = scmp.ne.s32.totalorder %s244, %s247
      %p253 = scmp.eq.s32.totalorder %s19, 0
      %p254 = por %p252, %p253
      %p255 = scmp.ne.s32.totalorder %s244, %s247
      %p256 = scmp.eq.s32.totalorder %s24, 1
      %p257 = por %p255, %p256
      %p258 = scmp.ne.s32.totalorder %s247, %s248
      %p259 = scmp.eq.s32.totalorder %s24, 0
      %p260 = por %p258, %p259
      %p261 = scmp.ne.s32.totalorder %s247, %s248
      %p262 = scmp.eq.s32.totalorder %s25, 1
      %p263 = por %p261, %p262
      %p265 = scmp.ne.s32.totalorder %s248, %s264
      %p266 = scmp.eq.s32.totalorder %s25, 0
      %p267 = por %p265, %p266
      %p268 = scmp.le.s32.totalorder 1, %s19
      %p269 = scmp.lt.s32.totalorder %s19, 3
      %p270 = pnand %p268, %p269
      %p271 = pneg %p270
      // Predicated region
      $region9: #{tpu_custom_call.1} parent=5 // pred_check
        _
      $region10: #{tpu_custom_call.1} parent=5 // pred_check_branch
        %273 = sbr.rel (%p270) target = $region12
      $region11: #{tpu_custom_call.1} parent=5 // pred_region
        %s274 = ssub.s32 %s19, 1
        // Predicated region
        $region13: #{tpu_custom_call.1} parent=11 // pred_check
          %p275 = pneg %p66
        $region14: #{tpu_custom_call.1} parent=11 // pred_check_branch
          %277 = sbr.rel (%p275) target = $region16
        $region15: #{tpu_custom_call.1} parent=11 // pred_region
          _
        $region16: #{tpu_custom_call.1} parent=11 // pred_fallthru
          _
        // Predicated region
        $region17: #{tpu_custom_call.1} parent=11 // pred_check
          %p278 = pneg %p87
        $region18: #{tpu_custom_call.1} parent=11 // pred_check_branch
          %280 = sbr.rel (%p278) target = $region20
        $region19: #{tpu_custom_call.1} parent=11 // pred_region
          _
        $region20: #{tpu_custom_call.1} parent=11 // pred_fallthru
          _
        // Predicated region
        $region21: #{tpu_custom_call.1} parent=11 // pred_check
          %p281 = pneg %p108
        $region22: #{tpu_custom_call.1} parent=11 // pred_check_branch
          %283 = sbr.rel (%p281) target = $region24
        $region23: #{tpu_custom_call.1} parent=11 // pred_region
          _
        $region24: #{tpu_custom_call.1} parent=11 // pred_fallthru
          _
        // Predicated region
        $region25: #{tpu_custom_call.1} parent=11 // pred_check
          %p284 = pneg %p129
        $region26: #{tpu_custom_call.1} parent=11 // pred_check_branch
          %286 = sbr.rel (%p284) target = $region28
        $region27: #{tpu_custom_call.1} parent=11 // pred_region
          _
        $region28: #{tpu_custom_call.1} parent=11 // pred_fallthru
          _
        // Predicated region
        $region29: #{tpu_custom_call.1} parent=11 // pred_check
          %p287 = pneg %p150
        $region30: #{tpu_custom_call.1} parent=11 // pred_check_branch
          %289 = sbr.rel (%p287) target = $region32
        $region31: #{tpu_custom_call.1} parent=11 // pred_region
          _
        $region32: #{tpu_custom_call.1} parent=11 // pred_fallthru
          _
        // Predicated region
        $region33: #{tpu_custom_call.1} parent=11 // pred_check
          %p290 = pneg %p171
        $region34: #{tpu_custom_call.1} parent=11 // pred_check_branch
          %292 = sbr.rel (%p290) target = $region36
        $region35: #{tpu_custom_call.1} parent=11 // pred_region
          _
        $region36: #{tpu_custom_call.1} parent=11 // pred_fallthru
          _
        // Predicated region
        $region37: #{tpu_custom_call.1} parent=11 // pred_check
          %p293 = pneg %p192
        $region38: #{tpu_custom_call.1} parent=11 // pred_check_branch
          %295 = sbr.rel (%p293) target = $region40
        $region39: #{tpu_custom_call.1} parent=11 // pred_region
          _
        $region40: #{tpu_custom_call.1} parent=11 // pred_fallthru
          _
        // Predicated region
        $region41: #{tpu_custom_call.1} parent=11 // pred_check
          %p296 = pneg %p213
        $region42: #{tpu_custom_call.1} parent=11 // pred_check_branch
          %298 = sbr.rel (%p296) target = $region44
        $region43: #{tpu_custom_call.1} parent=11 // pred_region
          _
        $region44: #{tpu_custom_call.1} parent=11 // pred_fallthru
          _
        // Predicated region
        $region45: #{tpu_custom_call.1} parent=11 // pred_check
          %p299 = pneg %p234
        $region46: #{tpu_custom_call.1} parent=11 // pred_check_branch
          %301 = sbr.rel (%p299) target = $region48
        $region47: #{tpu_custom_call.1} parent=11 // pred_region
          _
        $region48: #{tpu_custom_call.1} parent=11 // pred_fallthru
          _
      $region12: #{tpu_custom_call.1} parent=5 // pred_fallthru
        _
      %p302 = scmp.lt.s32.totalorder %s19, 2
      // Predicated region
      $region49: #{tpu_custom_call.1} parent=5 // pred_check
        %p303 = pneg %p302
      $region50: #{tpu_custom_call.1} parent=5 // pred_check_branch
        %305 = sbr.rel (%p303) target = $region52
      $region51: #{tpu_custom_call.1} parent=5 // pred_region
        // Predicated region
        $region53: #{tpu_custom_call.1} parent=51 // pred_check
          %p306 = pneg %p39
        $region54: #{tpu_custom_call.1} parent=51 // pred_check_branch
          %308 = sbr.rel (%p306) target = $region56
        $region55: #{tpu_custom_call.1} parent=51 // pred_region
          %p309 = scmp.lt.s32.totalorder %s19, 1
          %s310 = scalar_select %p309, %s19, 1
          %s311 = smul.addr %s310, 16
          %s312 = smul.addr %s311, 8
          %s313 = scalar_lea.vmem %s0, %s312
        $region56: #{tpu_custom_call.1} parent=51 // pred_fallthru
          _
      $region52: #{tpu_custom_call.1} parent=5 // pred_fallthru
        _
      %p314 = scmp.le.s32.totalorder 1, %s19
      %p315 = scmp.lt.s32.totalorder %s19, 3
      %p316 = pnand %p314, %p315
      %p317 = pneg %p316
      // Predicated region
      $region57: #{tpu_custom_call.1} parent=5 // pred_check
        _
      $region58: #{tpu_custom_call.1} parent=5 // pred_check_branch
        %319 = sbr.rel (%p316) target = $region60
      $region59: #{tpu_custom_call.1} parent=5 // pred_region
        %s320 = ssub.s32 %s19, 1
        %p321 = scmp.lt.s32.totalorder %s24, 1
        %s322 = scalar_select %p321, %s24, 1
        %s323 = smul.addr %s322, 16
        %s324 = smul.addr %s323, 8
        %s325 = scalar_lea.vmem %s0, %s324
        %p326 = pneg %p45
        %p327 = pneg %p42
        %p328 = pneg %p66
        %p329 = pneg %p63
        %p330 = pneg %p87
        %p331 = pneg %p84
        %p332 = pneg %p108
        %p333 = pneg %p105
        %p334 = pneg %p129
        %p335 = pneg %p126
        %p336 = pneg %p150
        %p337 = pneg %p147
        %p338 = pneg %p171
        %p339 = pneg %p168
        %p340 = pneg %p192
        %p341 = pneg %p189
        %p342 = pneg %p213
        %p343 = pneg %p210
        %p344 = pneg %p234
        %p345 = pneg %p231
        %p346 = pneg %p260
        %p347 = pneg %p257
        %s348 = sand.u32 %s247, 1
        %s349 = scalar_lea.sflag [#allocation3], %s348
        %s350 = sand.u32 %s247, 1
        %s351 = smul.addr %s350, 128
        %s352 = scalar_lea.vmem [#allocation2], %s351
        %p353 = scmp.lt.s32.totalorder %s24, 1
        %s354 = scalar_select %p353, %s24, 1
        %s355 = smul.addr %s354, 16
        %s356 = smul.addr %s355, 8
        %s357 = scalar_lea.vmem %s0, %s356
        %v358 = vld [vmem:[%s357] sm:$0xff]
        %v359 = vld [vmem:[%s357 + $0x8] sm:$0xff]
        %v360 = vld [vmem:[%s357 + $0x10] sm:$0xff]
        %v361 = vld [vmem:[%s357 + $0x18] sm:$0xff]
        %v362 = vld [vmem:[%s357 + $0x20] sm:$0xff]
        %v363 = vld [vmem:[%s357 + $0x28] sm:$0xff]
        %v364 = vld [vmem:[%s357 + $0x30] sm:$0xff]
        %v365 = vld [vmem:[%s357 + $0x38] sm:$0xff]
        %v366 = vld [vmem:[%s357 + $0x40] sm:$0xff]
        %v367 = vld [vmem:[%s357 + $0x48] sm:$0xff]
        %v368 = vld [vmem:[%s357 + $0x50] sm:$0xff]
        %v369 = vld [vmem:[%s357 + $0x58] sm:$0xff]
        %v370 = vld [vmem:[%s357 + $0x60] sm:$0xff]
        %v371 = vld [vmem:[%s357 + $0x68] sm:$0xff]
        %v372 = vld [vmem:[%s357 + $0x70] sm:$0xff]
        %v373 = vld [vmem:[%s357 + $0x78] sm:$0xff]
        %v374 = vmul.f32 %v358, %v358
        %v375 = vmul.f32 %v359, %v359
        %v376 = vmul.f32 %v360, %v360
        %v377 = vmul.f32 %v361, %v361
        %v378 = vmul.f32 %v362, %v362
        %v379 = vmul.f32 %v363, %v363
        %v380 = vmul.f32 %v364, %v364
        %v381 = vmul.f32 %v365, %v365
        %v382 = vmul.f32 %v366, %v366
        %v383 = vmul.f32 %v367, %v367
        %v384 = vmul.f32 %v368, %v368
        %v385 = vmul.f32 %v369, %v369
        %v386 = vmul.f32 %v370, %v370
        %v387 = vmul.f32 %v371, %v371
        %v388 = vmul.f32 %v372, %v372
        %v389 = vmul.f32 %v373, %v373
        %390 = vadd.xlane.f32.xlu0 %v374
        %v391 = vpop.xlane.xlu0 %390
        %392 = vadd.xlane.f32.xlu0 %v375
        %v393 = vpop.xlane.xlu0 %392
        %394 = vadd.xlane.f32.xlu0 %v376
        %v395 = vpop.xlane.xlu0 %394
        %396 = vadd.xlane.f32.xlu0 %v377
        %v397 = vpop.xlane.xlu0 %396
        %398 = vadd.xlane.f32.xlu0 %v378
        %v399 = vpop.xlane.xlu0 %398
        %400 = vadd.xlane.f32.xlu0 %v379
        %v401 = vpop.xlane.xlu0 %400
        %402 = vadd.xlane.f32.xlu0 %v380
        %v403 = vpop.xlane.xlu0 %402
        %404 = vadd.xlane.f32.xlu0 %v381
        %v405 = vpop.xlane.xlu0 %404
        %406 = vadd.xlane.f32.xlu0 %v382
        %v407 = vpop.xlane.xlu0 %406
        %408 = vadd.xlane.f32.xlu0 %v383
        %v409 = vpop.xlane.xlu0 %408
        %410 = vadd.xlane.f32.xlu0 %v384
        %v411 = vpop.xlane.xlu0 %410
        %412 = vadd.xlane.f32.xlu0 %v385
        %v413 = vpop.xlane.xlu0 %412
        %414 = vadd.xlane.f32.xlu0 %v386
        %v415 = vpop.xlane.xlu0 %414
        %416 = vadd.xlane.f32.xlu0 %v387
        %v417 = vpop.xlane.xlu0 %416
        %418 = vadd.xlane.f32.xlu0 %v388
        %v419 = vpop.xlane.xlu0 %418
        %420 = vadd.xlane.f32.xlu0 %v389
        %v421 = vpop.xlane.xlu0 %420
        %v422 = vrcp.pop 128.0
        %v423 = vmul.f32 %v391, %v422
        %v424 = vmul.f32 %v393, %v422
        %v425 = vmul.f32 %v395, %v422
        %v426 = vmul.f32 %v397, %v422
        %v427 = vmul.f32 %v399, %v422
        %v428 = vmul.f32 %v401, %v422
        %v429 = vmul.f32 %v403, %v422
        %v430 = vmul.f32 %v405, %v422
        %v431 = vmul.f32 %v407, %v422
        %v432 = vmul.f32 %v409, %v422
        %v433 = vmul.f32 %v411, %v422
        %v434 = vmul.f32 %v413, %v422
        %v435 = vmul.f32 %v415, %v422
        %v436 = vmul.f32 %v417, %v422
        %v437 = vmul.f32 %v419, %v422
        %v438 = vmul.f32 %v421, %v422
        %v439 = vadd.f32 %v423, 1e-08
        %v440 = vadd.f32 %v424, 1e-08
        %v441 = vadd.f32 %v425, 1e-08
        %v442 = vadd.f32 %v426, 1e-08
        %v443 = vadd.f32 %v427, 1e-08
        %v444 = vadd.f32 %v428, 1e-08
        %v445 = vadd.f32 %v429, 1e-08
        %v446 = vadd.f32 %v430, 1e-08
        %v447 = vadd.f32 %v431, 1e-08
        %v448 = vadd.f32 %v432, 1e-08
        %v449 = vadd.f32 %v433, 1e-08
        %v450 = vadd.f32 %v434, 1e-08
        %v451 = vadd.f32 %v435, 1e-08
        %v452 = vadd.f32 %v436, 1e-08
        %v453 = vadd.f32 %v437, 1e-08
        %v454 = vadd.f32 %v438, 1e-08
        %v455 = vrsqrt.pop %v439
        %v456 = vmul.f32 %v439, %v455
        %vm457 = vcmp.eq.f32.partialorder %v439, inf
        %v458 = vsel %vm457, %v439, %v456
        %vm459 = vcmp.eq.f32.partialorder %v439, 0.0
        %v460 = vand.u32 %v439, 2147483648
        %v461 = vsel %vm459, %v460, %v458
        %v462 = vrsqrt.pop %v440
        %v463 = vmul.f32 %v440, %v462
        %vm464 = vcmp.eq.f32.partialorder %v440, inf
        %v465 = vsel %vm464, %v440, %v463
        %vm466 = vcmp.eq.f32.partialorder %v440, 0.0
        %v467 = vand.u32 %v440, 2147483648
        %v468 = vsel %vm466, %v467, %v465
        %v469 = vrsqrt.pop %v441
        %v470 = vmul.f32 %v441, %v469
        %vm471 = vcmp.eq.f32.partialorder %v441, inf
        %v472 = vsel %vm471, %v441, %v470
        %vm473 = vcmp.eq.f32.partialorder %v441, 0.0
        %v474 = vand.u32 %v441, 2147483648
        %v475 = vsel %vm473, %v474, %v472
        %v476 = vrsqrt.pop %v442
        %v477 = vmul.f32 %v442, %v476
        %vm478 = vcmp.eq.f32.partialorder %v442, inf
        %v479 = vsel %vm478, %v442, %v477
        %vm480 = vcmp.eq.f32.partialorder %v442, 0.0
        %v481 = vand.u32 %v442, 2147483648
        %v482 = vsel %vm480, %v481, %v479
        %v483 = vrsqrt.pop %v443
        %v484 = vmul.f32 %v443, %v483
        %vm485 = vcmp.eq.f32.partialorder %v443, inf
        %v486 = vsel %vm485, %v443, %v484
        %vm487 = vcmp.eq.f32.partialorder %v443, 0.0
        %v488 = vand.u32 %v443, 2147483648
        %v489 = vsel %vm487, %v488, %v486
        %v490 = vrsqrt.pop %v444
        %v491 = vmul.f32 %v444, %v490
        %vm492 = vcmp.eq.f32.partialorder %v444, inf
        %v493 = vsel %vm492, %v444, %v491
        %vm494 = vcmp.eq.f32.partialorder %v444, 0.0
        %v495 = vand.u32 %v444, 2147483648
        %v496 = vsel %vm494, %v495, %v493
        %v497 = vrsqrt.pop %v445
        %v498 = vmul.f32 %v445, %v497
        %vm499 = vcmp.eq.f32.partialorder %v445, inf
        %v500 = vsel %vm499, %v445, %v498
        %vm501 = vcmp.eq.f32.partialorder %v445, 0.0
        %v502 = vand.u32 %v445, 2147483648
        %v503 = vsel %vm501, %v502, %v500
        %v504 = vrsqrt.pop %v446
        %v505 = vmul.f32 %v446, %v504
        %vm506 = vcmp.eq.f32.partialorder %v446, inf
        %v507 = vsel %vm506, %v446, %v505
        %vm508 = vcmp.eq.f32.partialorder %v446, 0.0
        %v509 = vand.u32 %v446, 2147483648
        %v510 = vsel %vm508, %v509, %v507
        %v511 = vrsqrt.pop %v447
        %v512 = vmul.f32 %v447, %v511
        %vm513 = vcmp.eq.f32.partialorder %v447, inf
        %v514 = vsel %vm513, %v447, %v512
        %vm515 = vcmp.eq.f32.partialorder %v447, 0.0
        %v516 = vand.u32 %v447, 2147483648
        %v517 = vsel %vm515, %v516, %v514
        %v518 = vrsqrt.pop %v448
        %v519 = vmul.f32 %v448, %v518
        %vm520 = vcmp.eq.f32.partialorder %v448, inf
        %v521 = vsel %vm520, %v448, %v519
        %vm522 = vcmp.eq.f32.partialorder %v448, 0.0
        %v523 = vand.u32 %v448, 2147483648
        %v524 = vsel %vm522, %v523, %v521
        %v525 = vrsqrt.pop %v449
        %v526 = vmul.f32 %v449, %v525
        %vm527 = vcmp.eq.f32.partialorder %v449, inf
        %v528 = vsel %vm527, %v449, %v526
        %vm529 = vcmp.eq.f32.partialorder %v449, 0.0
        %v530 = vand.u32 %v449, 2147483648
        %v531 = vsel %vm529, %v530, %v528
        %v532 = vrsqrt.pop %v450
        %v533 = vmul.f32 %v450, %v532
        %vm534 = vcmp.eq.f32.partialorder %v450, inf
        %v535 = vsel %vm534, %v450, %v533
        %vm536 = vcmp.eq.f32.partialorder %v450, 0.0
        %v537 = vand.u32 %v450, 2147483648
        %v538 = vsel %vm536, %v537, %v535
        %v539 = vrsqrt.pop %v451
        %v540 = vmul.f32 %v451, %v539
        %vm541 = vcmp.eq.f32.partialorder %v451, inf
        %v542 = vsel %vm541, %v451, %v540
        %vm543 = vcmp.eq.f32.partialorder %v451, 0.0
        %v544 = vand.u32 %v451, 2147483648
        %v545 = vsel %vm543, %v544, %v542
        %v546 = vrsqrt.pop %v452
        %v547 = vmul.f32 %v452, %v546
        %vm548 = vcmp.eq.f32.partialorder %v452, inf
        %v549 = vsel %vm548, %v452, %v547
        %vm550 = vcmp.eq.f32.partialorder %v452, 0.0
        %v551 = vand.u32 %v452, 2147483648
        %v552 = vsel %vm550, %v551, %v549
        %v553 = vrsqrt.pop %v453
        %v554 = vmul.f32 %v453, %v553
        %vm555 = vcmp.eq.f32.partialorder %v453, inf
        %v556 = vsel %vm555, %v453, %v554
        %vm557 = vcmp.eq.f32.partialorder %v453, 0.0
        %v558 = vand.u32 %v453, 2147483648
        %v559 = vsel %vm557, %v558, %v556
        %v560 = vrsqrt.pop %v454
        %v561 = vmul.f32 %v454, %v560
        %vm562 = vcmp.eq.f32.partialorder %v454, inf
        %v563 = vsel %vm562, %v454, %v561
        %vm564 = vcmp.eq.f32.partialorder %v454, 0.0
        %v565 = vand.u32 %v454, 2147483648
        %v566 = vsel %vm564, %v565, %v563
        %v567 = vrcp.pop %v461
        %v568 = vmul.f32 %v358, %v567
        %v569 = vrcp.pop %v468
        %v570 = vmul.f32 %v359, %v569
        %v571 = vrcp.pop %v475
        %v572 = vmul.f32 %v360, %v571
        %v573 = vrcp.pop %v482
        %v574 = vmul.f32 %v361, %v573
        %v575 = vrcp.pop %v489
        %v576 = vmul.f32 %v362, %v575
        %v577 = vrcp.pop %v496
        %v578 = vmul.f32 %v363, %v577
        %v579 = vrcp.pop %v503
        %v580 = vmul.f32 %v364, %v579
        %v581 = vrcp.pop %v510
        %v582 = vmul.f32 %v365, %v581
        %v583 = vrcp.pop %v517
        %v584 = vmul.f32 %v366, %v583
        %v585 = vrcp.pop %v524
        %v586 = vmul.f32 %v367, %v585
        %v587 = vrcp.pop %v531
        %v588 = vmul.f32 %v368, %v587
        %v589 = vrcp.pop %v538
        %v590 = vmul.f32 %v369, %v589
        %v591 = vrcp.pop %v545
        %v592 = vmul.f32 %v370, %v591
        %v593 = vrcp.pop %v552
        %v594 = vmul.f32 %v371, %v593
        %v595 = vrcp.pop %v559
        %v596 = vmul.f32 %v372, %v595
        %v597 = vrcp.pop %v566
        %v598 = vmul.f32 %v373, %v597
        %v599 = vld [vmem:[%s1] sm:$0x1]
        %v601 = vlaneseq
        %v602 = vshrl.u32 %v601, 7
        %v603 = vsub.s32 0, %v602
        %v604 = vrot.slane %v599, %v603
        %v606 = vmul.f32 %v568, %v604
        %v607 = vmul.f32 %v570, %v604
        %v608 = vmul.f32 %v572, %v604
        %v609 = vmul.f32 %v574, %v604
        %v610 = vmul.f32 %v576, %v604
        %v611 = vmul.f32 %v578, %v604
        %v612 = vmul.f32 %v580, %v604
        %v613 = vmul.f32 %v582, %v604
        %v614 = vmul.f32 %v584, %v604
        %v615 = vmul.f32 %v586, %v604
        %v616 = vmul.f32 %v588, %v604
        %v617 = vmul.f32 %v590, %v604
        %v618 = vmul.f32 %v592, %v604
        %v619 = vmul.f32 %v594, %v604
        %v620 = vmul.f32 %v596, %v604
        %v621 = vmul.f32 %v598, %v604
        %v622 = vlaneseq
        %v623 = vshrl.u32 %v622, 7
        %v624 = vadd.s32 %v623, 8
        %v625 = vadd.s32 %v623, 16
        %v626 = vadd.s32 %v623, 24
        %v627 = vadd.s32 %v623, 32
        %v628 = vadd.s32 %v623, 40
        %v629 = vadd.s32 %v623, 48
        %v630 = vadd.s32 %v623, 56
        %v631 = vadd.s32 %v623, 64
        %v632 = vadd.s32 %v623, 72
        %v633 = vadd.s32 %v623, 80
        %v634 = vadd.s32 %v623, 88
        %v635 = vadd.s32 %v623, 96
        %v636 = vadd.s32 %v623, 104
        %v637 = vadd.s32 %v623, 112
        %v638 = vadd.s32 %v623, 120
        %v639 = vlaneseq
        %v640 = vand.u32 %v639, 127
        %vm641 = vcmp.ge.s32.totalorder %v623, %v640
        %vm642 = vcmp.ge.s32.totalorder %v624, %v640
        %vm643 = vcmp.ge.s32.totalorder %v625, %v640
        %vm644 = vcmp.ge.s32.totalorder %v626, %v640
        %vm645 = vcmp.ge.s32.totalorder %v627, %v640
        %vm646 = vcmp.ge.s32.totalorder %v628, %v640
        %vm647 = vcmp.ge.s32.totalorder %v629, %v640
        %vm648 = vcmp.ge.s32.totalorder %v630, %v640
        %vm649 = vcmp.ge.s32.totalorder %v631, %v640
        %vm650 = vcmp.ge.s32.totalorder %v632, %v640
        %vm651 = vcmp.ge.s32.totalorder %v633, %v640
        %vm652 = vcmp.ge.s32.totalorder %v634, %v640
        %vm653 = vcmp.ge.s32.totalorder %v635, %v640
        %vm654 = vcmp.ge.s32.totalorder %v636, %v640
        %vm655 = vcmp.ge.s32.totalorder %v637, %v640
        %vm656 = vcmp.ge.s32.totalorder %v638, %v640
        %v657 = vld [vmem:[%s2] sm:$0xff]
        %v658 = vld [vmem:[%s2 + $0x8] sm:$0xff]
        %v659 = vld [vmem:[%s2 + $0x10] sm:$0xff]
        %v660 = vld [vmem:[%s2 + $0x18] sm:$0xff]
        %v661 = vld [vmem:[%s2 + $0x20] sm:$0xff]
        %v662 = vld [vmem:[%s2 + $0x28] sm:$0xff]
        %v663 = vld [vmem:[%s2 + $0x30] sm:$0xff]
        %v664 = vld [vmem:[%s2 + $0x38] sm:$0xff]
        %v665 = vld [vmem:[%s2 + $0x40] sm:$0xff]
        %v666 = vld [vmem:[%s2 + $0x48] sm:$0xff]
        %v667 = vld [vmem:[%s2 + $0x50] sm:$0xff]
        %v668 = vld [vmem:[%s2 + $0x58] sm:$0xff]
        %v669 = vld [vmem:[%s2 + $0x60] sm:$0xff]
        %v670 = vld [vmem:[%s2 + $0x68] sm:$0xff]
        %v671 = vld [vmem:[%s2 + $0x70] sm:$0xff]
        %v672 = vld [vmem:[%s2 + $0x78] sm:$0xff]
        %v673 = vld [vmem:[%s3] sm:$0x1]
        %v675 = vlaneseq
        %v676 = vshrl.u32 %v675, 7
        %v677 = vsub.s32 0, %v676
        %v678 = vrot.slane %v673, %v677
        %680 = vmatprep.subr.mxu0 0.0
        %681 = vmatpush1.msra.mxu0 %v657
        %682 = vmatprep.subr.mxu0 0.0
        %683 = vmatpush1.msra.mxu0 %v658
        %684 = vmatprep.subr.mxu0 0.0
        %685 = vmatpush1.msra.mxu0 %v659
        %686 = vmatprep.subr.mxu0 0.0
        %687 = vmatpush1.msra.mxu0 %v660
        %688 = vmatprep.subr.mxu0 0.0
        %689 = vmatpush1.msra.mxu0 %v661
        %690 = vmatprep.subr.mxu0 0.0
        %691 = vmatpush1.msra.mxu0 %v662
        %692 = vmatprep.subr.mxu0 0.0
        %693 = vmatpush1.msra.mxu0 %v663
        %694 = vmatprep.subr.mxu0 0.0
        %695 = vmatpush1.msra.mxu0 %v664
        %696 = vmatprep.subr.mxu0 0.0
        %697 = vmatpush1.msra.mxu0 %v665
        %698 = vmatprep.subr.mxu0 0.0
        %699 = vmatpush1.msra.mxu0 %v666
        %700 = vmatprep.subr.mxu0 0.0
        %701 = vmatpush1.msra.mxu0 %v667
        %702 = vmatprep.subr.mxu0 0.0
        %703 = vmatpush1.msra.mxu0 %v668
        %704 = vmatprep.subr.mxu0 0.0
        %705 = vmatpush1.msra.mxu0 %v669
        %706 = vmatprep.subr.mxu0 0.0
        %707 = vmatpush1.msra.mxu0 %v670
        %708 = vmatprep.subr.mxu0 0.0
        %709 = vmatpush1.msra.mxu0 %v671
        %710 = vmatprep.subr.mxu0 0.0
        %711 = vmatpush1.msra.mxu0 %v672
        %712 = vmatprep.subr.mxu0 0.0
        %713 = vmatpush1.msra.mxu0 0.0
        %714 = vmatprep.subr.mxu0 0.0
        %715 = vmatpush1.msra.mxu0 0.0
        %716 = vmatprep.subr.mxu0 0.0
        %717 = vmatpush1.msra.mxu0 0.0
        %718 = vmatprep.subr.mxu0 0.0
        %719 = vmatpush1.msra.mxu0 0.0
        %720 = vmatprep.subr.mxu0 0.0
        %721 = vmatpush1.msra.mxu0 0.0
        %722 = vmatprep.subr.mxu0 0.0
        %723 = vmatpush1.msra.mxu0 0.0
        %724 = vmatprep.subr.mxu0 0.0
        %725 = vmatpush1.msra.mxu0 0.0
        %726 = vmatprep.subr.mxu0 0.0
        %727 = vmatpush1.msra.mxu0 0.0
        %728 = vmatprep.subr.mxu0 0.0
        %729 = vmatpush1.msra.mxu0 0.0
        %730 = vmatprep.subr.mxu0 0.0
        %731 = vmatpush1.msra.mxu0 0.0
        %732 = vmatprep.subr.mxu0 0.0
        %733 = vmatpush1.msra.mxu0 0.0
        %734 = vmatprep.subr.mxu0 0.0
        %735 = vmatpush1.msra.mxu0 0.0
        %736 = vmatprep.subr.mxu0 0.0
        %737 = vmatpush1.msra.mxu0 0.0
        %738 = vmatprep.subr.mxu0 0.0
        %739 = vmatpush1.msra.mxu0 0.0
        %740 = vmatprep.subr.mxu0 0.0
        %741 = vmatpush1.msra.mxu0 0.0
        %742 = vmatprep.subr.mxu0 0.0
        %743 = vmatpush1.msra.mxu0 0.0
        %744 = vmatprep.mubr.f32.mxu0 0.0
        %745 = vmatmul.mubr.f32.gmra.mrb[0].mxu0 %v606
        %v746 = vpop.f32.mrb[0].mxu0
        %v747 = vadd.f32 %v678, %v746
        %v748 = vpop.f32.mrb[0].mxu0
        %749 = vmatprep.mubr.f32.mxu0 0.0
        %750 = vmatmul.mubr.f32.gmra.mrb[0].mxu0 %v607
        %v751 = vpop.f32.mrb[0].mxu0
        %v752 = vadd.f32 %v678, %v751
        %v753 = vpop.f32.mrb[0].mxu0
        %754 = vmatprep.mubr.f32.mxu0 0.0
        %755 = vmatmul.mubr.f32.gmra.mrb[0].mxu0 %v608
        %v756 = vpop.f32.mrb[0].mxu0
        %v757 = vadd.f32 %v678, %v756
        %v758 = vpop.f32.mrb[0].mxu0
        %759 = vmatprep.mubr.f32.mxu0 0.0
        %760 = vmatmul.mubr.f32.gmra.mrb[0].mxu0 %v609
        %v761 = vpop.f32.mrb[0].mxu0
        %v762 = vadd.f32 %v678, %v761
        %v763 = vpop.f32.mrb[0].mxu0
        %764 = vmatprep.mubr.f32.mxu0 0.0
        %765 = vmatmul.mubr.f32.gmra.mrb[0].mxu0 %v610
        %v766 = vpop.f32.mrb[0].mxu0
        %v767 = vadd.f32 %v678, %v766
        %v768 = vpop.f32.mrb[0].mxu0
        %769 = vmatprep.mubr.f32.mxu0 0.0
        %770 = vmatmul.mubr.f32.gmra.mrb[0].mxu0 %v611
        %v771 = vpop.f32.mrb[0].mxu0
        %v772 = vadd.f32 %v678, %v771
        %v773 = vpop.f32.mrb[0].mxu0
        %774 = vmatprep.mubr.f32.mxu0 0.0
        %775 = vmatmul.mubr.f32.gmra.mrb[0].mxu0 %v612
        %v776 = vpop.f32.mrb[0].mxu0
        %v777 = vadd.f32 %v678, %v776
        %v778 = vpop.f32.mrb[0].mxu0
        %779 = vmatprep.mubr.f32.mxu0 0.0
        %780 = vmatmul.mubr.f32.gmra.mrb[0].mxu0 %v613
        %v781 = vpop.f32.mrb[0].mxu0
        %v782 = vadd.f32 %v678, %v781
        %v783 = vpop.f32.mrb[0].mxu0
        %784 = vmatprep.mubr.f32.mxu0 0.0
        %785 = vmatmul.mubr.f32.gmra.mrb[0].mxu0 %v614
        %v786 = vpop.f32.mrb[0].mxu0
        %v787 = vadd.f32 %v678, %v786
        %v788 = vpop.f32.mrb[0].mxu0
        %789 = vmatprep.mubr.f32.mxu0 0.0
        %790 = vmatmul.mubr.f32.gmra.mrb[0].mxu0 %v615
        %v791 = vpop.f32.mrb[0].mxu0
        %v792 = vadd.f32 %v678, %v791
        %v793 = vpop.f32.mrb[0].mxu0
        %794 = vmatprep.mubr.f32.mxu0 0.0
        %795 = vmatmul.mubr.f32.gmra.mrb[0].mxu0 %v616
        %v796 = vpop.f32.mrb[0].mxu0
        %v797 = vadd.f32 %v678, %v796
        %v798 = vpop.f32.mrb[0].mxu0
        %799 = vmatprep.mubr.f32.mxu0 0.0
        %800 = vmatmul.mubr.f32.gmra.mrb[0].mxu0 %v617
        %v801 = vpop.f32.mrb[0].mxu0
        %v802 = vadd.f32 %v678, %v801
        %v803 = vpop.f32.mrb[0].mxu0
        %804 = vmatprep.mubr.f32.mxu0 0.0
        %805 = vmatmul.mubr.f32.gmra.mrb[0].mxu0 %v618
        %v806 = vpop.f32.mrb[0].mxu0
        %v807 = vadd.f32 %v678, %v806
        %v808 = vpop.f32.mrb[0].mxu0
        %809 = vmatprep.mubr.f32.mxu0 0.0
        %810 = vmatmul.mubr.f32.gmra.mrb[0].mxu0 %v619
        %v811 = vpop.f32.mrb[0].mxu0
        %v812 = vadd.f32 %v678, %v811
        %v813 = vpop.f32.mrb[0].mxu0
        %814 = vmatprep.mubr.f32.mxu0 0.0
        %815 = vmatmul.mubr.f32.gmra.mrb[0].mxu0 %v620
        %v816 = vpop.f32.mrb[0].mxu0
        %v817 = vadd.f32 %v678, %v816
        %v818 = vpop.f32.mrb[0].mxu0
        %819 = vmatprep.mubr.f32.mxu0 0.0
        %820 = vmatmul.mubr.f32.gmra.mrb[0].mxu0 %v621
        %v821 = vpop.f32.mrb[0].mxu0
        %v822 = vadd.f32 %v678, %v821
        %v823 = vpop.f32.mrb[0].mxu0
        %824 = vdwg.mxu0
        %v825 = vld [vmem:[%s4] sm:$0xff]
        %v826 = vld [vmem:[%s4 + $0x8] sm:$0xff]
        %v827 = vld [vmem:[%s4 + $0x10] sm:$0xff]
        %v828 = vld [vmem:[%s4 + $0x18] sm:$0xff]
        %v829 = vld [vmem:[%s4 + $0x20] sm:$0xff]
        %v830 = vld [vmem:[%s4 + $0x28] sm:$0xff]
        %v831 = vld [vmem:[%s4 + $0x30] sm:$0xff]
        %v832 = vld [vmem:[%s4 + $0x38] sm:$0xff]
        %v833 = vld [vmem:[%s4 + $0x40] sm:$0xff]
        %v834 = vld [vmem:[%s4 + $0x48] sm:$0xff]
        %v835 = vld [vmem:[%s4 + $0x50] sm:$0xff]
        %v836 = vld [vmem:[%s4 + $0x58] sm:$0xff]
        %v837 = vld [vmem:[%s4 + $0x60] sm:$0xff]
        %v838 = vld [vmem:[%s4 + $0x68] sm:$0xff]
        %v839 = vld [vmem:[%s4 + $0x70] sm:$0xff]
        %v840 = vld [vmem:[%s4 + $0x78] sm:$0xff]
        %v841 = vld [vmem:[%s5] sm:$0x1]
        %v843 = vlaneseq
        %v844 = vshrl.u32 %v843, 7
        %v845 = vsub.s32 0, %v844
        %v846 = vrot.slane %v841, %v845
        %848 = vmatprep.subr.mxu0 0.0
        %849 = vmatpush1.msra.mxu0 %v825
        %850 = vmatprep.subr.mxu0 0.0
        %851 = vmatpush1.msra.mxu0 %v826
        %852 = vmatprep.subr.mxu0 0.0
        %853 = vmatpush1.msra.mxu0 %v827
        %854 = vmatprep.subr.mxu0 0.0
        %855 = vmatpush1.msra.mxu0 %v828
        %856 = vmatprep.subr.mxu0 0.0
        %857 = vmatpush1.msra.mxu0 %v829
        %858 = vmatprep.subr.mxu0 0.0
        %859 = vmatpush1.msra.mxu0 %v830
        %860 = vmatprep.subr.mxu0 0.0
        %861 = vmatpush1.msra.mxu0 %v831
        %862 = vmatprep.subr.mxu0 0.0
        %863 = vmatpush1.msra.mxu0 %v832
        %864 = vmatprep.subr.mxu0 0.0
        %865 = vmatpush1.msra.mxu0 %v833
        %866 = vmatprep.subr.mxu0 0.0
        %867 = vmatpush1.msra.mxu0 %v834
        %868 = vmatprep.subr.mxu0 0.0
        %869 = vmatpush1.msra.mxu0 %v835
        %870 = vmatprep.subr.mxu0 0.0
        %871 = vmatpush1.msra.mxu0 %v836
        %872 = vmatprep.subr.mxu0 0.0
        %873 = vmatpush1.msra.mxu0 %v837
        %874 = vmatprep.subr.mxu0 0.0
        %875 = vmatpush1.msra.mxu0 %v838
        %876 = vmatprep.subr.mxu0 0.0
        %877 = vmatpush1.msra.mxu0 %v839
        %878 = vmatprep.subr.mxu0 0.0
        %879 = vmatpush1.msra.mxu0 %v840
        %880 = vmatprep.subr.mxu0 0.0
        %881 = vmatpush1.msra.mxu0 0.0
        %882 = vmatprep.subr.mxu0 0.0
        %883 = vmatpush1.msra.mxu0 0.0
        %884 = vmatprep.subr.mxu0 0.0
        %885 = vmatpush1.msra.mxu0 0.0
        %886 = vmatprep.subr.mxu0 0.0
        %887 = vmatpush1.msra.mxu0 0.0
        %888 = vmatprep.subr.mxu0 0.0
        %889 = vmatpush1.msra.mxu0 0.0
        %890 = vmatprep.subr.mxu0 0.0
        %891 = vmatpush1.msra.mxu0 0.0
        %892 = vmatprep.subr.mxu0 0.0
        %893 = vmatpush1.msra.mxu0 0.0
        %894 = vmatprep.subr.mxu0 0.0
        %895 = vmatpush1.msra.mxu0 0.0
        %896 = vmatprep.subr.mxu0 0.0
        %897 = vmatpush1.msra.mxu0 0.0
        %898 = vmatprep.subr.mxu0 0.0
        %899 = vmatpush1.msra.mxu0 0.0
        %900 = vmatprep.subr.mxu0 0.0
        %901 = vmatpush1.msra.mxu0 0.0
        %902 = vmatprep.subr.mxu0 0.0
        %903 = vmatpush1.msra.mxu0 0.0
        %904 = vmatprep.subr.mxu0 0.0
        %905 = vmatpush1.msra.mxu0 0.0
        %906 = vmatprep.subr.mxu0 0.0
        %907 = vmatpush1.msra.mxu0 0.0
        %908 = vmatprep.subr.mxu0 0.0
        %909 = vmatpush1.msra.mxu0 0.0
        %910 = vmatprep.subr.mxu0 0.0
        %911 = vmatpush1.msra.mxu0 0.0
        %912 = vmatprep.mubr.f32.mxu0 0.0
        %913 = vmatmul.mubr.f32.gmra.mrb[0].mxu0 %v606
        %v914 = vpop.f32.mrb[0].mxu0
        %v915 = vadd.f32 %v846, %v914
        %v916 = vpop.f32.mrb[0].mxu0
        %917 = vmatprep.mubr.f32.mxu0 0.0
        %918 = vmatmul.mubr.f32.gmra.mrb[0].mxu0 %v607
        %v919 = vpop.f32.mrb[0].mxu0
        %v920 = vadd.f32 %v846, %v919
        %v921 = vpop.f32.mrb[0].mxu0
        %922 = vmatprep.mubr.f32.mxu0 0.0
        %923 = vmatmul.mubr.f32.gmra.mrb[0].mxu0 %v608
        %v924 = vpop.f32.mrb[0].mxu0
        %v925 = vadd.f32 %v846, %v924
        %v926 = vpop.f32.mrb[0].mxu0
        %927 = vmatprep.mubr.f32.mxu0 0.0
        %928 = vmatmul.mubr.f32.gmra.mrb[0].mxu0 %v609
        %v929 = vpop.f32.mrb[0].mxu0
        %v930 = vadd.f32 %v846, %v929
        %v931 = vpop.f32.mrb[0].mxu0
        %932 = vmatprep.mubr.f32.mxu0 0.0
        %933 = vmatmul.mubr.f32.gmra.mrb[0].mxu0 %v610
        %v934 = vpop.f32.mrb[0].mxu0
        %v935 = vadd.f32 %v846, %v934
        %v936 = vpop.f32.mrb[0].mxu0
        %937 = vmatprep.mubr.f32.mxu0 0.0
        %938 = vmatmul.mubr.f32.gmra.mrb[0].mxu0 %v611
        %v939 = vpop.f32.mrb[0].mxu0
        %v940 = vadd.f32 %v846, %v939
        %v941 = vpop.f32.mrb[0].mxu0
        %942 = vmatprep.mubr.f32.mxu0 0.0
        %943 = vmatmul.mubr.f32.gmra.mrb[0].mxu0 %v612
        %v944 = vpop.f32.mrb[0].mxu0
        %v945 = vadd.f32 %v846, %v944
        %v946 = vpop.f32.mrb[0].mxu0
        %947 = vmatprep.mubr.f32.mxu0 0.0
        %948 = vmatmul.mubr.f32.gmra.mrb[0].mxu0 %v613
        %v949 = vpop.f32.mrb[0].mxu0
        %v950 = vadd.f32 %v846, %v949
        %v951 = vpop.f32.mrb[0].mxu0
        %952 = vmatprep.mubr.f32.mxu0 0.0
        %953 = vmatmul.mubr.f32.gmra.mrb[0].mxu0 %v614
        %v954 = vpop.f32.mrb[0].mxu0
        %v955 = vadd.f32 %v846, %v954
        %v956 = vpop.f32.mrb[0].mxu0
        %957 = vmatprep.mubr.f32.mxu0 0.0
        %958 = vmatmul.mubr.f32.gmra.mrb[0].mxu0 %v615
        %v959 = vpop.f32.mrb[0].mxu0
        %v960 = vadd.f32 %v846, %v959
        %v961 = vpop.f32.mrb[0].mxu0
        %962 = vmatprep.mubr.f32.mxu0 0.0
        %963 = vmatmul.mubr.f32.gmra.mrb[0].mxu0 %v616
        %v964 = vpop.f32.mrb[0].mxu0
        %v965 = vadd.f32 %v846, %v964
        %v966 = vpop.f32.mrb[0].mxu0
        %967 = vmatprep.mubr.f32.mxu0 0.0
        %968 = vmatmul.mubr.f32.gmra.mrb[0].mxu0 %v617
        %v969 = vpop.f32.mrb[0].mxu0
        %v970 = vadd.f32 %v846, %v969
        %v971 = vpop.f32.mrb[0].mxu0
        %972 = vmatprep.mubr.f32.mxu0 0.0
        %973 = vmatmul.mubr.f32.gmra.mrb[0].mxu0 %v618
        %v974 = vpop.f32.mrb[0].mxu0
        %v975 = vadd.f32 %v846, %v974
        %v976 = vpop.f32.mrb[0].mxu0
        %977 = vmatprep.mubr.f32.mxu0 0.0
        %978 = vmatmul.mubr.f32.gmra.mrb[0].mxu0 %v619
        %v979 = vpop.f32.mrb[0].mxu0
        %v980 = vadd.f32 %v846, %v979
        %v981 = vpop.f32.mrb[0].mxu0
        %982 = vmatprep.mubr.f32.mxu0 0.0
        %983 = vmatmul.mubr.f32.gmra.mrb[0].mxu0 %v620
        %v984 = vpop.f32.mrb[0].mxu0
        %v985 = vadd.f32 %v846, %v984
        %v986 = vpop.f32.mrb[0].mxu0
        %987 = vmatprep.mubr.f32.mxu0 0.0
        %988 = vmatmul.mubr.f32.gmra.mrb[0].mxu0 %v621
        %v989 = vpop.f32.mrb[0].mxu0
        %v990 = vadd.f32 %v846, %v989
        %v991 = vpop.f32.mrb[0].mxu0
        %992 = vdwg.mxu0
        %v993 = vld [vmem:[%s6] sm:$0xff]
        %v994 = vld [vmem:[%s6 + $0x8] sm:$0xff]
        %v995 = vld [vmem:[%s6 + $0x10] sm:$0xff]
        %v996 = vld [vmem:[%s6 + $0x18] sm:$0xff]
        %v997 = vld [vmem:[%s6 + $0x20] sm:$0xff]
        %v998 = vld [vmem:[%s6 + $0x28] sm:$0xff]
        %v999 = vld [vmem:[%s6 + $0x30] sm:$0xff]
        %v1000 = vld [vmem:[%s6 + $0x38] sm:$0xff]
        %v1001 = vld [vmem:[%s6 + $0x40] sm:$0xff]
        %v1002 = vld [vmem:[%s6 + $0x48] sm:$0xff]
        %v1003 = vld [vmem:[%s6 + $0x50] sm:$0xff]
        %v1004 = vld [vmem:[%s6 + $0x58] sm:$0xff]
        %v1005 = vld [vmem:[%s6 + $0x60] sm:$0xff]
        %v1006 = vld [vmem:[%s6 + $0x68] sm:$0xff]
        %v1007 = vld [vmem:[%s6 + $0x70] sm:$0xff]
        %v1008 = vld [vmem:[%s6 + $0x78] sm:$0xff]
        %v1009 = vld [vmem:[%s7] sm:$0x1]
        %v1011 = vlaneseq
        %v1012 = vshrl.u32 %v1011, 7
        %v1013 = vsub.s32 0, %v1012
        %v1014 = vrot.slane %v1009, %v1013
        %1016 = vmatprep.subr.mxu0 0.0
        %1017 = vmatpush1.msra.mxu0 %v993
        %1018 = vmatprep.subr.mxu0 0.0
        %1019 = vmatpush1.msra.mxu0 %v994
        %1020 = vmatprep.subr.mxu0 0.0
        %1021 = vmatpush1.msra.mxu0 %v995
        %1022 = vmatprep.subr.mxu0 0.0
        %1023 = vmatpush1.msra.mxu0 %v996
        %1024 = vmatprep.subr.mxu0 0.0
        %1025 = vmatpush1.msra.mxu0 %v997
        %1026 = vmatprep.subr.mxu0 0.0
        %1027 = vmatpush1.msra.mxu0 %v998
        %1028 = vmatprep.subr.mxu0 0.0
        %1029 = vmatpush1.msra.mxu0 %v999
        %1030 = vmatprep.subr.mxu0 0.0
        %1031 = vmatpush1.msra.mxu0 %v1000
        %1032 = vmatprep.subr.mxu0 0.0
        %1033 = vmatpush1.msra.mxu0 %v1001
        %1034 = vmatprep.subr.mxu0 0.0
        %1035 = vmatpush1.msra.mxu0 %v1002
        %1036 = vmatprep.subr.mxu0 0.0
        %1037 = vmatpush1.msra.mxu0 %v1003
        %1038 = vmatprep.subr.mxu0 0.0
        %1039 = vmatpush1.msra.mxu0 %v1004
        %1040 = vmatprep.subr.mxu0 0.0
        %1041 = vmatpush1.msra.mxu0 %v1005
        %1042 = vmatprep.subr.mxu0 0.0
        %1043 = vmatpush1.msra.mxu0 %v1006
        %1044 = vmatprep.subr.mxu0 0.0
        %1045 = vmatpush1.msra.mxu0 %v1007
        %1046 = vmatprep.subr.mxu0 0.0
        %1047 = vmatpush1.msra.mxu0 %v1008
        %1048 = vmatprep.subr.mxu0 0.0
        %1049 = vmatpush1.msra.mxu0 0.0
        %1050 = vmatprep.subr.mxu0 0.0
        %1051 = vmatpush1.msra.mxu0 0.0
        %1052 = vmatprep.subr.mxu0 0.0
        %1053 = vmatpush1.msra.mxu0 0.0
        %1054 = vmatprep.subr.mxu0 0.0
        %1055 = vmatpush1.msra.mxu0 0.0
        %1056 = vmatprep.subr.mxu0 0.0
        %1057 = vmatpush1.msra.mxu0 0.0
        %1058 = vmatprep.subr.mxu0 0.0
        %1059 = vmatpush1.msra.mxu0 0.0
        %1060 = vmatprep.subr.mxu0 0.0
        %1061 = vmatpush1.msra.mxu0 0.0
        %1062 = vmatprep.subr.mxu0 0.0
        %1063 = vmatpush1.msra.mxu0 0.0
        %1064 = vmatprep.subr.mxu0 0.0
        %1065 = vmatpush1.msra.mxu0 0.0
        %1066 = vmatprep.subr.mxu0 0.0
        %1067 = vmatpush1.msra.mxu0 0.0
        %1068 = vmatprep.subr.mxu0 0.0
        %1069 = vmatpush1.msra.mxu0 0.0
        %1070 = vmatprep.subr.mxu0 0.0
        %1071 = vmatpush1.msra.mxu0 0.0
        %1072 = vmatprep.subr.mxu0 0.0
        %1073 = vmatpush1.msra.mxu0 0.0
        %1074 = vmatprep.subr.mxu0 0.0
        %1075 = vmatpush1.msra.mxu0 0.0
        %1076 = vmatprep.subr.mxu0 0.0
        %1077 = vmatpush1.msra.mxu0 0.0
        %1078 = vmatprep.subr.mxu0 0.0
        %1079 = vmatpush1.msra.mxu0 0.0
        %1080 = vmatprep.mubr.f32.mxu0 0.0
        %1081 = vmatmul.mubr.f32.gmra.mrb[0].mxu0 %v606
        %v1082 = vpop.f32.mrb[0].mxu0
        %v1083 = vadd.f32 %v1014, %v1082
        %v1084 = vpop.f32.mrb[0].mxu0
        %1085 = vmatprep.mubr.f32.mxu0 0.0
        %1086 = vmatmul.mubr.f32.gmra.mrb[0].mxu0 %v607
        %v1087 = vpop.f32.mrb[0].mxu0
        %v1088 = vadd.f32 %v1014, %v1087
        %v1089 = vpop.f32.mrb[0].mxu0
        %1090 = vmatprep.mubr.f32.mxu0 0.0
        %1091 = vmatmul.mubr.f32.gmra.mrb[0].mxu0 %v608
        %v1092 = vpop.f32.mrb[0].mxu0
        %v1093 = vadd.f32 %v1014, %v1092
        %v1094 = vpop.f32.mrb[0].mxu0
        %1095 = vmatprep.mubr.f32.mxu0 0.0
        %1096 = vmatmul.mubr.f32.gmra.mrb[0].mxu0 %v609
        %v1097 = vpop.f32.mrb[0].mxu0
        %v1098 = vadd.f32 %v1014, %v1097
        %v1099 = vpop.f32.mrb[0].mxu0
        %1100 = vmatprep.mubr.f32.mxu0 0.0
        %1101 = vmatmul.mubr.f32.gmra.mrb[0].mxu0 %v610
        %v1102 = vpop.f32.mrb[0].mxu0
        %v1103 = vadd.f32 %v1014, %v1102
        %v1104 = vpop.f32.mrb[0].mxu0
        %1105 = vmatprep.mubr.f32.mxu0 0.0
        %1106 = vmatmul.mubr.f32.gmra.mrb[0].mxu0 %v611
        %v1107 = vpop.f32.mrb[0].mxu0
        %v1108 = vadd.f32 %v1014, %v1107
        %v1109 = vpop.f32.mrb[0].mxu0
        %1110 = vmatprep.mubr.f32.mxu0 0.0
        %1111 = vmatmul.mubr.f32.gmra.mrb[0].mxu0 %v612
        %v1112 = vpop.f32.mrb[0].mxu0
        %v1113 = vadd.f32 %v1014, %v1112
        %v1114 = vpop.f32.mrb[0].mxu0
        %1115 = vmatprep.mubr.f32.mxu0 0.0
        %1116 = vmatmul.mubr.f32.gmra.mrb[0].mxu0 %v613
        %v1117 = vpop.f32.mrb[0].mxu0
        %v1118 = vadd.f32 %v1014, %v1117
        %v1119 = vpop.f32.mrb[0].mxu0
        %1120 = vmatprep.mubr.f32.mxu0 0.0
        %1121 = vmatmul.mubr.f32.gmra.mrb[0].mxu0 %v614
        %v1122 = vpop.f32.mrb[0].mxu0
        %v1123 = vadd.f32 %v1014, %v1122
        %v1124 = vpop.f32.mrb[0].mxu0
        %1125 = vmatprep.mubr.f32.mxu0 0.0
        %1126 = vmatmul.mubr.f32.gmra.mrb[0].mxu0 %v615
        %v1127 = vpop.f32.mrb[0].mxu0
        %v1128 = vadd.f32 %v1014, %v1127
        %v1129 = vpop.f32.mrb[0].mxu0
        %1130 = vmatprep.mubr.f32.mxu0 0.0
        %1131 = vmatmul.mubr.f32.gmra.mrb[0].mxu0 %v616
        %v1132 = vpop.f32.mrb[0].mxu0
        %v1133 = vadd.f32 %v1014, %v1132
        %v1134 = vpop.f32.mrb[0].mxu0
        %1135 = vmatprep.mubr.f32.mxu0 0.0
        %1136 = vmatmul.mubr.f32.gmra.mrb[0].mxu0 %v617
        %v1137 = vpop.f32.mrb[0].mxu0
        %v1138 = vadd.f32 %v1014, %v1137
        %v1139 = vpop.f32.mrb[0].mxu0
        %1140 = vmatprep.mubr.f32.mxu0 0.0
        %1141 = vmatmul.mubr.f32.gmra.mrb[0].mxu0 %v618
        %v1142 = vpop.f32.mrb[0].mxu0
        %v1143 = vadd.f32 %v1014, %v1142
        %v1144 = vpop.f32.mrb[0].mxu0
        %1145 = vmatprep.mubr.f32.mxu0 0.0
        %1146 = vmatmul.mubr.f32.gmra.mrb[0].mxu0 %v619
        %v1147 = vpop.f32.mrb[0].mxu0
        %v1148 = vadd.f32 %v1014, %v1147
        %v1149 = vpop.f32.mrb[0].mxu0
        %1150 = vmatprep.mubr.f32.mxu0 0.0
        %1151 = vmatmul.mubr.f32.gmra.mrb[0].mxu0 %v620
        %v1152 = vpop.f32.mrb[0].mxu0
        %v1153 = vadd.f32 %v1014, %v1152
        %v1154 = vpop.f32.mrb[0].mxu0
        %1155 = vmatprep.mubr.f32.mxu0 0.0
        %1156 = vmatmul.mubr.f32.gmra.mrb[0].mxu0 %v621
        %v1157 = vpop.f32.mrb[0].mxu0
        %v1158 = vadd.f32 %v1014, %v1157
        %v1159 = vpop.f32.mrb[0].mxu0
        %1160 = vdwg.mxu0
        %vm1161 = vcmask 261120
        %v1163 = vsel %vm1161, %v747, 0
        %v1166 = vsel %vm1161, %v752, 0
        %v1169 = vsel %vm1161, %v757, 0
        %v1172 = vsel %vm1161, %v762, 0
        %v1175 = vsel %vm1161, %v767, 0
        %v1178 = vsel %vm1161, %v772, 0
        %v1181 = vsel %vm1161, %v777, 0
        %v1184 = vsel %vm1161, %v782, 0
        %v1187 = vsel %vm1161, %v787, 0
        %v1190 = vsel %vm1161, %v792, 0
        %v1193 = vsel %vm1161, %v797, 0
        %v1196 = vsel %vm1161, %v802, 0
        %v1199 = vsel %vm1161, %v807, 0
        %v1202 = vsel %vm1161, %v812, 0
        %v1205 = vsel %vm1161, %v817, 0
        %v1208 = vsel %vm1161, %v822, 0
        %v1211 = vsel %vm1161, %v915, 0
        %v1214 = vsel %vm1161, %v920, 0
        %v1217 = vsel %vm1161, %v925, 0
        %v1220 = vsel %vm1161, %v930, 0
        %v1223 = vsel %vm1161, %v935, 0
        %v1226 = vsel %vm1161, %v940, 0
        %v1229 = vsel %vm1161, %v945, 0
        %v1232 = vsel %vm1161, %v950, 0
        %v1235 = vsel %vm1161, %v955, 0
        %v1238 = vsel %vm1161, %v960, 0
        %v1241 = vsel %vm1161, %v965, 0
        %v1244 = vsel %vm1161, %v970, 0
        %v1247 = vsel %vm1161, %v975, 0
        %v1250 = vsel %vm1161, %v980, 0
        %v1253 = vsel %vm1161, %v985, 0
        %v1256 = vsel %vm1161, %v990, 0
        %1258 = vmatprep.subr.mxu0 0.0
        %1259 = vmatpush1.xpose.msra.mxu0 %v1211
        %1260 = vmatprep.subr.mxu0 0.0
        %1261 = vmatpush1.xpose.msra.mxu0 %v1214
        %1262 = vmatprep.subr.mxu0 0.0
        %1263 = vmatpush1.xpose.msra.mxu0 %v1217
        %1264 = vmatprep.subr.mxu0 0.0
        %1265 = vmatpush1.xpose.msra.mxu0 %v1220
        %1266 = vmatprep.subr.mxu0 0.0
        %1267 = vmatpush1.xpose.msra.mxu0 %v1223
        %1268 = vmatprep.subr.mxu0 0.0
        %1269 = vmatpush1.xpose.msra.mxu0 %v1226
        %1270 = vmatprep.subr.mxu0 0.0
        %1271 = vmatpush1.xpose.msra.mxu0 %v1229
        %1272 = vmatprep.subr.mxu0 0.0
        %1273 = vmatpush1.xpose.msra.mxu0 %v1232
        %1274 = vmatprep.subr.mxu0 0.0
        %1275 = vmatpush1.xpose.msra.mxu0 %v1235
        %1276 = vmatprep.subr.mxu0 0.0
        %1277 = vmatpush1.xpose.msra.mxu0 %v1238
        %1278 = vmatprep.subr.mxu0 0.0
        %1279 = vmatpush1.xpose.msra.mxu0 %v1241
        %1280 = vmatprep.subr.mxu0 0.0
        %1281 = vmatpush1.xpose.msra.mxu0 %v1244
        %1282 = vmatprep.subr.mxu0 0.0
        %1283 = vmatpush1.xpose.msra.mxu0 %v1247
        %1284 = vmatprep.subr.mxu0 0.0
        %1285 = vmatpush1.xpose.msra.mxu0 %v1250
        %1286 = vmatprep.subr.mxu0 0.0
        %1287 = vmatpush1.xpose.msra.mxu0 %v1253
        %1288 = vmatprep.subr.mxu0 0.0
        %1289 = vmatpush1.xpose.msra.mxu0 %v1256
        %1290 = vmatprep.subr.mxu0 0.0
        %1291 = vmatpush1.xpose.msra.mxu0 0.0
        %1292 = vmatprep.subr.mxu0 0.0
        %1293 = vmatpush1.xpose.msra.mxu0 0.0
        %1294 = vmatprep.subr.mxu0 0.0
        %1295 = vmatpush1.xpose.msra.mxu0 0.0
        %1296 = vmatprep.subr.mxu0 0.0
        %1297 = vmatpush1.xpose.msra.mxu0 0.0
        %1298 = vmatprep.subr.mxu0 0.0
        %1299 = vmatpush1.xpose.msra.mxu0 0.0
        %1300 = vmatprep.subr.mxu0 0.0
        %1301 = vmatpush1.xpose.msra.mxu0 0.0
        %1302 = vmatprep.subr.mxu0 0.0
        %1303 = vmatpush1.xpose.msra.mxu0 0.0
        %1304 = vmatprep.subr.mxu0 0.0
        %1305 = vmatpush1.xpose.msra.mxu0 0.0
        %1306 = vmatprep.subr.mxu0 0.0
        %1307 = vmatpush1.xpose.msra.mxu0 0.0
        %1308 = vmatprep.subr.mxu0 0.0
        %1309 = vmatpush1.xpose.msra.mxu0 0.0
        %1310 = vmatprep.subr.mxu0 0.0
        %1311 = vmatpush1.xpose.msra.mxu0 0.0
        %1312 = vmatprep.subr.mxu0 0.0
        %1313 = vmatpush1.xpose.msra.mxu0 0.0
        %1314 = vmatprep.subr.mxu0 0.0
        %1315 = vmatpush1.xpose.msra.mxu0 0.0
        %1316 = vmatprep.subr.mxu0 0.0
        %1317 = vmatpush1.xpose.msra.mxu0 0.0
        %1318 = vmatprep.subr.mxu0 0.0
        %1319 = vmatpush1.xpose.msra.mxu0 0.0
        %1320 = vmatprep.subr.mxu0 0.0
        %1321 = vmatpush1.xpose.msra.mxu0 0.0
        %1322 = vmatprep.mubr.f32.mxu0 0.0
        %1323 = vmatmul.mubr.f32.gmra.mrb[0].mxu0 %v1163
        %v1324 = vpop.f32.mrb[0].mxu0
        %v1325 = vadd.f32 0.0, %v1324
        %v1326 = vpop.f32.mrb[0].mxu0
        %1327 = vmatprep.mubr.f32.mxu0 0.0
        %1328 = vmatmul.mubr.f32.gmra.mrb[0].mxu0 %v1166
        %v1329 = vpop.f32.mrb[0].mxu0
        %v1330 = vadd.f32 0.0, %v1329
        %v1331 = vpop.f32.mrb[0].mxu0
        %1332 = vmatprep.mubr.f32.mxu0 0.0
        %1333 = vmatmul.mubr.f32.gmra.mrb[0].mxu0 %v1169
        %v1334 = vpop.f32.mrb[0].mxu0
        %v1335 = vadd.f32 0.0, %v1334
        %v1336 = vpop.f32.mrb[0].mxu0
        %1337 = vmatprep.mubr.f32.mxu0 0.0
        %1338 = vmatmul.mubr.f32.gmra.mrb[0].mxu0 %v1172
        %v1339 = vpop.f32.mrb[0].mxu0
        %v1340 = vadd.f32 0.0, %v1339
        %v1341 = vpop.f32.mrb[0].mxu0
        %1342 = vmatprep.mubr.f32.mxu0 0.0
        %1343 = vmatmul.mubr.f32.gmra.mrb[0].mxu0 %v1175
        %v1344 = vpop.f32.mrb[0].mxu0
        %v1345 = vadd.f32 0.0, %v1344
        %v1346 = vpop.f32.mrb[0].mxu0
        %1347 = vmatprep.mubr.f32.mxu0 0.0
        %1348 = vmatmul.mubr.f32.gmra.mrb[0].mxu0 %v1178
        %v1349 = vpop.f32.mrb[0].mxu0
        %v1350 = vadd.f32 0.0, %v1349
        %v1351 = vpop.f32.mrb[0].mxu0
        %1352 = vmatprep.mubr.f32.mxu0 0.0
        %1353 = vmatmul.mubr.f32.gmra.mrb[0].mxu0 %v1181
        %v1354 = vpop.f32.mrb[0].mxu0
        %v1355 = vadd.f32 0.0, %v1354
        %v1356 = vpop.f32.mrb[0].mxu0
        %1357 = vmatprep.mubr.f32.mxu0 0.0
        %1358 = vmatmul.mubr.f32.gmra.mrb[0].mxu0 %v1184
        %v1359 = vpop.f32.mrb[0].mxu0
        %v1360 = vadd.f32 0.0, %v1359
        %v1361 = vpop.f32.mrb[0].mxu0
        %1362 = vmatprep.mubr.f32.mxu0 0.0
        %1363 = vmatmul.mubr.f32.gmra.mrb[0].mxu0 %v1187
        %v1364 = vpop.f32.mrb[0].mxu0
        %v1365 = vadd.f32 0.0, %v1364
        %v1366 = vpop.f32.mrb[0].mxu0
        %1367 = vmatprep.mubr.f32.mxu0 0.0
        %1368 = vmatmul.mubr.f32.gmra.mrb[0].mxu0 %v1190
        %v1369 = vpop.f32.mrb[0].mxu0
        %v1370 = vadd.f32 0.0, %v1369
        %v1371 = vpop.f32.mrb[0].mxu0
        %1372 = vmatprep.mubr.f32.mxu0 0.0
        %1373 = vmatmul.mubr.f32.gmra.mrb[0].mxu0 %v1193
        %v1374 = vpop.f32.mrb[0].mxu0
        %v1375 = vadd.f32 0.0, %v1374
        %v1376 = vpop.f32.mrb[0].mxu0
        %1377 = vmatprep.mubr.f32.mxu0 0.0
        %1378 = vmatmul.mubr.f32.gmra.mrb[0].mxu0 %v1196
        %v1379 = vpop.f32.mrb[0].mxu0
        %v1380 = vadd.f32 0.0, %v1379
        %v1381 = vpop.f32.mrb[0].mxu0
        %1382 = vmatprep.mubr.f32.mxu0 0.0
        %1383 = vmatmul.mubr.f32.gmra.mrb[0].mxu0 %v1199
        %v1384 = vpop.f32.mrb[0].mxu0
        %v1385 = vadd.f32 0.0, %v1384
        %v1386 = vpop.f32.mrb[0].mxu0
        %1387 = vmatprep.mubr.f32.mxu0 0.0
        %1388 = vmatmul.mubr.f32.gmra.mrb[0].mxu0 %v1202
        %v1389 = vpop.f32.mrb[0].mxu0
        %v1390 = vadd.f32 0.0, %v1389
        %v1391 = vpop.f32.mrb[0].mxu0
        %1392 = vmatprep.mubr.f32.mxu0 0.0
        %1393 = vmatmul.mubr.f32.gmra.mrb[0].mxu0 %v1205
        %v1394 = vpop.f32.mrb[0].mxu0
        %v1395 = vadd.f32 0.0, %v1394
        %v1396 = vpop.f32.mrb[0].mxu0
        %1397 = vmatprep.mubr.f32.mxu0 0.0
        %1398 = vmatmul.mubr.f32.gmra.mrb[0].mxu0 %v1208
        %v1399 = vpop.f32.mrb[0].mxu0
        %v1400 = vadd.f32 0.0, %v1399
        %v1401 = vpop.f32.mrb[0].mxu0
        %1402 = vdwg.mxu0
        %v1403 = vmul.f32 %v1325, 0.17677669
        %v1404 = vmul.f32 %v1330, 0.17677669
        %v1405 = vmul.f32 %v1335, 0.17677669
        %v1406 = vmul.f32 %v1340, 0.17677669
        %v1407 = vmul.f32 %v1345, 0.17677669
        %v1408 = vmul.f32 %v1350, 0.17677669
        %v1409 = vmul.f32 %v1355, 0.17677669
        %v1410 = vmul.f32 %v1360, 0.17677669
        %v1411 = vmul.f32 %v1365, 0.17677669
        %v1412 = vmul.f32 %v1370, 0.17677669
        %v1413 = vmul.f32 %v1375, 0.17677669
        %v1414 = vmul.f32 %v1380, 0.17677669
        %v1415 = vmul.f32 %v1385, 0.17677669
        %v1416 = vmul.f32 %v1390, 0.17677669
        %v1417 = vmul.f32 %v1395, 0.17677669
        %v1418 = vmul.f32 %v1400, 0.17677669
        %v1419 = vsel %vm641, %v1403, -1e+30
        %v1420 = vsel %vm642, %v1404, -1e+30
        %v1421 = vsel %vm643, %v1405, -1e+30
        %v1422 = vsel %vm644, %v1406, -1e+30
        %v1423 = vsel %vm645, %v1407, -1e+30
        %v1424 = vsel %vm646, %v1408, -1e+30
        %v1425 = vsel %vm647, %v1409, -1e+30
        %v1426 = vsel %vm648, %v1410, -1e+30
        %v1427 = vsel %vm649, %v1411, -1e+30
        %v1428 = vsel %vm650, %v1412, -1e+30
        %v1429 = vsel %vm651, %v1413, -1e+30
        %v1430 = vsel %vm652, %v1414, -1e+30
        %v1431 = vsel %vm653, %v1415, -1e+30
        %v1432 = vsel %vm654, %v1416, -1e+30
        %v1433 = vsel %vm655, %v1417, -1e+30
        %v1434 = vsel %vm656, %v1418, -1e+30
        %1435 = vmax.xlane.f32.xlu0 %v1419
        %v1436 = vpop.xlane.xlu0 %1435
        %1437 = vmax.xlane.f32.xlu0 %v1420
        %v1438 = vpop.xlane.xlu0 %1437
        %1439 = vmax.xlane.f32.xlu0 %v1421
        %v1440 = vpop.xlane.xlu0 %1439
        %1441 = vmax.xlane.f32.xlu0 %v1422
        %v1442 = vpop.xlane.xlu0 %1441
        %1443 = vmax.xlane.f32.xlu0 %v1423
        %v1444 = vpop.xlane.xlu0 %1443
        %1445 = vmax.xlane.f32.xlu0 %v1424
        %v1446 = vpop.xlane.xlu0 %1445
        %1447 = vmax.xlane.f32.xlu0 %v1425
        %v1448 = vpop.xlane.xlu0 %1447
        %1449 = vmax.xlane.f32.xlu0 %v1426
        %v1450 = vpop.xlane.xlu0 %1449
        %1451 = vmax.xlane.f32.xlu0 %v1427
        %v1452 = vpop.xlane.xlu0 %1451
        %1453 = vmax.xlane.f32.xlu0 %v1428
        %v1454 = vpop.xlane.xlu0 %1453
        %1455 = vmax.xlane.f32.xlu0 %v1429
        %v1456 = vpop.xlane.xlu0 %1455
        %1457 = vmax.xlane.f32.xlu0 %v1430
        %v1458 = vpop.xlane.xlu0 %1457
        %1459 = vmax.xlane.f32.xlu0 %v1431
        %v1460 = vpop.xlane.xlu0 %1459
        %1461 = vmax.xlane.f32.xlu0 %v1432
        %v1462 = vpop.xlane.xlu0 %1461
        %1463 = vmax.xlane.f32.xlu0 %v1433
        %v1464 = vpop.xlane.xlu0 %1463
        %1465 = vmax.xlane.f32.xlu0 %v1434
        %v1466 = vpop.xlane.xlu0 %1465
        %v1467 = vsub.f32 %v1419, %v1436
        %v1468 = vsub.f32 %v1420, %v1438
        %v1469 = vsub.f32 %v1421, %v1440
        %v1470 = vsub.f32 %v1422, %v1442
        %v1471 = vsub.f32 %v1423, %v1444
        %v1472 = vsub.f32 %v1424, %v1446
        %v1473 = vsub.f32 %v1425, %v1448
        %v1474 = vsub.f32 %v1426, %v1450
        %v1475 = vsub.f32 %v1427, %v1452
        %v1476 = vsub.f32 %v1428, %v1454
        %v1477 = vsub.f32 %v1429, %v1456
        %v1478 = vsub.f32 %v1430, %v1458
        %v1479 = vsub.f32 %v1431, %v1460
        %v1480 = vsub.f32 %v1432, %v1462
        %v1481 = vsub.f32 %v1433, %v1464
        %v1482 = vsub.f32 %v1434, %v1466
        %v1483 = vmul.f32 %v1467, 1.442695
        %v1484 = vpow.pop %v1483
        %v1485 = vmul.f32 %v1468, 1.442695
        %v1486 = vpow.pop %v1485
        %v1487 = vmul.f32 %v1469, 1.442695
        %v1488 = vpow.pop %v1487
        %v1489 = vmul.f32 %v1470, 1.442695
        %v1490 = vpow.pop %v1489
        %v1491 = vmul.f32 %v1471, 1.442695
        %v1492 = vpow.pop %v1491
        %v1493 = vmul.f32 %v1472, 1.442695
        %v1494 = vpow.pop %v1493
        %v1495 = vmul.f32 %v1473, 1.442695
        %v1496 = vpow.pop %v1495
        %v1497 = vmul.f32 %v1474, 1.442695
        %v1498 = vpow.pop %v1497
        %v1499 = vmul.f32 %v1475, 1.442695
        %v1500 = vpow.pop %v1499
        %v1501 = vmul.f32 %v1476, 1.442695
        %v1502 = vpow.pop %v1501
        %v1503 = vmul.f32 %v1477, 1.442695
        %v1504 = vpow.pop %v1503
        %v1505 = vmul.f32 %v1478, 1.442695
        %v1506 = vpow.pop %v1505
        %v1507 = vmul.f32 %v1479, 1.442695
        %v1508 = vpow.pop %v1507
        %v1509 = vmul.f32 %v1480, 1.442695
        %v1510 = vpow.pop %v1509
        %v1511 = vmul.f32 %v1481, 1.442695
        %v1512 = vpow.pop %v1511
        %v1513 = vmul.f32 %v1482, 1.442695
        %v1514 = vpow.pop %v1513
        %1515 = vadd.xlane.f32.xlu0 %v1484
        %v1516 = vpop.xlane.xlu0 %1515
        %1517 = vadd.xlane.f32.xlu0 %v1486
        %v1518 = vpop.xlane.xlu0 %1517
        %1519 = vadd.xlane.f32.xlu0 %v1488
        %v1520 = vpop.xlane.xlu0 %1519
        %1521 = vadd.xlane.f32.xlu0 %v1490
        %v1522 = vpop.xlane.xlu0 %1521
        %1523 = vadd.xlane.f32.xlu0 %v1492
        %v1524 = vpop.xlane.xlu0 %1523
        %1525 = vadd.xlane.f32.xlu0 %v1494
        %v1526 = vpop.xlane.xlu0 %1525
        %1527 = vadd.xlane.f32.xlu0 %v1496
        %v1528 = vpop.xlane.xlu0 %1527
        %1529 = vadd.xlane.f32.xlu0 %v1498
        %v1530 = vpop.xlane.xlu0 %1529
        %1531 = vadd.xlane.f32.xlu0 %v1500
        %v1532 = vpop.xlane.xlu0 %1531
        %1533 = vadd.xlane.f32.xlu0 %v1502
        %v1534 = vpop.xlane.xlu0 %1533
        %1535 = vadd.xlane.f32.xlu0 %v1504
        %v1536 = vpop.xlane.xlu0 %1535
        %1537 = vadd.xlane.f32.xlu0 %v1506
        %v1538 = vpop.xlane.xlu0 %1537
        %1539 = vadd.xlane.f32.xlu0 %v1508
        %v1540 = vpop.xlane.xlu0 %1539
        %1541 = vadd.xlane.f32.xlu0 %v1510
        %v1542 = vpop.xlane.xlu0 %1541
        %1543 = vadd.xlane.f32.xlu0 %v1512
        %v1544 = vpop.xlane.xlu0 %1543
        %1545 = vadd.xlane.f32.xlu0 %v1514
        %v1546 = vpop.xlane.xlu0 %1545
        %v1547 = vrcp.pop %v1516
        %v1548 = vmul.f32 %v1484, %v1547
        %v1549 = vrcp.pop %v1518
        %v1550 = vmul.f32 %v1486, %v1549
        %v1551 = vrcp.pop %v1520
        %v1552 = vmul.f32 %v1488, %v1551
        %v1553 = vrcp.pop %v1522
        %v1554 = vmul.f32 %v1490, %v1553
        %v1555 = vrcp.pop %v1524
        %v1556 = vmul.f32 %v1492, %v1555
        %v1557 = vrcp.pop %v1526
        %v1558 = vmul.f32 %v1494, %v1557
        %v1559 = vrcp.pop %v1528
        %v1560 = vmul.f32 %v1496, %v1559
        %v1561 = vrcp.pop %v1530
        %v1562 = vmul.f32 %v1498, %v1561
        %v1563 = vrcp.pop %v1532
        %v1564 = vmul.f32 %v1500, %v1563
        %v1565 = vrcp.pop %v1534
        %v1566 = vmul.f32 %v1502, %v1565
        %v1567 = vrcp.pop %v1536
        %v1568 = vmul.f32 %v1504, %v1567
        %v1569 = vrcp.pop %v1538
        %v1570 = vmul.f32 %v1506, %v1569
        %v1571 = vrcp.pop %v1540
        %v1572 = vmul.f32 %v1508, %v1571
        %v1573 = vrcp.pop %v1542
        %v1574 = vmul.f32 %v1510, %v1573
        %v1575 = vrcp.pop %v1544
        %v1576 = vmul.f32 %v1512, %v1575
        %v1577 = vrcp.pop %v1546
        %v1578 = vmul.f32 %v1514, %v1577
        %1579 = vmatprep.subr.mxu0 0.0
        %1580 = vmatpush1.msra.mxu0 %v1083
        %1581 = vmatprep.subr.mxu0 0.0
        %1582 = vmatpush1.msra.mxu0 %v1088
        %1583 = vmatprep.subr.mxu0 0.0
        %1584 = vmatpush1.msra.mxu0 %v1093
        %1585 = vmatprep.subr.mxu0 0.0
        %1586 = vmatpush1.msra.mxu0 %v1098
        %1587 = vmatprep.subr.mxu0 0.0
        %1588 = vmatpush1.msra.mxu0 %v1103
        %1589 = vmatprep.subr.mxu0 0.0
        %1590 = vmatpush1.msra.mxu0 %v1108
        %1591 = vmatprep.subr.mxu0 0.0
        %1592 = vmatpush1.msra.mxu0 %v1113
        %1593 = vmatprep.subr.mxu0 0.0
        %1594 = vmatpush1.msra.mxu0 %v1118
        %1595 = vmatprep.subr.mxu0 0.0
        %1596 = vmatpush1.msra.mxu0 %v1123
        %1597 = vmatprep.subr.mxu0 0.0
        %1598 = vmatpush1.msra.mxu0 %v1128
        %1599 = vmatprep.subr.mxu0 0.0
        %1600 = vmatpush1.msra.mxu0 %v1133
        %1601 = vmatprep.subr.mxu0 0.0
        %1602 = vmatpush1.msra.mxu0 %v1138
        %1603 = vmatprep.subr.mxu0 0.0
        %1604 = vmatpush1.msra.mxu0 %v1143
        %1605 = vmatprep.subr.mxu0 0.0
        %1606 = vmatpush1.msra.mxu0 %v1148
        %1607 = vmatprep.subr.mxu0 0.0
        %1608 = vmatpush1.msra.mxu0 %v1153
        %1609 = vmatprep.subr.mxu0 0.0
        %1610 = vmatpush1.msra.mxu0 %v1158
        %1611 = vmatprep.subr.mxu0 0.0
        %1612 = vmatpush1.msra.mxu0 0.0
        %1613 = vmatprep.subr.mxu0 0.0
        %1614 = vmatpush1.msra.mxu0 0.0
        %1615 = vmatprep.subr.mxu0 0.0
        %1616 = vmatpush1.msra.mxu0 0.0
        %1617 = vmatprep.subr.mxu0 0.0
        %1618 = vmatpush1.msra.mxu0 0.0
        %1619 = vmatprep.subr.mxu0 0.0
        %1620 = vmatpush1.msra.mxu0 0.0
        %1621 = vmatprep.subr.mxu0 0.0
        %1622 = vmatpush1.msra.mxu0 0.0
        %1623 = vmatprep.subr.mxu0 0.0
        %1624 = vmatpush1.msra.mxu0 0.0
        %1625 = vmatprep.subr.mxu0 0.0
        %1626 = vmatpush1.msra.mxu0 0.0
        %1627 = vmatprep.subr.mxu0 0.0
        %1628 = vmatpush1.msra.mxu0 0.0
        %1629 = vmatprep.subr.mxu0 0.0
        %1630 = vmatpush1.msra.mxu0 0.0
        %1631 = vmatprep.subr.mxu0 0.0
        %1632 = vmatpush1.msra.mxu0 0.0
        %1633 = vmatprep.subr.mxu0 0.0
        %1634 = vmatpush1.msra.mxu0 0.0
        %1635 = vmatprep.subr.mxu0 0.0
        %1636 = vmatpush1.msra.mxu0 0.0
        %1637 = vmatprep.subr.mxu0 0.0
        %1638 = vmatpush1.msra.mxu0 0.0
        %1639 = vmatprep.subr.mxu0 0.0
        %1640 = vmatpush1.msra.mxu0 0.0
        %1641 = vmatprep.subr.mxu0 0.0
        %1642 = vmatpush1.msra.mxu0 0.0
        %1643 = vmatprep.mubr.f32.mxu0 0.0
        %1644 = vmatmul.mubr.f32.gmra.mrb[0].mxu0 %v1548
        %v1645 = vpop.f32.mrb[0].mxu0
        %v1646 = vadd.f32 0.0, %v1645
        %v1647 = vpop.f32.mrb[0].mxu0
        %1648 = vmatprep.mubr.f32.mxu0 0.0
        %1649 = vmatmul.mubr.f32.gmra.mrb[0].mxu0 %v1550
        %v1650 = vpop.f32.mrb[0].mxu0
        %v1651 = vadd.f32 0.0, %v1650
        %v1652 = vpop.f32.mrb[0].mxu0
        %1653 = vmatprep.mubr.f32.mxu0 0.0
        %1654 = vmatmul.mubr.f32.gmra.mrb[0].mxu0 %v1552
        %v1655 = vpop.f32.mrb[0].mxu0
        %v1656 = vadd.f32 0.0, %v1655
        %v1657 = vpop.f32.mrb[0].mxu0
        %1658 = vmatprep.mubr.f32.mxu0 0.0
        %1659 = vmatmul.mubr.f32.gmra.mrb[0].mxu0 %v1554
        %v1660 = vpop.f32.mrb[0].mxu0
        %v1661 = vadd.f32 0.0, %v1660
        %v1662 = vpop.f32.mrb[0].mxu0
        %1663 = vmatprep.mubr.f32.mxu0 0.0
        %1664 = vmatmul.mubr.f32.gmra.mrb[0].mxu0 %v1556
        %v1665 = vpop.f32.mrb[0].mxu0
        %v1666 = vadd.f32 0.0, %v1665
        %v1667 = vpop.f32.mrb[0].mxu0
        %1668 = vmatprep.mubr.f32.mxu0 0.0
        %1669 = vmatmul.mubr.f32.gmra.mrb[0].mxu0 %v1558
        %v1670 = vpop.f32.mrb[0].mxu0
        %v1671 = vadd.f32 0.0, %v1670
        %v1672 = vpop.f32.mrb[0].mxu0
        %1673 = vmatprep.mubr.f32.mxu0 0.0
        %1674 = vmatmul.mubr.f32.gmra.mrb[0].mxu0 %v1560
        %v1675 = vpop.f32.mrb[0].mxu0
        %v1676 = vadd.f32 0.0, %v1675
        %v1677 = vpop.f32.mrb[0].mxu0
        %1678 = vmatprep.mubr.f32.mxu0 0.0
        %1679 = vmatmul.mubr.f32.gmra.mrb[0].mxu0 %v1562
        %v1680 = vpop.f32.mrb[0].mxu0
        %v1681 = vadd.f32 0.0, %v1680
        %v1682 = vpop.f32.mrb[0].mxu0
        %1683 = vmatprep.mubr.f32.mxu0 0.0
        %1684 = vmatmul.mubr.f32.gmra.mrb[0].mxu0 %v1564
        %v1685 = vpop.f32.mrb[0].mxu0
        %v1686 = vadd.f32 0.0, %v1685
        %v1687 = vpop.f32.mrb[0].mxu0
        %1688 = vmatprep.mubr.f32.mxu0 0.0
        %1689 = vmatmul.mubr.f32.gmra.mrb[0].mxu0 %v1566
        %v1690 = vpop.f32.mrb[0].mxu0
        %v1691 = vadd.f32 0.0, %v1690
        %v1692 = vpop.f32.mrb[0].mxu0
        %1693 = vmatprep.mubr.f32.mxu0 0.0
        %1694 = vmatmul.mubr.f32.gmra.mrb[0].mxu0 %v1568
        %v1695 = vpop.f32.mrb[0].mxu0
        %v1696 = vadd.f32 0.0, %v1695
        %v1697 = vpop.f32.mrb[0].mxu0
        %1698 = vmatprep.mubr.f32.mxu0 0.0
        %1699 = vmatmul.mubr.f32.gmra.mrb[0].mxu0 %v1570
        %v1700 = vpop.f32.mrb[0].mxu0
        %v1701 = vadd.f32 0.0, %v1700
        %v1702 = vpop.f32.mrb[0].mxu0
        %1703 = vmatprep.mubr.f32.mxu0 0.0
        %1704 = vmatmul.mubr.f32.gmra.mrb[0].mxu0 %v1572
        %v1705 = vpop.f32.mrb[0].mxu0
        %v1706 = vadd.f32 0.0, %v1705
        %v1707 = vpop.f32.mrb[0].mxu0
        %1708 = vmatprep.mubr.f32.mxu0 0.0
        %1709 = vmatmul.mubr.f32.gmra.mrb[0].mxu0 %v1574
        %v1710 = vpop.f32.mrb[0].mxu0
        %v1711 = vadd.f32 0.0, %v1710
        %v1712 = vpop.f32.mrb[0].mxu0
        %1713 = vmatprep.mubr.f32.mxu0 0.0
        %1714 = vmatmul.mubr.f32.gmra.mrb[0].mxu0 %v1576
        %v1715 = vpop.f32.mrb[0].mxu0
        %v1716 = vadd.f32 0.0, %v1715
        %v1717 = vpop.f32.mrb[0].mxu0
        %1718 = vmatprep.mubr.f32.mxu0 0.0
        %1719 = vmatmul.mubr.f32.gmra.mrb[0].mxu0 %v1578
        %v1720 = vpop.f32.mrb[0].mxu0
        %v1721 = vadd.f32 0.0, %v1720
        %v1722 = vpop.f32.mrb[0].mxu0
        %1723 = vdwg.mxu0
        %v1724 = vld [vmem:[%s8] sm:$0xff]
        %v1725 = vld [vmem:[%s8 + $0x8] sm:$0xff]
        %v1726 = vld [vmem:[%s8 + $0x10] sm:$0xff]
        %v1727 = vld [vmem:[%s8 + $0x18] sm:$0xff]
        %s1728 = scalar_lea.vmem %s2, 128
        %v1729 = vld [vmem:[%s1728] sm:$0xff]
        %v1730 = vld [vmem:[%s1728 + $0x8] sm:$0xff]
        %v1731 = vld [vmem:[%s1728 + $0x10] sm:$0xff]
        %v1732 = vld [vmem:[%s1728 + $0x18] sm:$0xff]
        %v1733 = vld [vmem:[%s1728 + $0x20] sm:$0xff]
        %v1734 = vld [vmem:[%s1728 + $0x28] sm:$0xff]
        %v1735 = vld [vmem:[%s1728 + $0x30] sm:$0xff]
        %v1736 = vld [vmem:[%s1728 + $0x38] sm:$0xff]
        %v1737 = vld [vmem:[%s1728 + $0x40] sm:$0xff]
        %v1738 = vld [vmem:[%s1728 + $0x48] sm:$0xff]
        %v1739 = vld [vmem:[%s1728 + $0x50] sm:$0xff]
        %v1740 = vld [vmem:[%s1728 + $0x58] sm:$0xff]
        %v1741 = vld [vmem:[%s1728 + $0x60] sm:$0xff]
        %v1742 = vld [vmem:[%s1728 + $0x68] sm:$0xff]
        %v1743 = vld [vmem:[%s1728 + $0x70] sm:$0xff]
        %v1744 = vld [vmem:[%s1728 + $0x78] sm:$0xff]
        %s1745 = scalar_lea.vmem %s3, 1
        %v1746 = vld [vmem:[%s1745] sm:$0x1]
        %v1748 = vlaneseq
        %v1749 = vshrl.u32 %v1748, 7
        %v1750 = vsub.s32 0, %v1749
        %v1751 = vrot.slane %v1746, %v1750
        %1753 = vmatprep.subr.mxu0 0.0
        %1754 = vmatpush1.msra.mxu0 %v1729
        %1755 = vmatprep.subr.mxu0 0.0
        %1756 = vmatpush1.msra.mxu0 %v1730
        %1757 = vmatprep.subr.mxu0 0.0
        %1758 = vmatpush1.msra.mxu0 %v1731
        %1759 = vmatprep.subr.mxu0 0.0
        %1760 = vmatpush1.msra.mxu0 %v1732
        %1761 = vmatprep.subr.mxu0 0.0
        %1762 = vmatpush1.msra.mxu0 %v1733
        %1763 = vmatprep.subr.mxu0 0.0
        %1764 = vmatpush1.msra.mxu0 %v1734
        %1765 = vmatprep.subr.mxu0 0.0
        %1766 = vmatpush1.msra.mxu0 %v1735
        %1767 = vmatprep.subr.mxu0 0.0
        %1768 = vmatpush1.msra.mxu0 %v1736
        %1769 = vmatprep.subr.mxu0 0.0
        %1770 = vmatpush1.msra.mxu0 %v1737
        %1771 = vmatprep.subr.mxu0 0.0
        %1772 = vmatpush1.msra.mxu0 %v1738
        %1773 = vmatprep.subr.mxu0 0.0
        %1774 = vmatpush1.msra.mxu0 %v1739
        %1775 = vmatprep.subr.mxu0 0.0
        %1776 = vmatpush1.msra.mxu0 %v1740
        %1777 = vmatprep.subr.mxu0 0.0
        %1778 = vmatpush1.msra.mxu0 %v1741
        %1779 = vmatprep.subr.mxu0 0.0
        %1780 = vmatpush1.msra.mxu0 %v1742
        %1781 = vmatprep.subr.mxu0 0.0
        %1782 = vmatpush1.msra.mxu0 %v1743
        %1783 = vmatprep.subr.mxu0 0.0
        %1784 = vmatpush1.msra.mxu0 %v1744
        %1785 = vmatprep.subr.mxu0 0.0
        %1786 = vmatpush1.msra.mxu0 0.0
        %1787 = vmatprep.subr.mxu0 0.0
        %1788 = vmatpush1.msra.mxu0 0.0
        %1789 = vmatprep.subr.mxu0 0.0
        %1790 = vmatpush1.msra.mxu0 0.0
        %1791 = vmatprep.subr.mxu0 0.0
        %1792 = vmatpush1.msra.mxu0 0.0
        %1793 = vmatprep.subr.mxu0 0.0
        %1794 = vmatpush1.msra.mxu0 0.0
        %1795 = vmatprep.subr.mxu0 0.0
        %1796 = vmatpush1.msra.mxu0 0.0
        %1797 = vmatprep.subr.mxu0 0.0
        %1798 = vmatpush1.msra.mxu0 0.0
        %1799 = vmatprep.subr.mxu0 0.0
        %1800 = vmatpush1.msra.mxu0 0.0
        %1801 = vmatprep.subr.mxu0 0.0
        %1802 = vmatpush1.msra.mxu0 0.0
        %1803 = vmatprep.subr.mxu0 0.0
        %1804 = vmatpush1.msra.mxu0 0.0
        %1805 = vmatprep.subr.mxu0 0.0
        %1806 = vmatpush1.msra.mxu0 0.0
        %1807 = vmatprep.subr.mxu0 0.0
        %1808 = vmatpush1.msra.mxu0 0.0
        %1809 = vmatprep.subr.mxu0 0.0
        %1810 = vmatpush1.msra.mxu0 0.0
        %1811 = vmatprep.subr.mxu0 0.0
        %1812 = vmatpush1.msra.mxu0 0.0
        %1813 = vmatprep.subr.mxu0 0.0
        %1814 = vmatpush1.msra.mxu0 0.0
        %1815 = vmatprep.subr.mxu0 0.0
        %1816 = vmatpush1.msra.mxu0 0.0
        %1817 = vmatprep.mubr.f32.mxu0 0.0
        %1818 = vmatmul.mubr.f32.gmra.mrb[0].mxu0 %v606
        %v1819 = vpop.f32.mrb[0].mxu0
        %v1820 = vadd.f32 %v1751, %v1819
        %v1821 = vpop.f32.mrb[0].mxu0
        %1822 = vmatprep.mubr.f32.mxu0 0.0
        %1823 = vmatmul.mubr.f32.gmra.mrb[0].mxu0 %v607
        %v1824 = vpop.f32.mrb[0].mxu0
        %v1825 = vadd.f32 %v1751, %v1824
        %v1826 = vpop.f32.mrb[0].mxu0
        %1827 = vmatprep.mubr.f32.mxu0 0.0
        %1828 = vmatmul.mubr.f32.gmra.mrb[0].mxu0 %v608
        %v1829 = vpop.f32.mrb[0].mxu0
        %v1830 = vadd.f32 %v1751, %v1829
        %v1831 = vpop.f32.mrb[0].mxu0
        %1832 = vmatprep.mubr.f32.mxu0 0.0
        %1833 = vmatmul.mubr.f32.gmra.mrb[0].mxu0 %v609
        %v1834 = vpop.f32.mrb[0].mxu0
        %v1835 = vadd.f32 %v1751, %v1834
        %v1836 = vpop.f32.mrb[0].mxu0
        %1837 = vmatprep.mubr.f32.mxu0 0.0
        %1838 = vmatmul.mubr.f32.gmra.mrb[0].mxu0 %v610
        %v1839 = vpop.f32.mrb[0].mxu0
        %v1840 = vadd.f32 %v1751, %v1839
        %v1841 = vpop.f32.mrb[0].mxu0
        %1842 = vmatprep.mubr.f32.mxu0 0.0
        %1843 = vmatmul.mubr.f32.gmra.mrb[0].mxu0 %v611
        %v1844 = vpop.f32.mrb[0].mxu0
        %v1845 = vadd.f32 %v1751, %v1844
        %v1846 = vpop.f32.mrb[0].mxu0
        %1847 = vmatprep.mubr.f32.mxu0 0.0
        %1848 = vmatmul.mubr.f32.gmra.mrb[0].mxu0 %v612
        %v1849 = vpop.f32.mrb[0].mxu0
        %v1850 = vadd.f32 %v1751, %v1849
        %v1851 = vpop.f32.mrb[0].mxu0
        %1852 = vmatprep.mubr.f32.mxu0 0.0
        %1853 = vmatmul.mubr.f32.gmra.mrb[0].mxu0 %v613
        %v1854 = vpop.f32.mrb[0].mxu0
        %v1855 = vadd.f32 %v1751, %v1854
        %v1856 = vpop.f32.mrb[0].mxu0
        %1857 = vmatprep.mubr.f32.mxu0 0.0
        %1858 = vmatmul.mubr.f32.gmra.mrb[0].mxu0 %v614
        %v1859 = vpop.f32.mrb[0].mxu0
        %v1860 = vadd.f32 %v1751, %v1859
        %v1861 = vpop.f32.mrb[0].mxu0
        %1862 = vmatprep.mubr.f32.mxu0 0.0
        %1863 = vmatmul.mubr.f32.gmra.mrb[0].mxu0 %v615
        %v1864 = vpop.f32.mrb[0].mxu0
        %v1865 = vadd.f32 %v1751, %v1864
        %v1866 = vpop.f32.mrb[0].mxu0
        %1867 = vmatprep.mubr.f32.mxu0 0.0
        %1868 = vmatmul.mubr.f32.gmra.mrb[0].mxu0 %v616
        %v1869 = vpop.f32.mrb[0].mxu0
        %v1870 = vadd.f32 %v1751, %v1869
        %v1871 = vpop.f32.mrb[0].mxu0
        %1872 = vmatprep.mubr.f32.mxu0 0.0
        %1873 = vmatmul.mubr.f32.gmra.mrb[0].mxu0 %v617
        %v1874 = vpop.f32.mrb[0].mxu0
        %v1875 = vadd.f32 %v1751, %v1874
        %v1876 = vpop.f32.mrb[0].mxu0
        %1877 = vmatprep.mubr.f32.mxu0 0.0
        %1878 = vmatmul.mubr.f32.gmra.mrb[0].mxu0 %v618
        %v1879 = vpop.f32.mrb[0].mxu0
        %v1880 = vadd.f32 %v1751, %v1879
        %v1881 = vpop.f32.mrb[0].mxu0
        %1882 = vmatprep.mubr.f32.mxu0 0.0
        %1883 = vmatmul.mubr.f32.gmra.mrb[0].mxu0 %v619
        %v1884 = vpop.f32.mrb[0].mxu0
        %v1885 = vadd.f32 %v1751, %v1884
        %v1886 = vpop.f32.mrb[0].mxu0
        %1887 = vmatprep.mubr.f32.mxu0 0.0
        %1888 = vmatmul.mubr.f32.gmra.mrb[0].mxu0 %v620
        %v1889 = vpop.f32.mrb[0].mxu0
        %v1890 = vadd.f32 %v1751, %v1889
        %v1891 = vpop.f32.mrb[0].mxu0
        %1892 = vmatprep.mubr.f32.mxu0 0.0
        %1893 = vmatmul.mubr.f32.gmra.mrb[0].mxu0 %v621
        %v1894 = vpop.f32.mrb[0].mxu0
        %v1895 = vadd.f32 %v1751, %v1894
        %v1896 = vpop.f32.mrb[0].mxu0
        %1897 = vdwg.mxu0
        %s1898 = scalar_lea.vmem %s4, 128
        %v1899 = vld [vmem:[%s1898] sm:$0xff]
        %v1900 = vld [vmem:[%s1898 + $0x8] sm:$0xff]
        %v1901 = vld [vmem:[%s1898 + $0x10] sm:$0xff]
        %v1902 = vld [vmem:[%s1898 + $0x18] sm:$0xff]
        %v1903 = vld [vmem:[%s1898 + $0x20] sm:$0xff]
        %v1904 = vld [vmem:[%s1898 + $0x28] sm:$0xff]
        %v1905 = vld [vmem:[%s1898 + $0x30] sm:$0xff]
        %v1906 = vld [vmem:[%s1898 + $0x38] sm:$0xff]
        %v1907 = vld [vmem:[%s1898 + $0x40] sm:$0xff]
        %v1908 = vld [vmem:[%s1898 + $0x48] sm:$0xff]
        %v1909 = vld [vmem:[%s1898 + $0x50] sm:$0xff]
        %v1910 = vld [vmem:[%s1898 + $0x58] sm:$0xff]
        %v1911 = vld [vmem:[%s1898 + $0x60] sm:$0xff]
        %v1912 = vld [vmem:[%s1898 + $0x68] sm:$0xff]
        %v1913 = vld [vmem:[%s1898 + $0x70] sm:$0xff]
        %v1914 = vld [vmem:[%s1898 + $0x78] sm:$0xff]
        %s1915 = scalar_lea.vmem %s5, 1
        %v1916 = vld [vmem:[%s1915] sm:$0x1]
        %v1918 = vlaneseq
        %v1919 = vshrl.u32 %v1918, 7
        %v1920 = vsub.s32 0, %v1919
        %v1921 = vrot.slane %v1916, %v1920
        %1923 = vmatprep.subr.mxu0 0.0
        %1924 = vmatpush1.msra.mxu0 %v1899
        %1925 = vmatprep.subr.mxu0 0.0
        %1926 = vmatpush1.msra.mxu0 %v1900
        %1927 = vmatprep.subr.mxu0 0.0
        %1928 = vmatpush1.msra.mxu0 %v1901
        %1929 = vmatprep.subr.mxu0 0.0
        %1930 = vmatpush1.msra.mxu0 %v1902
        %1931 = vmatprep.subr.mxu0 0.0
        %1932 = vmatpush1.msra.mxu0 %v1903
        %1933 = vmatprep.subr.mxu0 0.0
        %1934 = vmatpush1.msra.mxu0 %v1904
        %1935 = vmatprep.subr.mxu0 0.0
        %1936 = vmatpush1.msra.mxu0 %v1905
        %1937 = vmatprep.subr.mxu0 0.0
        %1938 = vmatpush1.msra.mxu0 %v1906
        %1939 = vmatprep.subr.mxu0 0.0
        %1940 = vmatpush1.msra.mxu0 %v1907
        %1941 = vmatprep.subr.mxu0 0.0
        %1942 = vmatpush1.msra.mxu0 %v1908
        %1943 = vmatprep.subr.mxu0 0.0
        %1944 = vmatpush1.msra.mxu0 %v1909
        %1945 = vmatprep.subr.mxu0 0.0
        %1946 = vmatpush1.msra.mxu0 %v1910
        %1947 = vmatprep.subr.mxu0 0.0
        %1948 = vmatpush1.msra.mxu0 %v1911
        %1949 = vmatprep.subr.mxu0 0.0
        %1950 = vmatpush1.msra.mxu0 %v1912
        %1951 = vmatprep.subr.mxu0 0.0
        %1952 = vmatpush1.msra.mxu0 %v1913
        %1953 = vmatprep.subr.mxu0 0.0
        %1954 = vmatpush1.msra.mxu0 %v1914
        %1955 = vmatprep.subr.mxu0 0.0
        %1956 = vmatpush1.msra.mxu0 0.0
        %1957 = vmatprep.subr.mxu0 0.0
        %1958 = vmatpush1.msra.mxu0 0.0
        %1959 = vmatprep.subr.mxu0 0.0
        %1960 = vmatpush1.msra.mxu0 0.0
        %1961 = vmatprep.subr.mxu0 0.0
        %1962 = vmatpush1.msra.mxu0 0.0
        %1963 = vmatprep.subr.mxu0 0.0
        %1964 = vmatpush1.msra.mxu0 0.0
        %1965 = vmatprep.subr.mxu0 0.0
        %1966 = vmatpush1.msra.mxu0 0.0
        %1967 = vmatprep.subr.mxu0 0.0
        %1968 = vmatpush1.msra.mxu0 0.0
        %1969 = vmatprep.subr.mxu0 0.0
        %1970 = vmatpush1.msra.mxu0 0.0
        %1971 = vmatprep.subr.mxu0 0.0
        %1972 = vmatpush1.msra.mxu0 0.0
        %1973 = vmatprep.subr.mxu0 0.0
        %1974 = vmatpush1.msra.mxu0 0.0
        %1975 = vmatprep.subr.mxu0 0.0
        %1976 = vmatpush1.msra.mxu0 0.0
        %1977 = vmatprep.subr.mxu0 0.0
        %1978 = vmatpush1.msra.mxu0 0.0
        %1979 = vmatprep.subr.mxu0 0.0
        %1980 = vmatpush1.msra.mxu0 0.0
        %1981 = vmatprep.subr.mxu0 0.0
        %1982 = vmatpush1.msra.mxu0 0.0
        %1983 = vmatprep.subr.mxu0 0.0
        %1984 = vmatpush1.msra.mxu0 0.0
        %1985 = vmatprep.subr.mxu0 0.0
        %1986 = vmatpush1.msra.mxu0 0.0
        %1987 = vmatprep.mubr.f32.mxu0 0.0
        %1988 = vmatmul.mubr.f32.gmra.mrb[0].mxu0 %v606
        %v1989 = vpop.f32.mrb[0].mxu0
        %v1990 = vadd.f32 %v1921, %v1989
        %v1991 = vpop.f32.mrb[0].mxu0
        %1992 = vmatprep.mubr.f32.mxu0 0.0
        %1993 = vmatmul.mubr.f32.gmra.mrb[0].mxu0 %v607
        %v1994 = vpop.f32.mrb[0].mxu0
        %v1995 = vadd.f32 %v1921, %v1994
        %v1996 = vpop.f32.mrb[0].mxu0
        %1997 = vmatprep.mubr.f32.mxu0 0.0
        %1998 = vmatmul.mubr.f32.gmra.mrb[0].mxu0 %v608
        %v1999 = vpop.f32.mrb[0].mxu0
        %v2000 = vadd.f32 %v1921, %v1999
        %v2001 = vpop.f32.mrb[0].mxu0
        %2002 = vmatprep.mubr.f32.mxu0 0.0
        %2003 = vmatmul.mubr.f32.gmra.mrb[0].mxu0 %v609
        %v2004 = vpop.f32.mrb[0].mxu0
        %v2005 = vadd.f32 %v1921, %v2004
        %v2006 = vpop.f32.mrb[0].mxu0
        %2007 = vmatprep.mubr.f32.mxu0 0.0
        %2008 = vmatmul.mubr.f32.gmra.mrb[0].mxu0 %v610
        %v2009 = vpop.f32.mrb[0].mxu0
        %v2010 = vadd.f32 %v1921, %v2009
        %v2011 = vpop.f32.mrb[0].mxu0
        %2012 = vmatprep.mubr.f32.mxu0 0.0
        %2013 = vmatmul.mubr.f32.gmra.mrb[0].mxu0 %v611
        %v2014 = vpop.f32.mrb[0].mxu0
        %v2015 = vadd.f32 %v1921, %v2014
        %v2016 = vpop.f32.mrb[0].mxu0
        %2017 = vmatprep.mubr.f32.mxu0 0.0
        %2018 = vmatmul.mubr.f32.gmra.mrb[0].mxu0 %v612
        %v2019 = vpop.f32.mrb[0].mxu0
        %v2020 = vadd.f32 %v1921, %v2019
        %v2021 = vpop.f32.mrb[0].mxu0
        %2022 = vmatprep.mubr.f32.mxu0 0.0
        %2023 = vmatmul.mubr.f32.gmra.mrb[0].mxu0 %v613
        %v2024 = vpop.f32.mrb[0].mxu0
        %v2025 = vadd.f32 %v1921, %v2024
        %v2026 = vpop.f32.mrb[0].mxu0
        %2027 = vmatprep.mubr.f32.mxu0 0.0
        %2028 = vmatmul.mubr.f32.gmra.mrb[0].mxu0 %v614
        %v2029 = vpop.f32.mrb[0].mxu0
        %v2030 = vadd.f32 %v1921, %v2029
        %v2031 = vpop.f32.mrb[0].mxu0
        %2032 = vmatprep.mubr.f32.mxu0 0.0
        %2033 = vmatmul.mubr.f32.gmra.mrb[0].mxu0 %v615
        %v2034 = vpop.f32.mrb[0].mxu0
        %v2035 = vadd.f32 %v1921, %v2034
        %v2036 = vpop.f32.mrb[0].mxu0
        %2037 = vmatprep.mubr.f32.mxu0 0.0
        %2038 = vmatmul.mubr.f32.gmra.mrb[0].mxu0 %v616
        %v2039 = vpop.f32.mrb[0].mxu0
        %v2040 = vadd.f32 %v1921, %v2039
        %v2041 = vpop.f32.mrb[0].mxu0
        %2042 = vmatprep.mubr.f32.mxu0 0.0
        %2043 = vmatmul.mubr.f32.gmra.mrb[0].mxu0 %v617
        %v2044 = vpop.f32.mrb[0].mxu0
        %v2045 = vadd.f32 %v1921, %v2044
        %v2046 = vpop.f32.mrb[0].mxu0
        %2047 = vmatprep.mubr.f32.mxu0 0.0
        %2048 = vmatmul.mubr.f32.gmra.mrb[0].mxu0 %v618
        %v2049 = vpop.f32.mrb[0].mxu0
        %v2050 = vadd.f32 %v1921, %v2049
        %v2051 = vpop.f32.mrb[0].mxu0
        %2052 = vmatprep.mubr.f32.mxu0 0.0
        %2053 = vmatmul.mubr.f32.gmra.mrb[0].mxu0 %v619
        %v2054 = vpop.f32.mrb[0].mxu0
        %v2055 = vadd.f32 %v1921, %v2054
        %v2056 = vpop.f32.mrb[0].mxu0
        %2057 = vmatprep.mubr.f32.mxu0 0.0
        %2058 = vmatmul.mubr.f32.gmra.mrb[0].mxu0 %v620
        %v2059 = vpop.f32.mrb[0].mxu0
        %v2060 = vadd.f32 %v1921, %v2059
        %v2061 = vpop.f32.mrb[0].mxu0
        %2062 = vmatprep.mubr.f32.mxu0 0.0
        %2063 = vmatmul.mubr.f32.gmra.mrb[0].mxu0 %v621
        %v2064 = vpop.f32.mrb[0].mxu0
        %v2065 = vadd.f32 %v1921, %v2064
        %v2066 = vpop.f32.mrb[0].mxu0
        %2067 = vdwg.mxu0
        %s2068 = scalar_lea.vmem %s6, 128
        %v2069 = vld [vmem:[%s2068] sm:$0xff]
        %v2070 = vld [vmem:[%s2068 + $0x8] sm:$0xff]
        %v2071 = vld [vmem:[%s2068 + $0x10] sm:$0xff]
        %v2072 = vld [vmem:[%s2068 + $0x18] sm:$0xff]
        %v2073 = vld [vmem:[%s2068 + $0x20] sm:$0xff]
        %v2074 = vld [vmem:[%s2068 + $0x28] sm:$0xff]
        %v2075 = vld [vmem:[%s2068 + $0x30] sm:$0xff]
        %v2076 = vld [vmem:[%s2068 + $0x38] sm:$0xff]
        %v2077 = vld [vmem:[%s2068 + $0x40] sm:$0xff]
        %v2078 = vld [vmem:[%s2068 + $0x48] sm:$0xff]
        %v2079 = vld [vmem:[%s2068 + $0x50] sm:$0xff]
        %v2080 = vld [vmem:[%s2068 + $0x58] sm:$0xff]
        %v2081 = vld [vmem:[%s2068 + $0x60] sm:$0xff]
        %v2082 = vld [vmem:[%s2068 + $0x68] sm:$0xff]
        %v2083 = vld [vmem:[%s2068 + $0x70] sm:$0xff]
        %v2084 = vld [vmem:[%s2068 + $0x78] sm:$0xff]
        %s2085 = scalar_lea.vmem %s7, 1
        %v2086 = vld [vmem:[%s2085] sm:$0x1]
        %v2088 = vlaneseq
        %v2089 = vshrl.u32 %v2088, 7
        %v2090 = vsub.s32 0, %v2089
        %v2091 = vrot.slane %v2086, %v2090
        %2093 = vmatprep.subr.mxu0 0.0
        %2094 = vmatpush1.msra.mxu0 %v2069
        %2095 = vmatprep.subr.mxu0 0.0
        %2096 = vmatpush1.msra.mxu0 %v2070
        %2097 = vmatprep.subr.mxu0 0.0
        %2098 = vmatpush1.msra.mxu0 %v2071
        %2099 = vmatprep.subr.mxu0 0.0
        %2100 = vmatpush1.msra.mxu0 %v2072
        %2101 = vmatprep.subr.mxu0 0.0
        %2102 = vmatpush1.msra.mxu0 %v2073
        %2103 = vmatprep.subr.mxu0 0.0
        %2104 = vmatpush1.msra.mxu0 %v2074
        %2105 = vmatprep.subr.mxu0 0.0
        %2106 = vmatpush1.msra.mxu0 %v2075
        %2107 = vmatprep.subr.mxu0 0.0
        %2108 = vmatpush1.msra.mxu0 %v2076
        %2109 = vmatprep.subr.mxu0 0.0
        %2110 = vmatpush1.msra.mxu0 %v2077
        %2111 = vmatprep.subr.mxu0 0.0
        %2112 = vmatpush1.msra.mxu0 %v2078
        %2113 = vmatprep.subr.mxu0 0.0
        %2114 = vmatpush1.msra.mxu0 %v2079
        %2115 = vmatprep.subr.mxu0 0.0
        %2116 = vmatpush1.msra.mxu0 %v2080
        %2117 = vmatprep.subr.mxu0 0.0
        %2118 = vmatpush1.msra.mxu0 %v2081
        %2119 = vmatprep.subr.mxu0 0.0
        %2120 = vmatpush1.msra.mxu0 %v2082
        %2121 = vmatprep.subr.mxu0 0.0
        %2122 = vmatpush1.msra.mxu0 %v2083
        %2123 = vmatprep.subr.mxu0 0.0
        %2124 = vmatpush1.msra.mxu0 %v2084
        %2125 = vmatprep.subr.mxu0 0.0
        %2126 = vmatpush1.msra.mxu0 0.0
        %2127 = vmatprep.subr.mxu0 0.0
        %2128 = vmatpush1.msra.mxu0 0.0
        %2129 = vmatprep.subr.mxu0 0.0
        %2130 = vmatpush1.msra.mxu0 0.0
        %2131 = vmatprep.subr.mxu0 0.0
        %2132 = vmatpush1.msra.mxu0 0.0
        %2133 = vmatprep.subr.mxu0 0.0
        %2134 = vmatpush1.msra.mxu0 0.0
        %2135 = vmatprep.subr.mxu0 0.0
        %2136 = vmatpush1.msra.mxu0 0.0
        %2137 = vmatprep.subr.mxu0 0.0
        %2138 = vmatpush1.msra.mxu0 0.0
        %2139 = vmatprep.subr.mxu0 0.0
        %2140 = vmatpush1.msra.mxu0 0.0
        %2141 = vmatprep.subr.mxu0 0.0
        %2142 = vmatpush1.msra.mxu0 0.0
        %2143 = vmatprep.subr.mxu0 0.0
        %2144 = vmatpush1.msra.mxu0 0.0
        %2145 = vmatprep.subr.mxu0 0.0
        %2146 = vmatpush1.msra.mxu0 0.0
        %2147 = vmatprep.subr.mxu0 0.0
        %2148 = vmatpush1.msra.mxu0 0.0
        %2149 = vmatprep.subr.mxu0 0.0
        %2150 = vmatpush1.msra.mxu0 0.0
        %2151 = vmatprep.subr.mxu0 0.0
        %2152 = vmatpush1.msra.mxu0 0.0
        %2153 = vmatprep.subr.mxu0 0.0
        %2154 = vmatpush1.msra.mxu0 0.0
        %2155 = vmatprep.subr.mxu0 0.0
        %2156 = vmatpush1.msra.mxu0 0.0
        %2157 = vmatprep.mubr.f32.mxu0 0.0
        %2158 = vmatmul.mubr.f32.gmra.mrb[0].mxu0 %v606
        %v2159 = vpop.f32.mrb[0].mxu0
        %v2160 = vadd.f32 %v2091, %v2159
        %v2161 = vpop.f32.mrb[0].mxu0
        %2162 = vmatprep.mubr.f32.mxu0 0.0
        %2163 = vmatmul.mubr.f32.gmra.mrb[0].mxu0 %v607
        %v2164 = vpop.f32.mrb[0].mxu0
        %v2165 = vadd.f32 %v2091, %v2164
        %v2166 = vpop.f32.mrb[0].mxu0
        %2167 = vmatprep.mubr.f32.mxu0 0.0
        %2168 = vmatmul.mubr.f32.gmra.mrb[0].mxu0 %v608
        %v2169 = vpop.f32.mrb[0].mxu0
        %v2170 = vadd.f32 %v2091, %v2169
        %v2171 = vpop.f32.mrb[0].mxu0
        %2172 = vmatprep.mubr.f32.mxu0 0.0
        %2173 = vmatmul.mubr.f32.gmra.mrb[0].mxu0 %v609
        %v2174 = vpop.f32.mrb[0].mxu0
        %v2175 = vadd.f32 %v2091, %v2174
        %v2176 = vpop.f32.mrb[0].mxu0
        %2177 = vmatprep.mubr.f32.mxu0 0.0
        %2178 = vmatmul.mubr.f32.gmra.mrb[0].mxu0 %v610
        %v2179 = vpop.f32.mrb[0].mxu0
        %v2180 = vadd.f32 %v2091, %v2179
        %v2181 = vpop.f32.mrb[0].mxu0
        %2182 = vmatprep.mubr.f32.mxu0 0.0
        %2183 = vmatmul.mubr.f32.gmra.mrb[0].mxu0 %v611
        %v2184 = vpop.f32.mrb[0].mxu0
        %v2185 = vadd.f32 %v2091, %v2184
        %v2186 = vpop.f32.mrb[0].mxu0
        %2187 = vmatprep.mubr.f32.mxu0 0.0
        %2188 = vmatmul.mubr.f32.gmra.mrb[0].mxu0 %v612
        %v2189 = vpop.f32.mrb[0].mxu0
        %v2190 = vadd.f32 %v2091, %v2189
        %v2191 = vpop.f32.mrb[0].mxu0
        %2192 = vmatprep.mubr.f32.mxu0 0.0
        %2193 = vmatmul.mubr.f32.gmra.mrb[0].mxu0 %v613
        %v2194 = vpop.f32.mrb[0].mxu0
        %v2195 = vadd.f32 %v2091, %v2194
        %v2196 = vpop.f32.mrb[0].mxu0
        %2197 = vmatprep.mubr.f32.mxu0 0.0
        %2198 = vmatmul.mubr.f32.gmra.mrb[0].mxu0 %v614
        %v2199 = vpop.f32.mrb[0].mxu0
        %v2200 = vadd.f32 %v2091, %v2199
        %v2201 = vpop.f32.mrb[0].mxu0
        %2202 = vmatprep.mubr.f32.mxu0 0.0
        %2203 = vmatmul.mubr.f32.gmra.mrb[0].mxu0 %v615
        %v2204 = vpop.f32.mrb[0].mxu0
        %v2205 = vadd.f32 %v2091, %v2204
        %v2206 = vpop.f32.mrb[0].mxu0
        %2207 = vmatprep.mubr.f32.mxu0 0.0
        %2208 = vmatmul.mubr.f32.gmra.mrb[0].mxu0 %v616
        %v2209 = vpop.f32.mrb[0].mxu0
        %v2210 = vadd.f32 %v2091, %v2209
        %v2211 = vpop.f32.mrb[0].mxu0
        %2212 = vmatprep.mubr.f32.mxu0 0.0
        %2213 = vmatmul.mubr.f32.gmra.mrb[0].mxu0 %v617
        %v2214 = vpop.f32.mrb[0].mxu0
        %v2215 = vadd.f32 %v2091, %v2214
        %v2216 = vpop.f32.mrb[0].mxu0
        %2217 = vmatprep.mubr.f32.mxu0 0.0
        %2218 = vmatmul.mubr.f32.gmra.mrb[0].mxu0 %v618
        %v2219 = vpop.f32.mrb[0].mxu0
        %v2220 = vadd.f32 %v2091, %v2219
        %v2221 = vpop.f32.mrb[0].mxu0
        %2222 = vmatprep.mubr.f32.mxu0 0.0
        %2223 = vmatmul.mubr.f32.gmra.mrb[0].mxu0 %v619
        %v2224 = vpop.f32.mrb[0].mxu0
        %v2225 = vadd.f32 %v2091, %v2224
        %v2226 = vpop.f32.mrb[0].mxu0
        %2227 = vmatprep.mubr.f32.mxu0 0.0
        %2228 = vmatmul.mubr.f32.gmra.mrb[0].mxu0 %v620
        %v2229 = vpop.f32.mrb[0].mxu0
        %v2230 = vadd.f32 %v2091, %v2229
        %v2231 = vpop.f32.mrb[0].mxu0
        %2232 = vmatprep.mubr.f32.mxu0 0.0
        %2233 = vmatmul.mubr.f32.gmra.mrb[0].mxu0 %v621
        %v2234 = vpop.f32.mrb[0].mxu0
        %v2235 = vadd.f32 %v2091, %v2234
        %v2236 = vpop.f32.mrb[0].mxu0
        %2237 = vdwg.mxu0
        %v2239 = vsel %vm1161, %v1820, 0
        %v2242 = vsel %vm1161, %v1825, 0
        %v2245 = vsel %vm1161, %v1830, 0
        %v2248 = vsel %vm1161, %v1835, 0
        %v2251 = vsel %vm1161, %v1840, 0
        %v2254 = vsel %vm1161, %v1845, 0
        %v2257 = vsel %vm1161, %v1850, 0
        %v2260 = vsel %vm1161, %v1855, 0
        %v2263 = vsel %vm1161, %v1860, 0
        %v2266 = vsel %vm1161, %v1865, 0
        %v2269 = vsel %vm1161, %v1870, 0
        %v2272 = vsel %vm1161, %v1875, 0
        %v2275 = vsel %vm1161, %v1880, 0
        %v2278 = vsel %vm1161, %v1885, 0
        %v2281 = vsel %vm1161, %v1890, 0
        %v2284 = vsel %vm1161, %v1895, 0
        %v2287 = vsel %vm1161, %v1990, 0
        %v2290 = vsel %vm1161, %v1995, 0
        %v2293 = vsel %vm1161, %v2000, 0
        %v2296 = vsel %vm1161, %v2005, 0
        %v2299 = vsel %vm1161, %v2010, 0
        %v2302 = vsel %vm1161, %v2015, 0
        %v2305 = vsel %vm1161, %v2020, 0
        %v2308 = vsel %vm1161, %v2025, 0
        %v2311 = vsel %vm1161, %v2030, 0
        %v2314 = vsel %vm1161, %v2035, 0
        %v2317 = vsel %vm1161, %v2040, 0
        %v2320 = vsel %vm1161, %v2045, 0
        %v2323 = vsel %vm1161, %v2050, 0
        %v2326 = vsel %vm1161, %v2055, 0
        %v2329 = vsel %vm1161, %v2060, 0
        %v2332 = vsel %vm1161, %v2065, 0
        %2334 = vmatprep.subr.mxu0 0.0
        %2335 = vmatpush1.xpose.msra.mxu0 %v2287
        %2336 = vmatprep.subr.mxu0 0.0
        %2337 = vmatpush1.xpose.msra.mxu0 %v2290
        %2338 = vmatprep.subr.mxu0 0.0
        %2339 = vmatpush1.xpose.msra.mxu0 %v2293
        %2340 = vmatprep.subr.mxu0 0.0
        %2341 = vmatpush1.xpose.msra.mxu0 %v2296
        %2342 = vmatprep.subr.mxu0 0.0
        %2343 = vmatpush1.xpose.msra.mxu0 %v2299
        %2344 = vmatprep.subr.mxu0 0.0
        %2345 = vmatpush1.xpose.msra.mxu0 %v2302
        %2346 = vmatprep.subr.mxu0 0.0
        %2347 = vmatpush1.xpose.msra.mxu0 %v2305
        %2348 = vmatprep.subr.mxu0 0.0
        %2349 = vmatpush1.xpose.msra.mxu0 %v2308
        %2350 = vmatprep.subr.mxu0 0.0
        %2351 = vmatpush1.xpose.msra.mxu0 %v2311
        %2352 = vmatprep.subr.mxu0 0.0
        %2353 = vmatpush1.xpose.msra.mxu0 %v2314
        %2354 = vmatprep.subr.mxu0 0.0
        %2355 = vmatpush1.xpose.msra.mxu0 %v2317
        %2356 = vmatprep.subr.mxu0 0.0
        %2357 = vmatpush1.xpose.msra.mxu0 %v2320
        %2358 = vmatprep.subr.mxu0 0.0
        %2359 = vmatpush1.xpose.msra.mxu0 %v2323
        %2360 = vmatprep.subr.mxu0 0.0
        %2361 = vmatpush1.xpose.msra.mxu0 %v2326
        %2362 = vmatprep.subr.mxu0 0.0
        %2363 = vmatpush1.xpose.msra.mxu0 %v2329
        %2364 = vmatprep.subr.mxu0 0.0
        %2365 = vmatpush1.xpose.msra.mxu0 %v2332
        %2366 = vmatprep.subr.mxu0 0.0
        %2367 = vmatpush1.xpose.msra.mxu0 0.0
        %2368 = vmatprep.subr.mxu0 0.0
        %2369 = vmatpush1.xpose.msra.mxu0 0.0
        %2370 = vmatprep.subr.mxu0 0.0
        %2371 = vmatpush1.xpose.msra.mxu0 0.0
        %2372 = vmatprep.subr.mxu0 0.0
        %2373 = vmatpush1.xpose.msra.mxu0 0.0
        %2374 = vmatprep.subr.mxu0 0.0
        %2375 = vmatpush1.xpose.msra.mxu0 0.0
        %2376 = vmatprep.subr.mxu0 0.0
        %2377 = vmatpush1.xpose.msra.mxu0 0.0
        %2378 = vmatprep.subr.mxu0 0.0
        %2379 = vmatpush1.xpose.msra.mxu0 0.0
        %2380 = vmatprep.subr.mxu0 0.0
        %2381 = vmatpush1.xpose.msra.mxu0 0.0
        %2382 = vmatprep.subr.mxu0 0.0
        %2383 = vmatpush1.xpose.msra.mxu0 0.0
        %2384 = vmatprep.subr.mxu0 0.0
        %2385 = vmatpush1.xpose.msra.mxu0 0.0
        %2386 = vmatprep.subr.mxu0 0.0
        %2387 = vmatpush1.xpose.msra.mxu0 0.0
        %2388 = vmatprep.subr.mxu0 0.0
        %2389 = vmatpush1.xpose.msra.mxu0 0.0
        %2390 = vmatprep.subr.mxu0 0.0
        %2391 = vmatpush1.xpose.msra.mxu0 0.0
        %2392 = vmatprep.subr.mxu0 0.0
        %2393 = vmatpush1.xpose.msra.mxu0 0.0
        %2394 = vmatprep.subr.mxu0 0.0
        %2395 = vmatpush1.xpose.msra.mxu0 0.0
        %2396 = vmatprep.subr.mxu0 0.0
        %2397 = vmatpush1.xpose.msra.mxu0 0.0
        %2398 = vmatprep.mubr.f32.mxu0 0.0
        %2399 = vmatmul.mubr.f32.gmra.mrb[0].mxu0 %v2239
        %v2400 = vpop.f32.mrb[0].mxu0
        %v2401 = vadd.f32 0.0, %v2400
        %v2402 = vpop.f32.mrb[0].mxu0
        %2403 = vmatprep.mubr.f32.mxu0 0.0
        %2404 = vmatmul.mubr.f32.gmra.mrb[0].mxu0 %v2242
        %v2405 = vpop.f32.mrb[0].mxu0
        %v2406 = vadd.f32 0.0, %v2405
        %v2407 = vpop.f32.mrb[0].mxu0
        %2408 = vmatprep.mubr.f32.mxu0 0.0
        %2409 = vmatmul.mubr.f32.gmra.mrb[0].mxu0 %v2245
        %v2410 = vpop.f32.mrb[0].mxu0
        %v2411 = vadd.f32 0.0, %v2410
        %v2412 = vpop.f32.mrb[0].mxu0
        %2413 = vmatprep.mubr.f32.mxu0 0.0
        %2414 = vmatmul.mubr.f32.gmra.mrb[0].mxu0 %v2248
        %v2415 = vpop.f32.mrb[0].mxu0
        %v2416 = vadd.f32 0.0, %v2415
        %v2417 = vpop.f32.mrb[0].mxu0
        %2418 = vmatprep.mubr.f32.mxu0 0.0
        %2419 = vmatmul.mubr.f32.gmra.mrb[0].mxu0 %v2251
        %v2420 = vpop.f32.mrb[0].mxu0
        %v2421 = vadd.f32 0.0, %v2420
        %v2422 = vpop.f32.mrb[0].mxu0
        %2423 = vmatprep.mubr.f32.mxu0 0.0
        %2424 = vmatmul.mubr.f32.gmra.mrb[0].mxu0 %v2254
        %v2425 = vpop.f32.mrb[0].mxu0
        %v2426 = vadd.f32 0.0, %v2425
        %v2427 = vpop.f32.mrb[0].mxu0
        %2428 = vmatprep.mubr.f32.mxu0 0.0
        %2429 = vmatmul.mubr.f32.gmra.mrb[0].mxu0 %v2257
        %v2430 = vpop.f32.mrb[0].mxu0
        %v2431 = vadd.f32 0.0, %v2430
        %v2432 = vpop.f32.mrb[0].mxu0
        %2433 = vmatprep.mubr.f32.mxu0 0.0
        %2434 = vmatmul.mubr.f32.gmra.mrb[0].mxu0 %v2260
        %v2435 = vpop.f32.mrb[0].mxu0
        %v2436 = vadd.f32 0.0, %v2435
        %v2437 = vpop.f32.mrb[0].mxu0
        %2438 = vmatprep.mubr.f32.mxu0 0.0
        %2439 = vmatmul.mubr.f32.gmra.mrb[0].mxu0 %v2263
        %v2440 = vpop.f32.mrb[0].mxu0
        %v2441 = vadd.f32 0.0, %v2440
        %v2442 = vpop.f32.mrb[0].mxu0
        %2443 = vmatprep.mubr.f32.mxu0 0.0
        %2444 = vmatmul.mubr.f32.gmra.mrb[0].mxu0 %v2266
        %v2445 = vpop.f32.mrb[0].mxu0
        %v2446 = vadd.f32 0.0, %v2445
        %v2447 = vpop.f32.mrb[0].mxu0
        %2448 = vmatprep.mubr.f32.mxu0 0.0
        %2449 = vmatmul.mubr.f32.gmra.mrb[0].mxu0 %v2269
        %v2450 = vpop.f32.mrb[0].mxu0
        %v2451 = vadd.f32 0.0, %v2450
        %v2452 = vpop.f32.mrb[0].mxu0
        %2453 = vmatprep.mubr.f32.mxu0 0.0
        %2454 = vmatmul.mubr.f32.gmra.mrb[0].mxu0 %v2272
        %v2455 = vpop.f32.mrb[0].mxu0
        %v2456 = vadd.f32 0.0, %v2455
        %v2457 = vpop.f32.mrb[0].mxu0
        %2458 = vmatprep.mubr.f32.mxu0 0.0
        %2459 = vmatmul.mubr.f32.gmra.mrb[0].mxu0 %v2275
        %v2460 = vpop.f32.mrb[0].mxu0
        %v2461 = vadd.f32 0.0, %v2460
        %v2462 = vpop.f32.mrb[0].mxu0
        %2463 = vmatprep.mubr.f32.mxu0 0.0
        %2464 = vmatmul.mubr.f32.gmra.mrb[0].mxu0 %v2278
        %v2465 = vpop.f32.mrb[0].mxu0
        %v2466 = vadd.f32 0.0, %v2465
        %v2467 = vpop.f32.mrb[0].mxu0
        %2468 = vmatprep.mubr.f32.mxu0 0.0
        %2469 = vmatmul.mubr.f32.gmra.mrb[0].mxu0 %v2281
        %v2470 = vpop.f32.mrb[0].mxu0
        %v2471 = vadd.f32 0.0, %v2470
        %v2472 = vpop.f32.mrb[0].mxu0
        %2473 = vmatprep.mubr.f32.mxu0 0.0
        %2474 = vmatmul.mubr.f32.gmra.mrb[0].mxu0 %v2284
        %v2475 = vpop.f32.mrb[0].mxu0
        %v2476 = vadd.f32 0.0, %v2475
        %v2477 = vpop.f32.mrb[0].mxu0
        %2478 = vdwg.mxu0
        %v2479 = vmul.f32 %v2401, 0.17677669
        %v2480 = vmul.f32 %v2406, 0.17677669
        %v2481 = vmul.f32 %v2411, 0.17677669
        %v2482 = vmul.f32 %v2416, 0.17677669
        %v2483 = vmul.f32 %v2421, 0.17677669
        %v2484 = vmul.f32 %v2426, 0.17677669
        %v2485 = vmul.f32 %v2431, 0.17677669
        %v2486 = vmul.f32 %v2436, 0.17677669
        %v2487 = vmul.f32 %v2441, 0.17677669
        %v2488 = vmul.f32 %v2446, 0.17677669
        %v2489 = vmul.f32 %v2451, 0.17677669
        %v2490 = vmul.f32 %v2456, 0.17677669
        %v2491 = vmul.f32 %v2461, 0.17677669
        %v2492 = vmul.f32 %v2466, 0.17677669
        %v2493 = vmul.f32 %v2471, 0.17677669
        %v2494 = vmul.f32 %v2476, 0.17677669
        %v2495 = vsel %vm641, %v2479, -1e+30
        %v2496 = vsel %vm642, %v2480, -1e+30
        %v2497 = vsel %vm643, %v2481, -1e+30
        %v2498 = vsel %vm644, %v2482, -1e+30
        %v2499 = vsel %vm645, %v2483, -1e+30
        %v2500 = vsel %vm646, %v2484, -1e+30
        %v2501 = vsel %vm647, %v2485, -1e+30
        %v2502 = vsel %vm648, %v2486, -1e+30
        %v2503 = vsel %vm649, %v2487, -1e+30
        %v2504 = vsel %vm650, %v2488, -1e+30
        %v2505 = vsel %vm651, %v2489, -1e+30
        %v2506 = vsel %vm652, %v2490, -1e+30
        %v2507 = vsel %vm653, %v2491, -1e+30
        %v2508 = vsel %vm654, %v2492, -1e+30
        %v2509 = vsel %vm655, %v2493, -1e+30
        %v2510 = vsel %vm656, %v2494, -1e+30
        %2511 = vmax.xlane.f32.xlu0 %v2495
        %v2512 = vpop.xlane.xlu0 %2511
        %2513 = vmax.xlane.f32.xlu0 %v2496
        %v2514 = vpop.xlane.xlu0 %2513
        %2515 = vmax.xlane.f32.xlu0 %v2497
        %v2516 = vpop.xlane.xlu0 %2515
        %2517 = vmax.xlane.f32.xlu0 %v2498
        %v2518 = vpop.xlane.xlu0 %2517
        %2519 = vmax.xlane.f32.xlu0 %v2499
        %v2520 = vpop.xlane.xlu0 %2519
        %2521 = vmax.xlane.f32.xlu0 %v2500
        %v2522 = vpop.xlane.xlu0 %2521
        %2523 = vmax.xlane.f32.xlu0 %v2501
        %v2524 = vpop.xlane.xlu0 %2523
        %2525 = vmax.xlane.f32.xlu0 %v2502
        %v2526 = vpop.xlane.xlu0 %2525
        %2527 = vmax.xlane.f32.xlu0 %v2503
        %v2528 = vpop.xlane.xlu0 %2527
        %2529 = vmax.xlane.f32.xlu0 %v2504
        %v2530 = vpop.xlane.xlu0 %2529
        %2531 = vmax.xlane.f32.xlu0 %v2505
        %v2532 = vpop.xlane.xlu0 %2531
        %2533 = vmax.xlane.f32.xlu0 %v2506
        %v2534 = vpop.xlane.xlu0 %2533
        %2535 = vmax.xlane.f32.xlu0 %v2507
        %v2536 = vpop.xlane.xlu0 %2535
        %2537 = vmax.xlane.f32.xlu0 %v2508
        %v2538 = vpop.xlane.xlu0 %2537
        %2539 = vmax.xlane.f32.xlu0 %v2509
        %v2540 = vpop.xlane.xlu0 %2539
        %2541 = vmax.xlane.f32.xlu0 %v2510
        %v2542 = vpop.xlane.xlu0 %2541
        %v2543 = vsub.f32 %v2495, %v2512
        %v2544 = vsub.f32 %v2496, %v2514
        %v2545 = vsub.f32 %v2497, %v2516
        %v2546 = vsub.f32 %v2498, %v2518
        %v2547 = vsub.f32 %v2499, %v2520
        %v2548 = vsub.f32 %v2500, %v2522
        %v2549 = vsub.f32 %v2501, %v2524
        %v2550 = vsub.f32 %v2502, %v2526
        %v2551 = vsub.f32 %v2503, %v2528
        %v2552 = vsub.f32 %v2504, %v2530
        %v2553 = vsub.f32 %v2505, %v2532
        %v2554 = vsub.f32 %v2506, %v2534
        %v2555 = vsub.f32 %v2507, %v2536
        %v2556 = vsub.f32 %v2508, %v2538
        %v2557 = vsub.f32 %v2509, %v2540
        %v2558 = vsub.f32 %v2510, %v2542
        %v2559 = vmul.f32 %v2543, 1.442695
        %v2560 = vpow.pop %v2559
        %v2561 = vmul.f32 %v2544, 1.442695
        %v2562 = vpow.pop %v2561
        %v2563 = vmul.f32 %v2545, 1.442695
        %v2564 = vpow.pop %v2563
        %v2565 = vmul.f32 %v2546, 1.442695
        %v2566 = vpow.pop %v2565
        %v2567 = vmul.f32 %v2547, 1.442695
        %v2568 = vpow.pop %v2567
        %v2569 = vmul.f32 %v2548, 1.442695
        %v2570 = vpow.pop %v2569
        %v2571 = vmul.f32 %v2549, 1.442695
        %v2572 = vpow.pop %v2571
        %v2573 = vmul.f32 %v2550, 1.442695
        %v2574 = vpow.pop %v2573
        %v2575 = vmul.f32 %v2551, 1.442695
        %v2576 = vpow.pop %v2575
        %v2577 = vmul.f32 %v2552, 1.442695
        %v2578 = vpow.pop %v2577
        %v2579 = vmul.f32 %v2553, 1.442695
        %v2580 = vpow.pop %v2579
        %v2581 = vmul.f32 %v2554, 1.442695
        %v2582 = vpow.pop %v2581
        %v2583 = vmul.f32 %v2555, 1.442695
        %v2584 = vpow.pop %v2583
        %v2585 = vmul.f32 %v2556, 1.442695
        %v2586 = vpow.pop %v2585
        %v2587 = vmul.f32 %v2557, 1.442695
        %v2588 = vpow.pop %v2587
        %v2589 = vmul.f32 %v2558, 1.442695
        %v2590 = vpow.pop %v2589
        %2591 = vadd.xlane.f32.xlu0 %v2560
        %v2592 = vpop.xlane.xlu0 %2591
        %2593 = vadd.xlane.f32.xlu0 %v2562
        %v2594 = vpop.xlane.xlu0 %2593
        %2595 = vadd.xlane.f32.xlu0 %v2564
        %v2596 = vpop.xlane.xlu0 %2595
        %2597 = vadd.xlane.f32.xlu0 %v2566
        %v2598 = vpop.xlane.xlu0 %2597
        %2599 = vadd.xlane.f32.xlu0 %v2568
        %v2600 = vpop.xlane.xlu0 %2599
        %2601 = vadd.xlane.f32.xlu0 %v2570
        %v2602 = vpop.xlane.xlu0 %2601
        %2603 = vadd.xlane.f32.xlu0 %v2572
        %v2604 = vpop.xlane.xlu0 %2603
        %2605 = vadd.xlane.f32.xlu0 %v2574
        %v2606 = vpop.xlane.xlu0 %2605
        %2607 = vadd.xlane.f32.xlu0 %v2576
        %v2608 = vpop.xlane.xlu0 %2607
        %2609 = vadd.xlane.f32.xlu0 %v2578
        %v2610 = vpop.xlane.xlu0 %2609
        %2611 = vadd.xlane.f32.xlu0 %v2580
        %v2612 = vpop.xlane.xlu0 %2611
        %2613 = vadd.xlane.f32.xlu0 %v2582
        %v2614 = vpop.xlane.xlu0 %2613
        %2615 = vadd.xlane.f32.xlu0 %v2584
        %v2616 = vpop.xlane.xlu0 %2615
        %2617 = vadd.xlane.f32.xlu0 %v2586
        %v2618 = vpop.xlane.xlu0 %2617
        %2619 = vadd.xlane.f32.xlu0 %v2588
        %v2620 = vpop.xlane.xlu0 %2619
        %2621 = vadd.xlane.f32.xlu0 %v2590
        %v2622 = vpop.xlane.xlu0 %2621
        %v2623 = vrcp.pop %v2592
        %v2624 = vmul.f32 %v2560, %v2623
        %v2625 = vrcp.pop %v2594
        %v2626 = vmul.f32 %v2562, %v2625
        %v2627 = vrcp.pop %v2596
        %v2628 = vmul.f32 %v2564, %v2627
        %v2629 = vrcp.pop %v2598
        %v2630 = vmul.f32 %v2566, %v2629
        %v2631 = vrcp.pop %v2600
        %v2632 = vmul.f32 %v2568, %v2631
        %v2633 = vrcp.pop %v2602
        %v2634 = vmul.f32 %v2570, %v2633
        %v2635 = vrcp.pop %v2604
        %v2636 = vmul.f32 %v2572, %v2635
        %v2637 = vrcp.pop %v2606
        %v2638 = vmul.f32 %v2574, %v2637
        %v2639 = vrcp.pop %v2608
        %v2640 = vmul.f32 %v2576, %v2639
        %v2641 = vrcp.pop %v2610
        %v2642 = vmul.f32 %v2578, %v2641
        %v2643 = vrcp.pop %v2612
        %v2644 = vmul.f32 %v2580, %v2643
        %v2645 = vrcp.pop %v2614
        %v2646 = vmul.f32 %v2582, %v2645
        %v2647 = vrcp.pop %v2616
        %v2648 = vmul.f32 %v2584, %v2647
        %v2649 = vrcp.pop %v2618
        %v2650 = vmul.f32 %v2586, %v2649
        %v2651 = vrcp.pop %v2620
        %v2652 = vmul.f32 %v2588, %v2651
        %v2653 = vrcp.pop %v2622
        %v2654 = vmul.f32 %v2590, %v2653
        %2655 = vmatprep.subr.mxu0 0.0
        %2656 = vmatpush1.msra.mxu0 %v2160
        %2657 = vmatprep.subr.mxu0 0.0
        %2658 = vmatpush1.msra.mxu0 %v2165
        %2659 = vmatprep.subr.mxu0 0.0
        %2660 = vmatpush1.msra.mxu0 %v2170
        %2661 = vmatprep.subr.mxu0 0.0
        %2662 = vmatpush1.msra.mxu0 %v2175
        %2663 = vmatprep.subr.mxu0 0.0
        %2664 = vmatpush1.msra.mxu0 %v2180
        %2665 = vmatprep.subr.mxu0 0.0
        %2666 = vmatpush1.msra.mxu0 %v2185
        %2667 = vmatprep.subr.mxu0 0.0
        %2668 = vmatpush1.msra.mxu0 %v2190
        %2669 = vmatprep.subr.mxu0 0.0
        %2670 = vmatpush1.msra.mxu0 %v2195
        %2671 = vmatprep.subr.mxu0 0.0
        %2672 = vmatpush1.msra.mxu0 %v2200
        %2673 = vmatprep.subr.mxu0 0.0
        %2674 = vmatpush1.msra.mxu0 %v2205
        %2675 = vmatprep.subr.mxu0 0.0
        %2676 = vmatpush1.msra.mxu0 %v2210
        %2677 = vmatprep.subr.mxu0 0.0
        %2678 = vmatpush1.msra.mxu0 %v2215
        %2679 = vmatprep.subr.mxu0 0.0
        %2680 = vmatpush1.msra.mxu0 %v2220
        %2681 = vmatprep.subr.mxu0 0.0
        %2682 = vmatpush1.msra.mxu0 %v2225
        %2683 = vmatprep.subr.mxu0 0.0
        %2684 = vmatpush1.msra.mxu0 %v2230
        %2685 = vmatprep.subr.mxu0 0.0
        %2686 = vmatpush1.msra.mxu0 %v2235
        %2687 = vmatprep.subr.mxu0 0.0
        %2688 = vmatpush1.msra.mxu0 0.0
        %2689 = vmatprep.subr.mxu0 0.0
        %2690 = vmatpush1.msra.mxu0 0.0
        %2691 = vmatprep.subr.mxu0 0.0
        %2692 = vmatpush1.msra.mxu0 0.0
        %2693 = vmatprep.subr.mxu0 0.0
        %2694 = vmatpush1.msra.mxu0 0.0
        %2695 = vmatprep.subr.mxu0 0.0
        %2696 = vmatpush1.msra.mxu0 0.0
        %2697 = vmatprep.subr.mxu0 0.0
        %2698 = vmatpush1.msra.mxu0 0.0
        %2699 = vmatprep.subr.mxu0 0.0
        %2700 = vmatpush1.msra.mxu0 0.0
        %2701 = vmatprep.subr.mxu0 0.0
        %2702 = vmatpush1.msra.mxu0 0.0
        %2703 = vmatprep.subr.mxu0 0.0
        %2704 = vmatpush1.msra.mxu0 0.0
        %2705 = vmatprep.subr.mxu0 0.0
        %2706 = vmatpush1.msra.mxu0 0.0
        %2707 = vmatprep.subr.mxu0 0.0
        %2708 = vmatpush1.msra.mxu0 0.0
        %2709 = vmatprep.subr.mxu0 0.0
        %2710 = vmatpush1.msra.mxu0 0.0
        %2711 = vmatprep.subr.mxu0 0.0
        %2712 = vmatpush1.msra.mxu0 0.0
        %2713 = vmatprep.subr.mxu0 0.0
        %2714 = vmatpush1.msra.mxu0 0.0
        %2715 = vmatprep.subr.mxu0 0.0
        %2716 = vmatpush1.msra.mxu0 0.0
        %2717 = vmatprep.subr.mxu0 0.0
        %2718 = vmatpush1.msra.mxu0 0.0
        %2719 = vmatprep.mubr.f32.mxu0 0.0
        %2720 = vmatmul.mubr.f32.gmra.mrb[0].mxu0 %v2624
        %v2721 = vpop.f32.mrb[0].mxu0
        %v2722 = vadd.f32 0.0, %v2721
        %v2723 = vpop.f32.mrb[0].mxu0
        %2724 = vmatprep.mubr.f32.mxu0 0.0
        %2725 = vmatmul.mubr.f32.gmra.mrb[0].mxu0 %v2626
        %v2726 = vpop.f32.mrb[0].mxu0
        %v2727 = vadd.f32 0.0, %v2726
        %v2728 = vpop.f32.mrb[0].mxu0
        %2729 = vmatprep.mubr.f32.mxu0 0.0
        %2730 = vmatmul.mubr.f32.gmra.mrb[0].mxu0 %v2628
        %v2731 = vpop.f32.mrb[0].mxu0
        %v2732 = vadd.f32 0.0, %v2731
        %v2733 = vpop.f32.mrb[0].mxu0
        %2734 = vmatprep.mubr.f32.mxu0 0.0
        %2735 = vmatmul.mubr.f32.gmra.mrb[0].mxu0 %v2630
        %v2736 = vpop.f32.mrb[0].mxu0
        %v2737 = vadd.f32 0.0, %v2736
        %v2738 = vpop.f32.mrb[0].mxu0
        %2739 = vmatprep.mubr.f32.mxu0 0.0
        %2740 = vmatmul.mubr.f32.gmra.mrb[0].mxu0 %v2632
        %v2741 = vpop.f32.mrb[0].mxu0
        %v2742 = vadd.f32 0.0, %v2741
        %v2743 = vpop.f32.mrb[0].mxu0
        %2744 = vmatprep.mubr.f32.mxu0 0.0
        %2745 = vmatmul.mubr.f32.gmra.mrb[0].mxu0 %v2634
        %v2746 = vpop.f32.mrb[0].mxu0
        %v2747 = vadd.f32 0.0, %v2746
        %v2748 = vpop.f32.mrb[0].mxu0
        %2749 = vmatprep.mubr.f32.mxu0 0.0
        %2750 = vmatmul.mubr.f32.gmra.mrb[0].mxu0 %v2636
        %v2751 = vpop.f32.mrb[0].mxu0
        %v2752 = vadd.f32 0.0, %v2751
        %v2753 = vpop.f32.mrb[0].mxu0
        %2754 = vmatprep.mubr.f32.mxu0 0.0
        %2755 = vmatmul.mubr.f32.gmra.mrb[0].mxu0 %v2638
        %v2756 = vpop.f32.mrb[0].mxu0
        %v2757 = vadd.f32 0.0, %v2756
        %v2758 = vpop.f32.mrb[0].mxu0
        %2759 = vmatprep.mubr.f32.mxu0 0.0
        %2760 = vmatmul.mubr.f32.gmra.mrb[0].mxu0 %v2640
        %v2761 = vpop.f32.mrb[0].mxu0
        %v2762 = vadd.f32 0.0, %v2761
        %v2763 = vpop.f32.mrb[0].mxu0
        %2764 = vmatprep.mubr.f32.mxu0 0.0
        %2765 = vmatmul.mubr.f32.gmra.mrb[0].mxu0 %v2642
        %v2766 = vpop.f32.mrb[0].mxu0
        %v2767 = vadd.f32 0.0, %v2766
        %v2768 = vpop.f32.mrb[0].mxu0
        %2769 = vmatprep.mubr.f32.mxu0 0.0
        %2770 = vmatmul.mubr.f32.gmra.mrb[0].mxu0 %v2644
        %v2771 = vpop.f32.mrb[0].mxu0
        %v2772 = vadd.f32 0.0, %v2771
        %v2773 = vpop.f32.mrb[0].mxu0
        %2774 = vmatprep.mubr.f32.mxu0 0.0
        %2775 = vmatmul.mubr.f32.gmra.mrb[0].mxu0 %v2646
        %v2776 = vpop.f32.mrb[0].mxu0
        %v2777 = vadd.f32 0.0, %v2776
        %v2778 = vpop.f32.mrb[0].mxu0
        %2779 = vmatprep.mubr.f32.mxu0 0.0
        %2780 = vmatmul.mubr.f32.gmra.mrb[0].mxu0 %v2648
        %v2781 = vpop.f32.mrb[0].mxu0
        %v2782 = vadd.f32 0.0, %v2781
        %v2783 = vpop.f32.mrb[0].mxu0
        %2784 = vmatprep.mubr.f32.mxu0 0.0
        %2785 = vmatmul.mubr.f32.gmra.mrb[0].mxu0 %v2650
        %v2786 = vpop.f32.mrb[0].mxu0
        %v2787 = vadd.f32 0.0, %v2786
        %v2788 = vpop.f32.mrb[0].mxu0
        %2789 = vmatprep.mubr.f32.mxu0 0.0
        %2790 = vmatmul.mubr.f32.gmra.mrb[0].mxu0 %v2652
        %v2791 = vpop.f32.mrb[0].mxu0
        %v2792 = vadd.f32 0.0, %v2791
        %v2793 = vpop.f32.mrb[0].mxu0
        %2794 = vmatprep.mubr.f32.mxu0 0.0
        %2795 = vmatmul.mubr.f32.gmra.mrb[0].mxu0 %v2654
        %v2796 = vpop.f32.mrb[0].mxu0
        %v2797 = vadd.f32 0.0, %v2796
        %v2798 = vpop.f32.mrb[0].mxu0
        %2799 = vdwg.mxu0
        %s2800 = scalar_lea.vmem %s8, 32
        %v2801 = vld [vmem:[%s2800] sm:$0xff]
        %v2802 = vld [vmem:[%s2800 + $0x8] sm:$0xff]
        %v2803 = vld [vmem:[%s2800 + $0x10] sm:$0xff]
        %v2804 = vld [vmem:[%s2800 + $0x18] sm:$0xff]
        %v2806 = vsel %vm1161, %v2722, 0
        %v2809 = vsel %vm1161, %v2727, 0
        %v2812 = vsel %vm1161, %v2732, 0
        %v2815 = vsel %vm1161, %v2737, 0
        %v2818 = vsel %vm1161, %v2742, 0
        %v2821 = vsel %vm1161, %v2747, 0
        %v2824 = vsel %vm1161, %v2752, 0
        %v2827 = vsel %vm1161, %v2757, 0
        %v2830 = vsel %vm1161, %v2762, 0
        %v2833 = vsel %vm1161, %v2767, 0
        %v2836 = vsel %vm1161, %v2772, 0
        %v2839 = vsel %vm1161, %v2777, 0
        %v2842 = vsel %vm1161, %v2782, 0
        %v2845 = vsel %vm1161, %v2787, 0
        %v2848 = vsel %vm1161, %v2792, 0
        %v2851 = vsel %vm1161, %v2797, 0
        %2853 = vmatprep.subr.mxu0 0.0
        %2854 = vmatpush1.msra.mxu0 %v2801
        %2855 = vmatprep.subr.mxu0 0.0
        %2856 = vmatpush1.msra.mxu0 %v2802
        %2857 = vmatprep.subr.mxu0 0.0
        %2858 = vmatpush1.msra.mxu0 %v2803
        %2859 = vmatprep.subr.mxu0 0.0
        %2860 = vmatpush1.msra.mxu0 %v2804
        %2861 = vmatprep.subr.mxu0 0.0
        %2862 = vmatpush1.msra.mxu0 0.0
        %2863 = vmatprep.subr.mxu0 0.0
        %2864 = vmatpush1.msra.mxu0 0.0
        %2865 = vmatprep.subr.mxu0 0.0
        %2866 = vmatpush1.msra.mxu0 0.0
        %2867 = vmatprep.subr.mxu0 0.0
        %2868 = vmatpush1.msra.mxu0 0.0
        %2869 = vmatprep.subr.mxu0 0.0
        %2870 = vmatpush1.msra.mxu0 0.0
        %2871 = vmatprep.subr.mxu0 0.0
        %2872 = vmatpush1.msra.mxu0 0.0
        %2873 = vmatprep.subr.mxu0 0.0
        %2874 = vmatpush1.msra.mxu0 0.0
        %2875 = vmatprep.subr.mxu0 0.0
        %2876 = vmatpush1.msra.mxu0 0.0
        %2877 = vmatprep.subr.mxu0 0.0
        %2878 = vmatpush1.msra.mxu0 0.0
        %2879 = vmatprep.subr.mxu0 0.0
        %2880 = vmatpush1.msra.mxu0 0.0
        %2881 = vmatprep.subr.mxu0 0.0
        %2882 = vmatpush1.msra.mxu0 0.0
        %2883 = vmatprep.subr.mxu0 0.0
        %2884 = vmatpush1.msra.mxu0 0.0
        %2885 = vmatprep.subr.mxu0 0.0
        %2886 = vmatpush1.msra.mxu0 0.0
        %2887 = vmatprep.subr.mxu0 0.0
        %2888 = vmatpush1.msra.mxu0 0.0
        %2889 = vmatprep.subr.mxu0 0.0
        %2890 = vmatpush1.msra.mxu0 0.0
        %2891 = vmatprep.subr.mxu0 0.0
        %2892 = vmatpush1.msra.mxu0 0.0
        %2893 = vmatprep.subr.mxu0 0.0
        %2894 = vmatpush1.msra.mxu0 0.0
        %2895 = vmatprep.subr.mxu0 0.0
        %2896 = vmatpush1.msra.mxu0 0.0
        %2897 = vmatprep.subr.mxu0 0.0
        %2898 = vmatpush1.msra.mxu0 0.0
        %2899 = vmatprep.subr.mxu0 0.0
        %2900 = vmatpush1.msra.mxu0 0.0
        %2901 = vmatprep.subr.mxu0 0.0
        %2902 = vmatpush1.msra.mxu0 0.0
        %2903 = vmatprep.subr.mxu0 0.0
        %2904 = vmatpush1.msra.mxu0 0.0
        %2905 = vmatprep.subr.mxu0 0.0
        %2906 = vmatpush1.msra.mxu0 0.0
        %2907 = vmatprep.subr.mxu0 0.0
        %2908 = vmatpush1.msra.mxu0 0.0
        %2909 = vmatprep.subr.mxu0 0.0
        %2910 = vmatpush1.msra.mxu0 0.0
        %2911 = vmatprep.subr.mxu0 0.0
        %2912 = vmatpush1.msra.mxu0 0.0
        %2913 = vmatprep.subr.mxu0 0.0
        %2914 = vmatpush1.msra.mxu0 0.0
        %2915 = vmatprep.subr.mxu0 0.0
        %2916 = vmatpush1.msra.mxu0 0.0
        %2917 = vmatprep.mubr.f32.mxu0 0.0
        %2918 = vmatmul.mubr.f32.gmra.mrb[0].mxu0 %v2806
        %v2919 = vpop.f32.mrb[0].mxu0
        %v2920 = vadd.f32 0.0, %v2919
        %v2921 = vpop.f32.mrb[0].mxu0
        %2922 = vmatprep.mubr.f32.mxu0 0.0
        %2923 = vmatmul.mubr.f32.gmra.mrb[0].mxu0 %v2809
        %v2924 = vpop.f32.mrb[0].mxu0
        %v2925 = vadd.f32 0.0, %v2924
        %v2926 = vpop.f32.mrb[0].mxu0
        %2927 = vmatprep.mubr.f32.mxu0 0.0
        %2928 = vmatmul.mubr.f32.gmra.mrb[0].mxu0 %v2812
        %v2929 = vpop.f32.mrb[0].mxu0
        %v2930 = vadd.f32 0.0, %v2929
        %v2931 = vpop.f32.mrb[0].mxu0
        %2932 = vmatprep.mubr.f32.mxu0 0.0
        %2933 = vmatmul.mubr.f32.gmra.mrb[0].mxu0 %v2815
        %v2934 = vpop.f32.mrb[0].mxu0
        %v2935 = vadd.f32 0.0, %v2934
        %v2936 = vpop.f32.mrb[0].mxu0
        %2937 = vmatprep.mubr.f32.mxu0 0.0
        %2938 = vmatmul.mubr.f32.gmra.mrb[0].mxu0 %v2818
        %v2939 = vpop.f32.mrb[0].mxu0
        %v2940 = vadd.f32 0.0, %v2939
        %v2941 = vpop.f32.mrb[0].mxu0
        %2942 = vmatprep.mubr.f32.mxu0 0.0
        %2943 = vmatmul.mubr.f32.gmra.mrb[0].mxu0 %v2821
        %v2944 = vpop.f32.mrb[0].mxu0
        %v2945 = vadd.f32 0.0, %v2944
        %v2946 = vpop.f32.mrb[0].mxu0
        %2947 = vmatprep.mubr.f32.mxu0 0.0
        %2948 = vmatmul.mubr.f32.gmra.mrb[0].mxu0 %v2824
        %v2949 = vpop.f32.mrb[0].mxu0
        %v2950 = vadd.f32 0.0, %v2949
        %v2951 = vpop.f32.mrb[0].mxu0
        %2952 = vmatprep.mubr.f32.mxu0 0.0
        %2953 = vmatmul.mubr.f32.gmra.mrb[0].mxu0 %v2827
        %v2954 = vpop.f32.mrb[0].mxu0
        %v2955 = vadd.f32 0.0, %v2954
        %v2956 = vpop.f32.mrb[0].mxu0
        %2957 = vmatprep.mubr.f32.mxu0 0.0
        %2958 = vmatmul.mubr.f32.gmra.mrb[0].mxu0 %v2830
        %v2959 = vpop.f32.mrb[0].mxu0
        %v2960 = vadd.f32 0.0, %v2959
        %v2961 = vpop.f32.mrb[0].mxu0
        %2962 = vmatprep.mubr.f32.mxu0 0.0
        %2963 = vmatmul.mubr.f32.gmra.mrb[0].mxu0 %v2833
        %v2964 = vpop.f32.mrb[0].mxu0
        %v2965 = vadd.f32 0.0, %v2964
        %v2966 = vpop.f32.mrb[0].mxu0
        %2967 = vmatprep.mubr.f32.mxu0 0.0
        %2968 = vmatmul.mubr.f32.gmra.mrb[0].mxu0 %v2836
        %v2969 = vpop.f32.mrb[0].mxu0
        %v2970 = vadd.f32 0.0, %v2969
        %v2971 = vpop.f32.mrb[0].mxu0
        %2972 = vmatprep.mubr.f32.mxu0 0.0
        %2973 = vmatmul.mubr.f32.gmra.mrb[0].mxu0 %v2839
        %v2974 = vpop.f32.mrb[0].mxu0
        %v2975 = vadd.f32 0.0, %v2974
        %v2976 = vpop.f32.mrb[0].mxu0
        %2977 = vmatprep.mubr.f32.mxu0 0.0
        %2978 = vmatmul.mubr.f32.gmra.mrb[0].mxu0 %v2842
        %v2979 = vpop.f32.mrb[0].mxu0
        %v2980 = vadd.f32 0.0, %v2979
        %v2981 = vpop.f32.mrb[0].mxu0
        %2982 = vmatprep.mubr.f32.mxu0 0.0
        %2983 = vmatmul.mubr.f32.gmra.mrb[0].mxu0 %v2845
        %v2984 = vpop.f32.mrb[0].mxu0
        %v2985 = vadd.f32 0.0, %v2984
        %v2986 = vpop.f32.mrb[0].mxu0
        %2987 = vmatprep.mubr.f32.mxu0 0.0
        %2988 = vmatmul.mubr.f32.gmra.mrb[0].mxu0 %v2848
        %v2989 = vpop.f32.mrb[0].mxu0
        %v2990 = vadd.f32 0.0, %v2989
        %v2991 = vpop.f32.mrb[0].mxu0
        %2992 = vmatprep.mubr.f32.mxu0 0.0
        %2993 = vmatmul.mubr.f32.gmra.mrb[0].mxu0 %v2851
        %v2994 = vpop.f32.mrb[0].mxu0
        %v2995 = vadd.f32 0.0, %v2994
        %v2996 = vpop.f32.mrb[0].mxu0
        %2997 = vdwg.mxu0
        %v2999 = vsel %vm1161, %v1646, 0
        %v3002 = vsel %vm1161, %v1651, 0
        %v3005 = vsel %vm1161, %v1656, 0
        %v3008 = vsel %vm1161, %v1661, 0
        %v3011 = vsel %vm1161, %v1666, 0
        %v3014 = vsel %vm1161, %v1671, 0
        %v3017 = vsel %vm1161, %v1676, 0
        %v3020 = vsel %vm1161, %v1681, 0
        %v3023 = vsel %vm1161, %v1686, 0
        %v3026 = vsel %vm1161, %v1691, 0
        %v3029 = vsel %vm1161, %v1696, 0
        %v3032 = vsel %vm1161, %v1701, 0
        %v3035 = vsel %vm1161, %v1706, 0
        %v3038 = vsel %vm1161, %v1711, 0
        %v3041 = vsel %vm1161, %v1716, 0
        %v3044 = vsel %vm1161, %v1721, 0
        %3046 = vmatprep.subr.mxu0 0.0
        %3047 = vmatpush1.msra.mxu0 %v1724
        %3048 = vmatprep.subr.mxu0 0.0
        %3049 = vmatpush1.msra.mxu0 %v1725
        %3050 = vmatprep.subr.mxu0 0.0
        %3051 = vmatpush1.msra.mxu0 %v1726
        %3052 = vmatprep.subr.mxu0 0.0
        %3053 = vmatpush1.msra.mxu0 %v1727
        %3054 = vmatprep.subr.mxu0 0.0
        %3055 = vmatpush1.msra.mxu0 0.0
        %3056 = vmatprep.subr.mxu0 0.0
        %3057 = vmatpush1.msra.mxu0 0.0
        %3058 = vmatprep.subr.mxu0 0.0
        %3059 = vmatpush1.msra.mxu0 0.0
        %3060 = vmatprep.subr.mxu0 0.0
        %3061 = vmatpush1.msra.mxu0 0.0
        %3062 = vmatprep.subr.mxu0 0.0
        %3063 = vmatpush1.msra.mxu0 0.0
        %3064 = vmatprep.subr.mxu0 0.0
        %3065 = vmatpush1.msra.mxu0 0.0
        %3066 = vmatprep.subr.mxu0 0.0
        %3067 = vmatpush1.msra.mxu0 0.0
        %3068 = vmatprep.subr.mxu0 0.0
        %3069 = vmatpush1.msra.mxu0 0.0
        %3070 = vmatprep.subr.mxu0 0.0
        %3071 = vmatpush1.msra.mxu0 0.0
        %3072 = vmatprep.subr.mxu0 0.0
        %3073 = vmatpush1.msra.mxu0 0.0
        %3074 = vmatprep.subr.mxu0 0.0
        %3075 = vmatpush1.msra.mxu0 0.0
        %3076 = vmatprep.subr.mxu0 0.0
        %3077 = vmatpush1.msra.mxu0 0.0
        %3078 = vmatprep.subr.mxu0 0.0
        %3079 = vmatpush1.msra.mxu0 0.0
        %3080 = vmatprep.subr.mxu0 0.0
        %3081 = vmatpush1.msra.mxu0 0.0
        %3082 = vmatprep.subr.mxu0 0.0
        %3083 = vmatpush1.msra.mxu0 0.0
        %3084 = vmatprep.subr.mxu0 0.0
        %3085 = vmatpush1.msra.mxu0 0.0
        %3086 = vmatprep.subr.mxu0 0.0
        %3087 = vmatpush1.msra.mxu0 0.0
        %3088 = vmatprep.subr.mxu0 0.0
        %3089 = vmatpush1.msra.mxu0 0.0
        %3090 = vmatprep.subr.mxu0 0.0
        %3091 = vmatpush1.msra.mxu0 0.0
        %3092 = vmatprep.subr.mxu0 0.0
        %3093 = vmatpush1.msra.mxu0 0.0
        %3094 = vmatprep.subr.mxu0 0.0
        %3095 = vmatpush1.msra.mxu0 0.0
        %3096 = vmatprep.subr.mxu0 0.0
        %3097 = vmatpush1.msra.mxu0 0.0
        %3098 = vmatprep.subr.mxu0 0.0
        %3099 = vmatpush1.msra.mxu0 0.0
        %3100 = vmatprep.subr.mxu0 0.0
        %3101 = vmatpush1.msra.mxu0 0.0
        %3102 = vmatprep.subr.mxu0 0.0
        %3103 = vmatpush1.msra.mxu0 0.0
        %3104 = vmatprep.subr.mxu0 0.0
        %3105 = vmatpush1.msra.mxu0 0.0
        %3106 = vmatprep.subr.mxu0 0.0
        %3107 = vmatpush1.msra.mxu0 0.0
        %3108 = vmatprep.subr.mxu0 0.0
        %3109 = vmatpush1.msra.mxu0 0.0
        %3110 = vmatprep.mubr.f32.mxu0 0.0
        %3111 = vmatmul.mubr.f32.gmra.mrb[0].mxu0 %v2999
        %v3112 = vpop.f32.mrb[0].mxu0
        %v3113 = vadd.f32 %v2920, %v3112
        %v3114 = vpop.f32.mrb[0].mxu0
        %3115 = vmatprep.mubr.f32.mxu0 0.0
        %3116 = vmatmul.mubr.f32.gmra.mrb[0].mxu0 %v3002
        %v3117 = vpop.f32.mrb[0].mxu0
        %v3118 = vadd.f32 %v2925, %v3117
        %v3119 = vpop.f32.mrb[0].mxu0
        %3120 = vmatprep.mubr.f32.mxu0 0.0
        %3121 = vmatmul.mubr.f32.gmra.mrb[0].mxu0 %v3005
        %v3122 = vpop.f32.mrb[0].mxu0
        %v3123 = vadd.f32 %v2930, %v3122
        %v3124 = vpop.f32.mrb[0].mxu0
        %3125 = vmatprep.mubr.f32.mxu0 0.0
        %3126 = vmatmul.mubr.f32.gmra.mrb[0].mxu0 %v3008
        %v3127 = vpop.f32.mrb[0].mxu0
        %v3128 = vadd.f32 %v2935, %v3127
        %v3129 = vpop.f32.mrb[0].mxu0
        %3130 = vmatprep.mubr.f32.mxu0 0.0
        %3131 = vmatmul.mubr.f32.gmra.mrb[0].mxu0 %v3011
        %v3132 = vpop.f32.mrb[0].mxu0
        %v3133 = vadd.f32 %v2940, %v3132
        %v3134 = vpop.f32.mrb[0].mxu0
        %3135 = vmatprep.mubr.f32.mxu0 0.0
        %3136 = vmatmul.mubr.f32.gmra.mrb[0].mxu0 %v3014
        %v3137 = vpop.f32.mrb[0].mxu0
        %v3138 = vadd.f32 %v2945, %v3137
        %v3139 = vpop.f32.mrb[0].mxu0
        %3140 = vmatprep.mubr.f32.mxu0 0.0
        %3141 = vmatmul.mubr.f32.gmra.mrb[0].mxu0 %v3017
        %v3142 = vpop.f32.mrb[0].mxu0
        %v3143 = vadd.f32 %v2950, %v3142
        %v3144 = vpop.f32.mrb[0].mxu0
        %3145 = vmatprep.mubr.f32.mxu0 0.0
        %3146 = vmatmul.mubr.f32.gmra.mrb[0].mxu0 %v3020
        %v3147 = vpop.f32.mrb[0].mxu0
        %v3148 = vadd.f32 %v2955, %v3147
        %v3149 = vpop.f32.mrb[0].mxu0
        %3150 = vmatprep.mubr.f32.mxu0 0.0
        %3151 = vmatmul.mubr.f32.gmra.mrb[0].mxu0 %v3023
        %v3152 = vpop.f32.mrb[0].mxu0
        %v3153 = vadd.f32 %v2960, %v3152
        %v3154 = vpop.f32.mrb[0].mxu0
        %3155 = vmatprep.mubr.f32.mxu0 0.0
        %3156 = vmatmul.mubr.f32.gmra.mrb[0].mxu0 %v3026
        %v3157 = vpop.f32.mrb[0].mxu0
        %v3158 = vadd.f32 %v2965, %v3157
        %v3159 = vpop.f32.mrb[0].mxu0
        %3160 = vmatprep.mubr.f32.mxu0 0.0
        %3161 = vmatmul.mubr.f32.gmra.mrb[0].mxu0 %v3029
        %v3162 = vpop.f32.mrb[0].mxu0
        %v3163 = vadd.f32 %v2970, %v3162
        %v3164 = vpop.f32.mrb[0].mxu0
        %3165 = vmatprep.mubr.f32.mxu0 0.0
        %3166 = vmatmul.mubr.f32.gmra.mrb[0].mxu0 %v3032
        %v3167 = vpop.f32.mrb[0].mxu0
        %v3168 = vadd.f32 %v2975, %v3167
        %v3169 = vpop.f32.mrb[0].mxu0
        %3170 = vmatprep.mubr.f32.mxu0 0.0
        %3171 = vmatmul.mubr.f32.gmra.mrb[0].mxu0 %v3035
        %v3172 = vpop.f32.mrb[0].mxu0
        %v3173 = vadd.f32 %v2980, %v3172
        %v3174 = vpop.f32.mrb[0].mxu0
        %3175 = vmatprep.mubr.f32.mxu0 0.0
        %3176 = vmatmul.mubr.f32.gmra.mrb[0].mxu0 %v3038
        %v3177 = vpop.f32.mrb[0].mxu0
        %v3178 = vadd.f32 %v2985, %v3177
        %v3179 = vpop.f32.mrb[0].mxu0
        %3180 = vmatprep.mubr.f32.mxu0 0.0
        %3181 = vmatmul.mubr.f32.gmra.mrb[0].mxu0 %v3041
        %v3182 = vpop.f32.mrb[0].mxu0
        %v3183 = vadd.f32 %v2990, %v3182
        %v3184 = vpop.f32.mrb[0].mxu0
        %3185 = vmatprep.mubr.f32.mxu0 0.0
        %3186 = vmatmul.mubr.f32.gmra.mrb[0].mxu0 %v3044
        %v3187 = vpop.f32.mrb[0].mxu0
        %v3188 = vadd.f32 %v2995, %v3187
        %v3189 = vpop.f32.mrb[0].mxu0
        %3190 = vdwg.mxu0
        %s3191 = scalar_lea.vmem %s2, 256
        %v3192 = vld [vmem:[%s3191] sm:$0xff]
        %v3193 = vld [vmem:[%s3191 + $0x8] sm:$0xff]
        %v3194 = vld [vmem:[%s3191 + $0x10] sm:$0xff]
        %v3195 = vld [vmem:[%s3191 + $0x18] sm:$0xff]
        %v3196 = vld [vmem:[%s3191 + $0x20] sm:$0xff]
        %v3197 = vld [vmem:[%s3191 + $0x28] sm:$0xff]
        %v3198 = vld [vmem:[%s3191 + $0x30] sm:$0xff]
        %v3199 = vld [vmem:[%s3191 + $0x38] sm:$0xff]
        %v3200 = vld [vmem:[%s3191 + $0x40] sm:$0xff]
        %v3201 = vld [vmem:[%s3191 + $0x48] sm:$0xff]
        %v3202 = vld [vmem:[%s3191 + $0x50] sm:$0xff]
        %v3203 = vld [vmem:[%s3191 + $0x58] sm:$0xff]
        %v3204 = vld [vmem:[%s3191 + $0x60] sm:$0xff]
        %v3205 = vld [vmem:[%s3191 + $0x68] sm:$0xff]
        %v3206 = vld [vmem:[%s3191 + $0x70] sm:$0xff]
        %v3207 = vld [vmem:[%s3191 + $0x78] sm:$0xff]
        %s3208 = scalar_lea.vmem %s3, 2
        %v3209 = vld [vmem:[%s3208] sm:$0x1]
        %v3211 = vlaneseq
        %v3212 = vshrl.u32 %v3211, 7
        %v3213 = vsub.s32 0, %v3212
        %v3214 = vrot.slane %v3209, %v3213
        %3216 = vmatprep.subr.mxu0 0.0
        %3217 = vmatpush1.msra.mxu0 %v3192
        %3218 = vmatprep.subr.mxu0 0.0
        %3219 = vmatpush1.msra.mxu0 %v3193
        %3220 = vmatprep.subr.mxu0 0.0
        %3221 = vmatpush1.msra.mxu0 %v3194
        %3222 = vmatprep.subr.mxu0 0.0
        %3223 = vmatpush1.msra.mxu0 %v3195
        %3224 = vmatprep.subr.mxu0 0.0
        %3225 = vmatpush1.msra.mxu0 %v3196
        %3226 = vmatprep.subr.mxu0 0.0
        %3227 = vmatpush1.msra.mxu0 %v3197
        %3228 = vmatprep.subr.mxu0 0.0
        %3229 = vmatpush1.msra.mxu0 %v3198
        %3230 = vmatprep.subr.mxu0 0.0
        %3231 = vmatpush1.msra.mxu0 %v3199
        %3232 = vmatprep.subr.mxu0 0.0
        %3233 = vmatpush1.msra.mxu0 %v3200
        %3234 = vmatprep.subr.mxu0 0.0
        %3235 = vmatpush1.msra.mxu0 %v3201
        %3236 = vmatprep.subr.mxu0 0.0
        %3237 = vmatpush1.msra.mxu0 %v3202
        %3238 = vmatprep.subr.mxu0 0.0
        %3239 = vmatpush1.msra.mxu0 %v3203
        %3240 = vmatprep.subr.mxu0 0.0
        %3241 = vmatpush1.msra.mxu0 %v3204
        %3242 = vmatprep.subr.mxu0 0.0
        %3243 = vmatpush1.msra.mxu0 %v3205
        %3244 = vmatprep.subr.mxu0 0.0
        %3245 = vmatpush1.msra.mxu0 %v3206
        %3246 = vmatprep.subr.mxu0 0.0
        %3247 = vmatpush1.msra.mxu0 %v3207
        %3248 = vmatprep.subr.mxu0 0.0
        %3249 = vmatpush1.msra.mxu0 0.0
        %3250 = vmatprep.subr.mxu0 0.0
        %3251 = vmatpush1.msra.mxu0 0.0
        %3252 = vmatprep.subr.mxu0 0.0
        %3253 = vmatpush1.msra.mxu0 0.0
        %3254 = vmatprep.subr.mxu0 0.0
        %3255 = vmatpush1.msra.mxu0 0.0
        %3256 = vmatprep.subr.mxu0 0.0
        %3257 = vmatpush1.msra.mxu0 0.0
        %3258 = vmatprep.subr.mxu0 0.0
        %3259 = vmatpush1.msra.mxu0 0.0
        %3260 = vmatprep.subr.mxu0 0.0
        %3261 = vmatpush1.msra.mxu0 0.0
        %3262 = vmatprep.subr.mxu0 0.0
        %3263 = vmatpush1.msra.mxu0 0.0
        %3264 = vmatprep.subr.mxu0 0.0
        %3265 = vmatpush1.msra.mxu0 0.0
        %3266 = vmatprep.subr.mxu0 0.0
        %3267 = vmatpush1.msra.mxu0 0.0
        %3268 = vmatprep.subr.mxu0 0.0
        %3269 = vmatpush1.msra.mxu0 0.0
        %3270 = vmatprep.subr.mxu0 0.0
        %3271 = vmatpush1.msra.mxu0 0.0
        %3272 = vmatprep.subr.mxu0 0.0
        %3273 = vmatpush1.msra.mxu0 0.0
        %3274 = vmatprep.subr.mxu0 0.0
        %3275 = vmatpush1.msra.mxu0 0.0
        %3276 = vmatprep.subr.mxu0 0.0
        %3277 = vmatpush1.msra.mxu0 0.0
        %3278 = vmatprep.subr.mxu0 0.0
        %3279 = vmatpush1.msra.mxu0 0.0
        %3280 = vmatprep.mubr.f32.mxu0 0.0
        %3281 = vmatmul.mubr.f32.gmra.mrb[0].mxu0 %v606
        %v3282 = vpop.f32.mrb[0].mxu0
        %v3283 = vadd.f32 %v3214, %v3282
        %v3284 = vpop.f32.mrb[0].mxu0
        %3285 = vmatprep.mubr.f32.mxu0 0.0
        %3286 = vmatmul.mubr.f32.gmra.mrb[0].mxu0 %v607
        %v3287 = vpop.f32.mrb[0].mxu0
        %v3288 = vadd.f32 %v3214, %v3287
        %v3289 = vpop.f32.mrb[0].mxu0
        %3290 = vmatprep.mubr.f32.mxu0 0.0
        %3291 = vmatmul.mubr.f32.gmra.mrb[0].mxu0 %v608
        %v3292 = vpop.f32.mrb[0].mxu0
        %v3293 = vadd.f32 %v3214, %v3292
        %v3294 = vpop.f32.mrb[0].mxu0
        %3295 = vmatprep.mubr.f32.mxu0 0.0
        %3296 = vmatmul.mubr.f32.gmra.mrb[0].mxu0 %v609
        %v3297 = vpop.f32.mrb[0].mxu0
        %v3298 = vadd.f32 %v3214, %v3297
        %v3299 = vpop.f32.mrb[0].mxu0
        %3300 = vmatprep.mubr.f32.mxu0 0.0
        %3301 = vmatmul.mubr.f32.gmra.mrb[0].mxu0 %v610
        %v3302 = vpop.f32.mrb[0].mxu0
        %v3303 = vadd.f32 %v3214, %v3302
        %v3304 = vpop.f32.mrb[0].mxu0
        %3305 = vmatprep.mubr.f32.mxu0 0.0
        %3306 = vmatmul.mubr.f32.gmra.mrb[0].mxu0 %v611
        %v3307 = vpop.f32.mrb[0].mxu0
        %v3308 = vadd.f32 %v3214, %v3307
        %v3309 = vpop.f32.mrb[0].mxu0
        %3310 = vmatprep.mubr.f32.mxu0 0.0
        %3311 = vmatmul.mubr.f32.gmra.mrb[0].mxu0 %v612
        %v3312 = vpop.f32.mrb[0].mxu0
        %v3313 = vadd.f32 %v3214, %v3312
        %v3314 = vpop.f32.mrb[0].mxu0
        %3315 = vmatprep.mubr.f32.mxu0 0.0
        %3316 = vmatmul.mubr.f32.gmra.mrb[0].mxu0 %v613
        %v3317 = vpop.f32.mrb[0].mxu0
        %v3318 = vadd.f32 %v3214, %v3317
        %v3319 = vpop.f32.mrb[0].mxu0
        %3320 = vmatprep.mubr.f32.mxu0 0.0
        %3321 = vmatmul.mubr.f32.gmra.mrb[0].mxu0 %v614
        %v3322 = vpop.f32.mrb[0].mxu0
        %v3323 = vadd.f32 %v3214, %v3322
        %v3324 = vpop.f32.mrb[0].mxu0
        %3325 = vmatprep.mubr.f32.mxu0 0.0
        %3326 = vmatmul.mubr.f32.gmra.mrb[0].mxu0 %v615
        %v3327 = vpop.f32.mrb[0].mxu0
        %v3328 = vadd.f32 %v3214, %v3327
        %v3329 = vpop.f32.mrb[0].mxu0
        %3330 = vmatprep.mubr.f32.mxu0 0.0
        %3331 = vmatmul.mubr.f32.gmra.mrb[0].mxu0 %v616
        %v3332 = vpop.f32.mrb[0].mxu0
        %v3333 = vadd.f32 %v3214, %v3332
        %v3334 = vpop.f32.mrb[0].mxu0
        %3335 = vmatprep.mubr.f32.mxu0 0.0
        %3336 = vmatmul.mubr.f32.gmra.mrb[0].mxu0 %v617
        %v3337 = vpop.f32.mrb[0].mxu0
        %v3338 = vadd.f32 %v3214, %v3337
        %v3339 = vpop.f32.mrb[0].mxu0
        %3340 = vmatprep.mubr.f32.mxu0 0.0
        %3341 = vmatmul.mubr.f32.gmra.mrb[0].mxu0 %v618
        %v3342 = vpop.f32.mrb[0].mxu0
        %v3343 = vadd.f32 %v3214, %v3342
        %v3344 = vpop.f32.mrb[0].mxu0
        %3345 = vmatprep.mubr.f32.mxu0 0.0
        %3346 = vmatmul.mubr.f32.gmra.mrb[0].mxu0 %v619
        %v3347 = vpop.f32.mrb[0].mxu0
        %v3348 = vadd.f32 %v3214, %v3347
        %v3349 = vpop.f32.mrb[0].mxu0
        %3350 = vmatprep.mubr.f32.mxu0 0.0
        %3351 = vmatmul.mubr.f32.gmra.mrb[0].mxu0 %v620
        %v3352 = vpop.f32.mrb[0].mxu0
        %v3353 = vadd.f32 %v3214, %v3352
        %v3354 = vpop.f32.mrb[0].mxu0
        %3355 = vmatprep.mubr.f32.mxu0 0.0
        %3356 = vmatmul.mubr.f32.gmra.mrb[0].mxu0 %v621
        %v3357 = vpop.f32.mrb[0].mxu0
        %v3358 = vadd.f32 %v3214, %v3357
        %v3359 = vpop.f32.mrb[0].mxu0
        %3360 = vdwg.mxu0
        %s3361 = scalar_lea.vmem %s4, 256
        %v3362 = vld [vmem:[%s3361] sm:$0xff]
        %v3363 = vld [vmem:[%s3361 + $0x8] sm:$0xff]
        %v3364 = vld [vmem:[%s3361 + $0x10] sm:$0xff]
        %v3365 = vld [vmem:[%s3361 + $0x18] sm:$0xff]
        %v3366 = vld [vmem:[%s3361 + $0x20] sm:$0xff]
        %v3367 = vld [vmem:[%s3361 + $0x28] sm:$0xff]
        %v3368 = vld [vmem:[%s3361 + $0x30] sm:$0xff]
        %v3369 = vld [vmem:[%s3361 + $0x38] sm:$0xff]
        %v3370 = vld [vmem:[%s3361 + $0x40] sm:$0xff]
        %v3371 = vld [vmem:[%s3361 + $0x48] sm:$0xff]
        %v3372 = vld [vmem:[%s3361 + $0x50] sm:$0xff]
        %v3373 = vld [vmem:[%s3361 + $0x58] sm:$0xff]
        %v3374 = vld [vmem:[%s3361 + $0x60] sm:$0xff]
        %v3375 = vld [vmem:[%s3361 + $0x68] sm:$0xff]
        %v3376 = vld [vmem:[%s3361 + $0x70] sm:$0xff]
        %v3377 = vld [vmem:[%s3361 + $0x78] sm:$0xff]
        %s3378 = scalar_lea.vmem %s5, 2
        %v3379 = vld [vmem:[%s3378] sm:$0x1]
        %v3381 = vlaneseq
        %v3382 = vshrl.u32 %v3381, 7
        %v3383 = vsub.s32 0, %v3382
        %v3384 = vrot.slane %v3379, %v3383
        %3386 = vmatprep.subr.mxu0 0.0
        %3387 = vmatpush1.msra.mxu0 %v3362
        %3388 = vmatprep.subr.mxu0 0.0
        %3389 = vmatpush1.msra.mxu0 %v3363
        %3390 = vmatprep.subr.mxu0 0.0
        %3391 = vmatpush1.msra.mxu0 %v3364
        %3392 = vmatprep.subr.mxu0 0.0
        %3393 = vmatpush1.msra.mxu0 %v3365
        %3394 = vmatprep.subr.mxu0 0.0
        %3395 = vmatpush1.msra.mxu0 %v3366
        %3396 = vmatprep.subr.mxu0 0.0
        %3397 = vmatpush1.msra.mxu0 %v3367
        %3398 = vmatprep.subr.mxu0 0.0
        %3399 = vmatpush1.msra.mxu0 %v3368
        %3400 = vmatprep.subr.mxu0 0.0
        %3401 = vmatpush1.msra.mxu0 %v3369
        %3402 = vmatprep.subr.mxu0 0.0
        %3403 = vmatpush1.msra.mxu0 %v3370
        %3404 = vmatprep.subr.mxu0 0.0
        %3405 = vmatpush1.msra.mxu0 %v3371
        %3406 = vmatprep.subr.mxu0 0.0
        %3407 = vmatpush1.msra.mxu0 %v3372
        %3408 = vmatprep.subr.mxu0 0.0
        %3409 = vmatpush1.msra.mxu0 %v3373
        %3410 = vmatprep.subr.mxu0 0.0
        %3411 = vmatpush1.msra.mxu0 %v3374
        %3412 = vmatprep.subr.mxu0 0.0
        %3413 = vmatpush1.msra.mxu0 %v3375
        %3414 = vmatprep.subr.mxu0 0.0
        %3415 = vmatpush1.msra.mxu0 %v3376
        %3416 = vmatprep.subr.mxu0 0.0
        %3417 = vmatpush1.msra.mxu0 %v3377
        %3418 = vmatprep.subr.mxu0 0.0
        %3419 = vmatpush1.msra.mxu0 0.0
        %3420 = vmatprep.subr.mxu0 0.0
        %3421 = vmatpush1.msra.mxu0 0.0
        %3422 = vmatprep.subr.mxu0 0.0
        %3423 = vmatpush1.msra.mxu0 0.0
        %3424 = vmatprep.subr.mxu0 0.0
        %3425 = vmatpush1.msra.mxu0 0.0
        %3426 = vmatprep.subr.mxu0 0.0
        %3427 = vmatpush1.msra.mxu0 0.0
        %3428 = vmatprep.subr.mxu0 0.0
        %3429 = vmatpush1.msra.mxu0 0.0
        %3430 = vmatprep.subr.mxu0 0.0
        %3431 = vmatpush1.msra.mxu0 0.0
        %3432 = vmatprep.subr.mxu0 0.0
        %3433 = vmatpush1.msra.mxu0 0.0
        %3434 = vmatprep.subr.mxu0 0.0
        %3435 = vmatpush1.msra.mxu0 0.0
        %3436 = vmatprep.subr.mxu0 0.0
        %3437 = vmatpush1.msra.mxu0 0.0
        %3438 = vmatprep.subr.mxu0 0.0
        %3439 = vmatpush1.msra.mxu0 0.0
        %3440 = vmatprep.subr.mxu0 0.0
        %3441 = vmatpush1.msra.mxu0 0.0
        %3442 = vmatprep.subr.mxu0 0.0
        %3443 = vmatpush1.msra.mxu0 0.0
        %3444 = vmatprep.subr.mxu0 0.0
        %3445 = vmatpush1.msra.mxu0 0.0
        %3446 = vmatprep.subr.mxu0 0.0
        %3447 = vmatpush1.msra.mxu0 0.0
        %3448 = vmatprep.subr.mxu0 0.0
        %3449 = vmatpush1.msra.mxu0 0.0
        %3450 = vmatprep.mubr.f32.mxu0 0.0
        %3451 = vmatmul.mubr.f32.gmra.mrb[0].mxu0 %v606
        %v3452 = vpop.f32.mrb[0].mxu0
        %v3453 = vadd.f32 %v3384, %v3452
        %v3454 = vpop.f32.mrb[0].mxu0
        %3455 = vmatprep.mubr.f32.mxu0 0.0
        %3456 = vmatmul.mubr.f32.gmra.mrb[0].mxu0 %v607
        %v3457 = vpop.f32.mrb[0].mxu0
        %v3458 = vadd.f32 %v3384, %v3457
        %v3459 = vpop.f32.mrb[0].mxu0
        %3460 = vmatprep.mubr.f32.mxu0 0.0
        %3461 = vmatmul.mubr.f32.gmra.mrb[0].mxu0 %v608
        %v3462 = vpop.f32.mrb[0].mxu0
        %v3463 = vadd.f32 %v3384, %v3462
        %v3464 = vpop.f32.mrb[0].mxu0
        %3465 = vmatprep.mubr.f32.mxu0 0.0
        %3466 = vmatmul.mubr.f32.gmra.mrb[0].mxu0 %v609
        %v3467 = vpop.f32.mrb[0].mxu0
        %v3468 = vadd.f32 %v3384, %v3467
        %v3469 = vpop.f32.mrb[0].mxu0
        %3470 = vmatprep.mubr.f32.mxu0 0.0
        %3471 = vmatmul.mubr.f32.gmra.mrb[0].mxu0 %v610
        %v3472 = vpop.f32.mrb[0].mxu0
        %v3473 = vadd.f32 %v3384, %v3472
        %v3474 = vpop.f32.mrb[0].mxu0
        %3475 = vmatprep.mubr.f32.mxu0 0.0
        %3476 = vmatmul.mubr.f32.gmra.mrb[0].mxu0 %v611
        %v3477 = vpop.f32.mrb[0].mxu0
        %v3478 = vadd.f32 %v3384, %v3477
        %v3479 = vpop.f32.mrb[0].mxu0
        %3480 = vmatprep.mubr.f32.mxu0 0.0
        %3481 = vmatmul.mubr.f32.gmra.mrb[0].mxu0 %v612
        %v3482 = vpop.f32.mrb[0].mxu0
        %v3483 = vadd.f32 %v3384, %v3482
        %v3484 = vpop.f32.mrb[0].mxu0
        %3485 = vmatprep.mubr.f32.mxu0 0.0
        %3486 = vmatmul.mubr.f32.gmra.mrb[0].mxu0 %v613
        %v3487 = vpop.f32.mrb[0].mxu0
        %v3488 = vadd.f32 %v3384, %v3487
        %v3489 = vpop.f32.mrb[0].mxu0
        %3490 = vmatprep.mubr.f32.mxu0 0.0
        %3491 = vmatmul.mubr.f32.gmra.mrb[0].mxu0 %v614
        %v3492 = vpop.f32.mrb[0].mxu0
        %v3493 = vadd.f32 %v3384, %v3492
        %v3494 = vpop.f32.mrb[0].mxu0
        %3495 = vmatprep.mubr.f32.mxu0 0.0
        %3496 = vmatmul.mubr.f32.gmra.mrb[0].mxu0 %v615
        %v3497 = vpop.f32.mrb[0].mxu0
        %v3498 = vadd.f32 %v3384, %v3497
        %v3499 = vpop.f32.mrb[0].mxu0
        %3500 = vmatprep.mubr.f32.mxu0 0.0
        %3501 = vmatmul.mubr.f32.gmra.mrb[0].mxu0 %v616
        %v3502 = vpop.f32.mrb[0].mxu0
        %v3503 = vadd.f32 %v3384, %v3502
        %v3504 = vpop.f32.mrb[0].mxu0
        %3505 = vmatprep.mubr.f32.mxu0 0.0
        %3506 = vmatmul.mubr.f32.gmra.mrb[0].mxu0 %v617
        %v3507 = vpop.f32.mrb[0].mxu0
        %v3508 = vadd.f32 %v3384, %v3507
        %v3509 = vpop.f32.mrb[0].mxu0
        %3510 = vmatprep.mubr.f32.mxu0 0.0
        %3511 = vmatmul.mubr.f32.gmra.mrb[0].mxu0 %v618
        %v3512 = vpop.f32.mrb[0].mxu0
        %v3513 = vadd.f32 %v3384, %v3512
        %v3514 = vpop.f32.mrb[0].mxu0
        %3515 = vmatprep.mubr.f32.mxu0 0.0
        %3516 = vmatmul.mubr.f32.gmra.mrb[0].mxu0 %v619
        %v3517 = vpop.f32.mrb[0].mxu0
        %v3518 = vadd.f32 %v3384, %v3517
        %v3519 = vpop.f32.mrb[0].mxu0
        %3520 = vmatprep.mubr.f32.mxu0 0.0
        %3521 = vmatmul.mubr.f32.gmra.mrb[0].mxu0 %v620
        %v3522 = vpop.f32.mrb[0].mxu0
        %v3523 = vadd.f32 %v3384, %v3522
        %v3524 = vpop.f32.mrb[0].mxu0
        %3525 = vmatprep.mubr.f32.mxu0 0.0
        %3526 = vmatmul.mubr.f32.gmra.mrb[0].mxu0 %v621
        %v3527 = vpop.f32.mrb[0].mxu0
        %v3528 = vadd.f32 %v3384, %v3527
        %v3529 = vpop.f32.mrb[0].mxu0
        %3530 = vdwg.mxu0
        %s3531 = scalar_lea.vmem %s6, 256
        %v3532 = vld [vmem:[%s3531] sm:$0xff]
        %v3533 = vld [vmem:[%s3531 + $0x8] sm:$0xff]
        %v3534 = vld [vmem:[%s3531 + $0x10] sm:$0xff]
        %v3535 = vld [vmem:[%s3531 + $0x18] sm:$0xff]
        %v3536 = vld [vmem:[%s3531 + $0x20] sm:$0xff]
        %v3537 = vld [vmem:[%s3531 + $0x28] sm:$0xff]
        %v3538 = vld [vmem:[%s3531 + $0x30] sm:$0xff]
        %v3539 = vld [vmem:[%s3531 + $0x38] sm:$0xff]
        %v3540 = vld [vmem:[%s3531 + $0x40] sm:$0xff]
        %v3541 = vld [vmem:[%s3531 + $0x48] sm:$0xff]
        %v3542 = vld [vmem:[%s3531 + $0x50] sm:$0xff]
        %v3543 = vld [vmem:[%s3531 + $0x58] sm:$0xff]
        %v3544 = vld [vmem:[%s3531 + $0x60] sm:$0xff]
        %v3545 = vld [vmem:[%s3531 + $0x68] sm:$0xff]
        %v3546 = vld [vmem:[%s3531 + $0x70] sm:$0xff]
        %v3547 = vld [vmem:[%s3531 + $0x78] sm:$0xff]
        %s3548 = scalar_lea.vmem %s7, 2
        %v3549 = vld [vmem:[%s3548] sm:$0x1]
        %v3551 = vlaneseq
        %v3552 = vshrl.u32 %v3551, 7
        %v3553 = vsub.s32 0, %v3552
        %v3554 = vrot.slane %v3549, %v3553
        %3556 = vmatprep.subr.mxu0 0.0
        %3557 = vmatpush1.msra.mxu0 %v3532
        %3558 = vmatprep.subr.mxu0 0.0
        %3559 = vmatpush1.msra.mxu0 %v3533
        %3560 = vmatprep.subr.mxu0 0.0
        %3561 = vmatpush1.msra.mxu0 %v3534
        %3562 = vmatprep.subr.mxu0 0.0
        %3563 = vmatpush1.msra.mxu0 %v3535
        %3564 = vmatprep.subr.mxu0 0.0
        %3565 = vmatpush1.msra.mxu0 %v3536
        %3566 = vmatprep.subr.mxu0 0.0
        %3567 = vmatpush1.msra.mxu0 %v3537
        %3568 = vmatprep.subr.mxu0 0.0
        %3569 = vmatpush1.msra.mxu0 %v3538
        %3570 = vmatprep.subr.mxu0 0.0
        %3571 = vmatpush1.msra.mxu0 %v3539
        %3572 = vmatprep.subr.mxu0 0.0
        %3573 = vmatpush1.msra.mxu0 %v3540
        %3574 = vmatprep.subr.mxu0 0.0
        %3575 = vmatpush1.msra.mxu0 %v3541
        %3576 = vmatprep.subr.mxu0 0.0
        %3577 = vmatpush1.msra.mxu0 %v3542
        %3578 = vmatprep.subr.mxu0 0.0
        %3579 = vmatpush1.msra.mxu0 %v3543
        %3580 = vmatprep.subr.mxu0 0.0
        %3581 = vmatpush1.msra.mxu0 %v3544
        %3582 = vmatprep.subr.mxu0 0.0
        %3583 = vmatpush1.msra.mxu0 %v3545
        %3584 = vmatprep.subr.mxu0 0.0
        %3585 = vmatpush1.msra.mxu0 %v3546
        %3586 = vmatprep.subr.mxu0 0.0
        %3587 = vmatpush1.msra.mxu0 %v3547
        %3588 = vmatprep.subr.mxu0 0.0
        %3589 = vmatpush1.msra.mxu0 0.0
        %3590 = vmatprep.subr.mxu0 0.0
        %3591 = vmatpush1.msra.mxu0 0.0
        %3592 = vmatprep.subr.mxu0 0.0
        %3593 = vmatpush1.msra.mxu0 0.0
        %3594 = vmatprep.subr.mxu0 0.0
        %3595 = vmatpush1.msra.mxu0 0.0
        %3596 = vmatprep.subr.mxu0 0.0
        %3597 = vmatpush1.msra.mxu0 0.0
        %3598 = vmatprep.subr.mxu0 0.0
        %3599 = vmatpush1.msra.mxu0 0.0
        %3600 = vmatprep.subr.mxu0 0.0
        %3601 = vmatpush1.msra.mxu0 0.0
        %3602 = vmatprep.subr.mxu0 0.0
        %3603 = vmatpush1.msra.mxu0 0.0
        %3604 = vmatprep.subr.mxu0 0.0
        %3605 = vmatpush1.msra.mxu0 0.0
        %3606 = vmatprep.subr.mxu0 0.0
        %3607 = vmatpush1.msra.mxu0 0.0
        %3608 = vmatprep.subr.mxu0 0.0
        %3609 = vmatpush1.msra.mxu0 0.0
        %3610 = vmatprep.subr.mxu0 0.0
        %3611 = vmatpush1.msra.mxu0 0.0
        %3612 = vmatprep.subr.mxu0 0.0
        %3613 = vmatpush1.msra.mxu0 0.0
        %3614 = vmatprep.subr.mxu0 0.0
        %3615 = vmatpush1.msra.mxu0 0.0
        %3616 = vmatprep.subr.mxu0 0.0
        %3617 = vmatpush1.msra.mxu0 0.0
        %3618 = vmatprep.subr.mxu0 0.0
        %3619 = vmatpush1.msra.mxu0 0.0
        %3620 = vmatprep.mubr.f32.mxu0 0.0
        %3621 = vmatmul.mubr.f32.gmra.mrb[0].mxu0 %v606
        %v3622 = vpop.f32.mrb[0].mxu0
        %v3623 = vadd.f32 %v3554, %v3622
        %v3624 = vpop.f32.mrb[0].mxu0
        %3625 = vmatprep.mubr.f32.mxu0 0.0
        %3626 = vmatmul.mubr.f32.gmra.mrb[0].mxu0 %v607
        %v3627 = vpop.f32.mrb[0].mxu0
        %v3628 = vadd.f32 %v3554, %v3627
        %v3629 = vpop.f32.mrb[0].mxu0
        %3630 = vmatprep.mubr.f32.mxu0 0.0
        %3631 = vmatmul.mubr.f32.gmra.mrb[0].mxu0 %v608
        %v3632 = vpop.f32.mrb[0].mxu0
        %v3633 = vadd.f32 %v3554, %v3632
        %v3634 = vpop.f32.mrb[0].mxu0
        %3635 = vmatprep.mubr.f32.mxu0 0.0
        %3636 = vmatmul.mubr.f32.gmra.mrb[0].mxu0 %v609
        %v3637 = vpop.f32.mrb[0].mxu0
        %v3638 = vadd.f32 %v3554, %v3637
        %v3639 = vpop.f32.mrb[0].mxu0
        %3640 = vmatprep.mubr.f32.mxu0 0.0
        %3641 = vmatmul.mubr.f32.gmra.mrb[0].mxu0 %v610
        %v3642 = vpop.f32.mrb[0].mxu0
        %v3643 = vadd.f32 %v3554, %v3642
        %v3644 = vpop.f32.mrb[0].mxu0
        %3645 = vmatprep.mubr.f32.mxu0 0.0
        %3646 = vmatmul.mubr.f32.gmra.mrb[0].mxu0 %v611
        %v3647 = vpop.f32.mrb[0].mxu0
        %v3648 = vadd.f32 %v3554, %v3647
        %v3649 = vpop.f32.mrb[0].mxu0
        %3650 = vmatprep.mubr.f32.mxu0 0.0
        %3651 = vmatmul.mubr.f32.gmra.mrb[0].mxu0 %v612
        %v3652 = vpop.f32.mrb[0].mxu0
        %v3653 = vadd.f32 %v3554, %v3652
        %v3654 = vpop.f32.mrb[0].mxu0
        %3655 = vmatprep.mubr.f32.mxu0 0.0
        %3656 = vmatmul.mubr.f32.gmra.mrb[0].mxu0 %v613
        %v3657 = vpop.f32.mrb[0].mxu0
        %v3658 = vadd.f32 %v3554, %v3657
        %v3659 = vpop.f32.mrb[0].mxu0
        %3660 = vmatprep.mubr.f32.mxu0 0.0
        %3661 = vmatmul.mubr.f32.gmra.mrb[0].mxu0 %v614
        %v3662 = vpop.f32.mrb[0].mxu0
        %v3663 = vadd.f32 %v3554, %v3662
        %v3664 = vpop.f32.mrb[0].mxu0
        %3665 = vmatprep.mubr.f32.mxu0 0.0
        %3666 = vmatmul.mubr.f32.gmra.mrb[0].mxu0 %v615
        %v3667 = vpop.f32.mrb[0].mxu0
        %v3668 = vadd.f32 %v3554, %v3667
        %v3669 = vpop.f32.mrb[0].mxu0
        %3670 = vmatprep.mubr.f32.mxu0 0.0
        %3671 = vmatmul.mubr.f32.gmra.mrb[0].mxu0 %v616
        %v3672 = vpop.f32.mrb[0].mxu0
        %v3673 = vadd.f32 %v3554, %v3672
        %v3674 = vpop.f32.mrb[0].mxu0
        %3675 = vmatprep.mubr.f32.mxu0 0.0
        %3676 = vmatmul.mubr.f32.gmra.mrb[0].mxu0 %v617
        %v3677 = vpop.f32.mrb[0].mxu0
        %v3678 = vadd.f32 %v3554, %v3677
        %v3679 = vpop.f32.mrb[0].mxu0
        %3680 = vmatprep.mubr.f32.mxu0 0.0
        %3681 = vmatmul.mubr.f32.gmra.mrb[0].mxu0 %v618
        %v3682 = vpop.f32.mrb[0].mxu0
        %v3683 = vadd.f32 %v3554, %v3682
        %v3684 = vpop.f32.mrb[0].mxu0
        %3685 = vmatprep.mubr.f32.mxu0 0.0
        %3686 = vmatmul.mubr.f32.gmra.mrb[0].mxu0 %v619
        %v3687 = vpop.f32.mrb[0].mxu0
        %v3688 = vadd.f32 %v3554, %v3687
        %v3689 = vpop.f32.mrb[0].mxu0
        %3690 = vmatprep.mubr.f32.mxu0 0.0
        %3691 = vmatmul.mubr.f32.gmra.mrb[0].mxu0 %v620
        %v3692 = vpop.f32.mrb[0].mxu0
        %v3693 = vadd.f32 %v3554, %v3692
        %v3694 = vpop.f32.mrb[0].mxu0
        %3695 = vmatprep.mubr.f32.mxu0 0.0
        %3696 = vmatmul.mubr.f32.gmra.mrb[0].mxu0 %v621
        %v3697 = vpop.f32.mrb[0].mxu0
        %v3698 = vadd.f32 %v3554, %v3697
        %v3699 = vpop.f32.mrb[0].mxu0
        %3700 = vdwg.mxu0
        %v3702 = vsel %vm1161, %v3283, 0
        %v3705 = vsel %vm1161, %v3288, 0
        %v3708 = vsel %vm1161, %v3293, 0
        %v3711 = vsel %vm1161, %v3298, 0
        %v3714 = vsel %vm1161, %v3303, 0
        %v3717 = vsel %vm1161, %v3308, 0
        %v3720 = vsel %vm1161, %v3313, 0
        %v3723 = vsel %vm1161, %v3318, 0
        %v3726 = vsel %vm1161, %v3323, 0
        %v3729 = vsel %vm1161, %v3328, 0
        %v3732 = vsel %vm1161, %v3333, 0
        %v3735 = vsel %vm1161, %v3338, 0
        %v3738 = vsel %vm1161, %v3343, 0
        %v3741 = vsel %vm1161, %v3348, 0
        %v3744 = vsel %vm1161, %v3353, 0
        %v3747 = vsel %vm1161, %v3358, 0
        %v3750 = vsel %vm1161, %v3453, 0
        %v3753 = vsel %vm1161, %v3458, 0
        %v3756 = vsel %vm1161, %v3463, 0
        %v3759 = vsel %vm1161, %v3468, 0
        %v3762 = vsel %vm1161, %v3473, 0
        %v3765 = vsel %vm1161, %v3478, 0
        %v3768 = vsel %vm1161, %v3483, 0
        %v3771 = vsel %vm1161, %v3488, 0
        %v3774 = vsel %vm1161, %v3493, 0
        %v3777 = vsel %vm1161, %v3498, 0
        %v3780 = vsel %vm1161, %v3503, 0
        %v3783 = vsel %vm1161, %v3508, 0
        %v3786 = vsel %vm1161, %v3513, 0
        %v3789 = vsel %vm1161, %v3518, 0
        %v3792 = vsel %vm1161, %v3523, 0
        %v3795 = vsel %vm1161, %v3528, 0
        %3797 = vmatprep.subr.mxu0 0.0
        %3798 = vmatpush1.xpose.msra.mxu0 %v3750
        %3799 = vmatprep.subr.mxu0 0.0
        %3800 = vmatpush1.xpose.msra.mxu0 %v3753
        %3801 = vmatprep.subr.mxu0 0.0
        %3802 = vmatpush1.xpose.msra.mxu0 %v3756
        %3803 = vmatprep.subr.mxu0 0.0
        %3804 = vmatpush1.xpose.msra.mxu0 %v3759
        %3805 = vmatprep.subr.mxu0 0.0
        %3806 = vmatpush1.xpose.msra.mxu0 %v3762
        %3807 = vmatprep.subr.mxu0 0.0
        %3808 = vmatpush1.xpose.msra.mxu0 %v3765
        %3809 = vmatprep.subr.mxu0 0.0
        %3810 = vmatpush1.xpose.msra.mxu0 %v3768
        %3811 = vmatprep.subr.mxu0 0.0
        %3812 = vmatpush1.xpose.msra.mxu0 %v3771
        %3813 = vmatprep.subr.mxu0 0.0
        %3814 = vmatpush1.xpose.msra.mxu0 %v3774
        %3815 = vmatprep.subr.mxu0 0.0
        %3816 = vmatpush1.xpose.msra.mxu0 %v3777
        %3817 = vmatprep.subr.mxu0 0.0
        %3818 = vmatpush1.xpose.msra.mxu0 %v3780
        %3819 = vmatprep.subr.mxu0 0.0
        %3820 = vmatpush1.xpose.msra.mxu0 %v3783
        %3821 = vmatprep.subr.mxu0 0.0
        %3822 = vmatpush1.xpose.msra.mxu0 %v3786
        %3823 = vmatprep.subr.mxu0 0.0
        %3824 = vmatpush1.xpose.msra.mxu0 %v3789
        %3825 = vmatprep.subr.mxu0 0.0
        %3826 = vmatpush1.xpose.msra.mxu0 %v3792
        %3827 = vmatprep.subr.mxu0 0.0
        %3828 = vmatpush1.xpose.msra.mxu0 %v3795
        %3829 = vmatprep.subr.mxu0 0.0
        %3830 = vmatpush1.xpose.msra.mxu0 0.0
        %3831 = vmatprep.subr.mxu0 0.0
        %3832 = vmatpush1.xpose.msra.mxu0 0.0
        %3833 = vmatprep.subr.mxu0 0.0
        %3834 = vmatpush1.xpose.msra.mxu0 0.0
        %3835 = vmatprep.subr.mxu0 0.0
        %3836 = vmatpush1.xpose.msra.mxu0 0.0
        %3837 = vmatprep.subr.mxu0 0.0
        %3838 = vmatpush1.xpose.msra.mxu0 0.0
        %3839 = vmatprep.subr.mxu0 0.0
        %3840 = vmatpush1.xpose.msra.mxu0 0.0
        %3841 = vmatprep.subr.mxu0 0.0
        %3842 = vmatpush1.xpose.msra.mxu0 0.0
        %3843 = vmatprep.subr.mxu0 0.0
        %3844 = vmatpush1.xpose.msra.mxu0 0.0
        %3845 = vmatprep.subr.mxu0 0.0
        %3846 = vmatpush1.xpose.msra.mxu0 0.0
        %3847 = vmatprep.subr.mxu0 0.0
        %3848 = vmatpush1.xpose.msra.mxu0 0.0
        %3849 = vmatprep.subr.mxu0 0.0
        %3850 = vmatpush1.xpose.msra.mxu0 0.0
        %3851 = vmatprep.subr.mxu0 0.0
        %3852 = vmatpush1.xpose.msra.mxu0 0.0
        %3853 = vmatprep.subr.mxu0 0.0
        %3854 = vmatpush1.xpose.msra.mxu0 0.0
        %3855 = vmatprep.subr.mxu0 0.0
        %3856 = vmatpush1.xpose.msra.mxu0 0.0
        %3857 = vmatprep.subr.mxu0 0.0
        %3858 = vmatpush1.xpose.msra.mxu0 0.0
        %3859 = vmatprep.subr.mxu0 0.0
        %3860 = vmatpush1.xpose.msra.mxu0 0.0
        %3861 = vmatprep.mubr.f32.mxu0 0.0
        %3862 = vmatmul.mubr.f32.gmra.mrb[0].mxu0 %v3702
        %v3863 = vpop.f32.mrb[0].mxu0
        %v3864 = vadd.f32 0.0, %v3863
        %v3865 = vpop.f32.mrb[0].mxu0
        %3866 = vmatprep.mubr.f32.mxu0 0.0
        %3867 = vmatmul.mubr.f32.gmra.mrb[0].mxu0 %v3705
        %v3868 = vpop.f32.mrb[0].mxu0
        %v3869 = vadd.f32 0.0, %v3868
        %v3870 = vpop.f32.mrb[0].mxu0
        %3871 = vmatprep.mubr.f32.mxu0 0.0
        %3872 = vmatmul.mubr.f32.gmra.mrb[0].mxu0 %v3708
        %v3873 = vpop.f32.mrb[0].mxu0
        %v3874 = vadd.f32 0.0, %v3873
        %v3875 = vpop.f32.mrb[0].mxu0
        %3876 = vmatprep.mubr.f32.mxu0 0.0
        %3877 = vmatmul.mubr.f32.gmra.mrb[0].mxu0 %v3711
        %v3878 = vpop.f32.mrb[0].mxu0
        %v3879 = vadd.f32 0.0, %v3878
        %v3880 = vpop.f32.mrb[0].mxu0
        %3881 = vmatprep.mubr.f32.mxu0 0.0
        %3882 = vmatmul.mubr.f32.gmra.mrb[0].mxu0 %v3714
        %v3883 = vpop.f32.mrb[0].mxu0
        %v3884 = vadd.f32 0.0, %v3883
        %v3885 = vpop.f32.mrb[0].mxu0
        %3886 = vmatprep.mubr.f32.mxu0 0.0
        %3887 = vmatmul.mubr.f32.gmra.mrb[0].mxu0 %v3717
        %v3888 = vpop.f32.mrb[0].mxu0
        %v3889 = vadd.f32 0.0, %v3888
        %v3890 = vpop.f32.mrb[0].mxu0
        %3891 = vmatprep.mubr.f32.mxu0 0.0
        %3892 = vmatmul.mubr.f32.gmra.mrb[0].mxu0 %v3720
        %v3893 = vpop.f32.mrb[0].mxu0
        %v3894 = vadd.f32 0.0, %v3893
        %v3895 = vpop.f32.mrb[0].mxu0
        %3896 = vmatprep.mubr.f32.mxu0 0.0
        %3897 = vmatmul.mubr.f32.gmra.mrb[0].mxu0 %v3723
        %v3898 = vpop.f32.mrb[0].mxu0
        %v3899 = vadd.f32 0.0, %v3898
        %v3900 = vpop.f32.mrb[0].mxu0
        %3901 = vmatprep.mubr.f32.mxu0 0.0
        %3902 = vmatmul.mubr.f32.gmra.mrb[0].mxu0 %v3726
        %v3903 = vpop.f32.mrb[0].mxu0
        %v3904 = vadd.f32 0.0, %v3903
        %v3905 = vpop.f32.mrb[0].mxu0
        %3906 = vmatprep.mubr.f32.mxu0 0.0
        %3907 = vmatmul.mubr.f32.gmra.mrb[0].mxu0 %v3729
        %v3908 = vpop.f32.mrb[0].mxu0
        %v3909 = vadd.f32 0.0, %v3908
        %v3910 = vpop.f32.mrb[0].mxu0
        %3911 = vmatprep.mubr.f32.mxu0 0.0
        %3912 = vmatmul.mubr.f32.gmra.mrb[0].mxu0 %v3732
        %v3913 = vpop.f32.mrb[0].mxu0
        %v3914 = vadd.f32 0.0, %v3913
        %v3915 = vpop.f32.mrb[0].mxu0
        %3916 = vmatprep.mubr.f32.mxu0 0.0
        %3917 = vmatmul.mubr.f32.gmra.mrb[0].mxu0 %v3735
        %v3918 = vpop.f32.mrb[0].mxu0
        %v3919 = vadd.f32 0.0, %v3918
        %v3920 = vpop.f32.mrb[0].mxu0
        %3921 = vmatprep.mubr.f32.mxu0 0.0
        %3922 = vmatmul.mubr.f32.gmra.mrb[0].mxu0 %v3738
        %v3923 = vpop.f32.mrb[0].mxu0
        %v3924 = vadd.f32 0.0, %v3923
        %v3925 = vpop.f32.mrb[0].mxu0
        %3926 = vmatprep.mubr.f32.mxu0 0.0
        %3927 = vmatmul.mubr.f32.gmra.mrb[0].mxu0 %v3741
        %v3928 = vpop.f32.mrb[0].mxu0
        %v3929 = vadd.f32 0.0, %v3928
        %v3930 = vpop.f32.mrb[0].mxu0
        %3931 = vmatprep.mubr.f32.mxu0 0.0
        %3932 = vmatmul.mubr.f32.gmra.mrb[0].mxu0 %v3744
        %v3933 = vpop.f32.mrb[0].mxu0
        %v3934 = vadd.f32 0.0, %v3933
        %v3935 = vpop.f32.mrb[0].mxu0
        %3936 = vmatprep.mubr.f32.mxu0 0.0
        %3937 = vmatmul.mubr.f32.gmra.mrb[0].mxu0 %v3747
        %v3938 = vpop.f32.mrb[0].mxu0
        %v3939 = vadd.f32 0.0, %v3938
        %v3940 = vpop.f32.mrb[0].mxu0
        %3941 = vdwg.mxu0
        %v3942 = vmul.f32 %v3864, 0.17677669
        %v3943 = vmul.f32 %v3869, 0.17677669
        %v3944 = vmul.f32 %v3874, 0.17677669
        %v3945 = vmul.f32 %v3879, 0.17677669
        %v3946 = vmul.f32 %v3884, 0.17677669
        %v3947 = vmul.f32 %v3889, 0.17677669
        %v3948 = vmul.f32 %v3894, 0.17677669
        %v3949 = vmul.f32 %v3899, 0.17677669
        %v3950 = vmul.f32 %v3904, 0.17677669
        %v3951 = vmul.f32 %v3909, 0.17677669
        %v3952 = vmul.f32 %v3914, 0.17677669
        %v3953 = vmul.f32 %v3919, 0.17677669
        %v3954 = vmul.f32 %v3924, 0.17677669
        %v3955 = vmul.f32 %v3929, 0.17677669
        %v3956 = vmul.f32 %v3934, 0.17677669
        %v3957 = vmul.f32 %v3939, 0.17677669
        %v3958 = vsel %vm641, %v3942, -1e+30
        %v3959 = vsel %vm642, %v3943, -1e+30
        %v3960 = vsel %vm643, %v3944, -1e+30
        %v3961 = vsel %vm644, %v3945, -1e+30
        %v3962 = vsel %vm645, %v3946, -1e+30
        %v3963 = vsel %vm646, %v3947, -1e+30
        %v3964 = vsel %vm647, %v3948, -1e+30
        %v3965 = vsel %vm648, %v3949, -1e+30
        %v3966 = vsel %vm649, %v3950, -1e+30
        %v3967 = vsel %vm650, %v3951, -1e+30
        %v3968 = vsel %vm651, %v3952, -1e+30
        %v3969 = vsel %vm652, %v3953, -1e+30
        %v3970 = vsel %vm653, %v3954, -1e+30
        %v3971 = vsel %vm654, %v3955, -1e+30
        %v3972 = vsel %vm655, %v3956, -1e+30
        %v3973 = vsel %vm656, %v3957, -1e+30
        %3974 = vmax.xlane.f32.xlu0 %v3958
        %v3975 = vpop.xlane.xlu0 %3974
        %3976 = vmax.xlane.f32.xlu0 %v3959
        %v3977 = vpop.xlane.xlu0 %3976
        %3978 = vmax.xlane.f32.xlu0 %v3960
        %v3979 = vpop.xlane.xlu0 %3978
        %3980 = vmax.xlane.f32.xlu0 %v3961
        %v3981 = vpop.xlane.xlu0 %3980
        %3982 = vmax.xlane.f32.xlu0 %v3962
        %v3983 = vpop.xlane.xlu0 %3982
        %3984 = vmax.xlane.f32.xlu0 %v3963
        %v3985 = vpop.xlane.xlu0 %3984
        %3986 = vmax.xlane.f32.xlu0 %v3964
        %v3987 = vpop.xlane.xlu0 %3986
        %3988 = vmax.xlane.f32.xlu0 %v3965
        %v3989 = vpop.xlane.xlu0 %3988
        %3990 = vmax.xlane.f32.xlu0 %v3966
        %v3991 = vpop.xlane.xlu0 %3990
        %3992 = vmax.xlane.f32.xlu0 %v3967
        %v3993 = vpop.xlane.xlu0 %3992
        %3994 = vmax.xlane.f32.xlu0 %v3968
        %v3995 = vpop.xlane.xlu0 %3994
        %3996 = vmax.xlane.f32.xlu0 %v3969
        %v3997 = vpop.xlane.xlu0 %3996
        %3998 = vmax.xlane.f32.xlu0 %v3970
        %v3999 = vpop.xlane.xlu0 %3998
        %4000 = vmax.xlane.f32.xlu0 %v3971
        %v4001 = vpop.xlane.xlu0 %4000
        %4002 = vmax.xlane.f32.xlu0 %v3972
        %v4003 = vpop.xlane.xlu0 %4002
        %4004 = vmax.xlane.f32.xlu0 %v3973
        %v4005 = vpop.xlane.xlu0 %4004
        %v4006 = vsub.f32 %v3958, %v3975
        %v4007 = vsub.f32 %v3959, %v3977
        %v4008 = vsub.f32 %v3960, %v3979
        %v4009 = vsub.f32 %v3961, %v3981
        %v4010 = vsub.f32 %v3962, %v3983
        %v4011 = vsub.f32 %v3963, %v3985
        %v4012 = vsub.f32 %v3964, %v3987
        %v4013 = vsub.f32 %v3965, %v3989
        %v4014 = vsub.f32 %v3966, %v3991
        %v4015 = vsub.f32 %v3967, %v3993
        %v4016 = vsub.f32 %v3968, %v3995
        %v4017 = vsub.f32 %v3969, %v3997
        %v4018 = vsub.f32 %v3970, %v3999
        %v4019 = vsub.f32 %v3971, %v4001
        %v4020 = vsub.f32 %v3972, %v4003
        %v4021 = vsub.f32 %v3973, %v4005
        %v4022 = vmul.f32 %v4006, 1.442695
        %v4023 = vpow.pop %v4022
        %v4024 = vmul.f32 %v4007, 1.442695
        %v4025 = vpow.pop %v4024
        %v4026 = vmul.f32 %v4008, 1.442695
        %v4027 = vpow.pop %v4026
        %v4028 = vmul.f32 %v4009, 1.442695
        %v4029 = vpow.pop %v4028
        %v4030 = vmul.f32 %v4010, 1.442695
        %v4031 = vpow.pop %v4030
        %v4032 = vmul.f32 %v4011, 1.442695
        %v4033 = vpow.pop %v4032
        %v4034 = vmul.f32 %v4012, 1.442695
        %v4035 = vpow.pop %v4034
        %v4036 = vmul.f32 %v4013, 1.442695
        %v4037 = vpow.pop %v4036
        %v4038 = vmul.f32 %v4014, 1.442695
        %v4039 = vpow.pop %v4038
        %v4040 = vmul.f32 %v4015, 1.442695
        %v4041 = vpow.pop %v4040
        %v4042 = vmul.f32 %v4016, 1.442695
        %v4043 = vpow.pop %v4042
        %v4044 = vmul.f32 %v4017, 1.442695
        %v4045 = vpow.pop %v4044
        %v4046 = vmul.f32 %v4018, 1.442695
        %v4047 = vpow.pop %v4046
        %v4048 = vmul.f32 %v4019, 1.442695
        %v4049 = vpow.pop %v4048
        %v4050 = vmul.f32 %v4020, 1.442695
        %v4051 = vpow.pop %v4050
        %v4052 = vmul.f32 %v4021, 1.442695
        %v4053 = vpow.pop %v4052
        %4054 = vadd.xlane.f32.xlu0 %v4023
        %v4055 = vpop.xlane.xlu0 %4054
        %4056 = vadd.xlane.f32.xlu0 %v4025
        %v4057 = vpop.xlane.xlu0 %4056
        %4058 = vadd.xlane.f32.xlu0 %v4027
        %v4059 = vpop.xlane.xlu0 %4058
        %4060 = vadd.xlane.f32.xlu0 %v4029
        %v4061 = vpop.xlane.xlu0 %4060
        %4062 = vadd.xlane.f32.xlu0 %v4031
        %v4063 = vpop.xlane.xlu0 %4062
        %4064 = vadd.xlane.f32.xlu0 %v4033
        %v4065 = vpop.xlane.xlu0 %4064
        %4066 = vadd.xlane.f32.xlu0 %v4035
        %v4067 = vpop.xlane.xlu0 %4066
        %4068 = vadd.xlane.f32.xlu0 %v4037
        %v4069 = vpop.xlane.xlu0 %4068
        %4070 = vadd.xlane.f32.xlu0 %v4039
        %v4071 = vpop.xlane.xlu0 %4070
        %4072 = vadd.xlane.f32.xlu0 %v4041
        %v4073 = vpop.xlane.xlu0 %4072
        %4074 = vadd.xlane.f32.xlu0 %v4043
        %v4075 = vpop.xlane.xlu0 %4074
        %4076 = vadd.xlane.f32.xlu0 %v4045
        %v4077 = vpop.xlane.xlu0 %4076
        %4078 = vadd.xlane.f32.xlu0 %v4047
        %v4079 = vpop.xlane.xlu0 %4078
        %4080 = vadd.xlane.f32.xlu0 %v4049
        %v4081 = vpop.xlane.xlu0 %4080
        %4082 = vadd.xlane.f32.xlu0 %v4051
        %v4083 = vpop.xlane.xlu0 %4082
        %4084 = vadd.xlane.f32.xlu0 %v4053
        %v4085 = vpop.xlane.xlu0 %4084
        %v4086 = vrcp.pop %v4055
        %v4087 = vmul.f32 %v4023, %v4086
        %v4088 = vrcp.pop %v4057
        %v4089 = vmul.f32 %v4025, %v4088
        %v4090 = vrcp.pop %v4059
        %v4091 = vmul.f32 %v4027, %v4090
        %v4092 = vrcp.pop %v4061
        %v4093 = vmul.f32 %v4029, %v4092
        %v4094 = vrcp.pop %v4063
        %v4095 = vmul.f32 %v4031, %v4094
        %v4096 = vrcp.pop %v4065
        %v4097 = vmul.f32 %v4033, %v4096
        %v4098 = vrcp.pop %v4067
        %v4099 = vmul.f32 %v4035, %v4098
        %v4100 = vrcp.pop %v4069
        %v4101 = vmul.f32 %v4037, %v4100
        %v4102 = vrcp.pop %v4071
        %v4103 = vmul.f32 %v4039, %v4102
        %v4104 = vrcp.pop %v4073
        %v4105 = vmul.f32 %v4041, %v4104
        %v4106 = vrcp.pop %v4075
        %v4107 = vmul.f32 %v4043, %v4106
        %v4108 = vrcp.pop %v4077
        %v4109 = vmul.f32 %v4045, %v4108
        %v4110 = vrcp.pop %v4079
        %v4111 = vmul.f32 %v4047, %v4110
        %v4112 = vrcp.pop %v4081
        %v4113 = vmul.f32 %v4049, %v4112
        %v4114 = vrcp.pop %v4083
        %v4115 = vmul.f32 %v4051, %v4114
        %v4116 = vrcp.pop %v4085
        %v4117 = vmul.f32 %v4053, %v4116
        %4118 = vmatprep.subr.mxu0 0.0
        %4119 = vmatpush1.msra.mxu0 %v3623
        %4120 = vmatprep.subr.mxu0 0.0
        %4121 = vmatpush1.msra.mxu0 %v3628
        %4122 = vmatprep.subr.mxu0 0.0
        %4123 = vmatpush1.msra.mxu0 %v3633
        %4124 = vmatprep.subr.mxu0 0.0
        %4125 = vmatpush1.msra.mxu0 %v3638
        %4126 = vmatprep.subr.mxu0 0.0
        %4127 = vmatpush1.msra.mxu0 %v3643
        %4128 = vmatprep.subr.mxu0 0.0
        %4129 = vmatpush1.msra.mxu0 %v3648
        %4130 = vmatprep.subr.mxu0 0.0
        %4131 = vmatpush1.msra.mxu0 %v3653
        %4132 = vmatprep.subr.mxu0 0.0
        %4133 = vmatpush1.msra.mxu0 %v3658
        %4134 = vmatprep.subr.mxu0 0.0
        %4135 = vmatpush1.msra.mxu0 %v3663
        %4136 = vmatprep.subr.mxu0 0.0
        %4137 = vmatpush1.msra.mxu0 %v3668
        %4138 = vmatprep.subr.mxu0 0.0
        %4139 = vmatpush1.msra.mxu0 %v3673
        %4140 = vmatprep.subr.mxu0 0.0
        %4141 = vmatpush1.msra.mxu0 %v3678
        %4142 = vmatprep.subr.mxu0 0.0
        %4143 = vmatpush1.msra.mxu0 %v3683
        %4144 = vmatprep.subr.mxu0 0.0
        %4145 = vmatpush1.msra.mxu0 %v3688
        %4146 = vmatprep.subr.mxu0 0.0
        %4147 = vmatpush1.msra.mxu0 %v3693
        %4148 = vmatprep.subr.mxu0 0.0
        %4149 = vmatpush1.msra.mxu0 %v3698
        %4150 = vmatprep.subr.mxu0 0.0
        %4151 = vmatpush1.msra.mxu0 0.0
        %4152 = vmatprep.subr.mxu0 0.0
        %4153 = vmatpush1.msra.mxu0 0.0
        %4154 = vmatprep.subr.mxu0 0.0
        %4155 = vmatpush1.msra.mxu0 0.0
        %4156 = vmatprep.subr.mxu0 0.0
        %4157 = vmatpush1.msra.mxu0 0.0
        %4158 = vmatprep.subr.mxu0 0.0
        %4159 = vmatpush1.msra.mxu0 0.0
        %4160 = vmatprep.subr.mxu0 0.0
        %4161 = vmatpush1.msra.mxu0 0.0
        %4162 = vmatprep.subr.mxu0 0.0
        %4163 = vmatpush1.msra.mxu0 0.0
        %4164 = vmatprep.subr.mxu0 0.0
        %4165 = vmatpush1.msra.mxu0 0.0
        %4166 = vmatprep.subr.mxu0 0.0
        %4167 = vmatpush1.msra.mxu0 0.0
        %4168 = vmatprep.subr.mxu0 0.0
        %4169 = vmatpush1.msra.mxu0 0.0
        %4170 = vmatprep.subr.mxu0 0.0
        %4171 = vmatpush1.msra.mxu0 0.0
        %4172 = vmatprep.subr.mxu0 0.0
        %4173 = vmatpush1.msra.mxu0 0.0
        %4174 = vmatprep.subr.mxu0 0.0
        %4175 = vmatpush1.msra.mxu0 0.0
        %4176 = vmatprep.subr.mxu0 0.0
        %4177 = vmatpush1.msra.mxu0 0.0
        %4178 = vmatprep.subr.mxu0 0.0
        %4179 = vmatpush1.msra.mxu0 0.0
        %4180 = vmatprep.subr.mxu0 0.0
        %4181 = vmatpush1.msra.mxu0 0.0
        %4182 = vmatprep.mubr.f32.mxu0 0.0
        %4183 = vmatmul.mubr.f32.gmra.mrb[0].mxu0 %v4087
        %v4184 = vpop.f32.mrb[0].mxu0
        %v4185 = vadd.f32 0.0, %v4184
        %v4186 = vpop.f32.mrb[0].mxu0
        %4187 = vmatprep.mubr.f32.mxu0 0.0
        %4188 = vmatmul.mubr.f32.gmra.mrb[0].mxu0 %v4089
        %v4189 = vpop.f32.mrb[0].mxu0
        %v4190 = vadd.f32 0.0, %v4189
        %v4191 = vpop.f32.mrb[0].mxu0
        %4192 = vmatprep.mubr.f32.mxu0 0.0
        %4193 = vmatmul.mubr.f32.gmra.mrb[0].mxu0 %v4091
        %v4194 = vpop.f32.mrb[0].mxu0
        %v4195 = vadd.f32 0.0, %v4194
        %v4196 = vpop.f32.mrb[0].mxu0
        %4197 = vmatprep.mubr.f32.mxu0 0.0
        %4198 = vmatmul.mubr.f32.gmra.mrb[0].mxu0 %v4093
        %v4199 = vpop.f32.mrb[0].mxu0
        %v4200 = vadd.f32 0.0, %v4199
        %v4201 = vpop.f32.mrb[0].mxu0
        %4202 = vmatprep.mubr.f32.mxu0 0.0
        %4203 = vmatmul.mubr.f32.gmra.mrb[0].mxu0 %v4095
        %v4204 = vpop.f32.mrb[0].mxu0
        %v4205 = vadd.f32 0.0, %v4204
        %v4206 = vpop.f32.mrb[0].mxu0
        %4207 = vmatprep.mubr.f32.mxu0 0.0
        %4208 = vmatmul.mubr.f32.gmra.mrb[0].mxu0 %v4097
        %v4209 = vpop.f32.mrb[0].mxu0
        %v4210 = vadd.f32 0.0, %v4209
        %v4211 = vpop.f32.mrb[0].mxu0
        %4212 = vmatprep.mubr.f32.mxu0 0.0
        %4213 = vmatmul.mubr.f32.gmra.mrb[0].mxu0 %v4099
        %v4214 = vpop.f32.mrb[0].mxu0
        %v4215 = vadd.f32 0.0, %v4214
        %v4216 = vpop.f32.mrb[0].mxu0
        %4217 = vmatprep.mubr.f32.mxu0 0.0
        %4218 = vmatmul.mubr.f32.gmra.mrb[0].mxu0 %v4101
        %v4219 = vpop.f32.mrb[0].mxu0
        %v4220 = vadd.f32 0.0, %v4219
        %v4221 = vpop.f32.mrb[0].mxu0
        %4222 = vmatprep.mubr.f32.mxu0 0.0
        %4223 = vmatmul.mubr.f32.gmra.mrb[0].mxu0 %v4103
        %v4224 = vpop.f32.mrb[0].mxu0
        %v4225 = vadd.f32 0.0, %v4224
        %v4226 = vpop.f32.mrb[0].mxu0
        %4227 = vmatprep.mubr.f32.mxu0 0.0
        %4228 = vmatmul.mubr.f32.gmra.mrb[0].mxu0 %v4105
        %v4229 = vpop.f32.mrb[0].mxu0
        %v4230 = vadd.f32 0.0, %v4229
        %v4231 = vpop.f32.mrb[0].mxu0
        %4232 = vmatprep.mubr.f32.mxu0 0.0
        %4233 = vmatmul.mubr.f32.gmra.mrb[0].mxu0 %v4107
        %v4234 = vpop.f32.mrb[0].mxu0
        %v4235 = vadd.f32 0.0, %v4234
        %v4236 = vpop.f32.mrb[0].mxu0
        %4237 = vmatprep.mubr.f32.mxu0 0.0
        %4238 = vmatmul.mubr.f32.gmra.mrb[0].mxu0 %v4109
        %v4239 = vpop.f32.mrb[0].mxu0
        %v4240 = vadd.f32 0.0, %v4239
        %v4241 = vpop.f32.mrb[0].mxu0
        %4242 = vmatprep.mubr.f32.mxu0 0.0
        %4243 = vmatmul.mubr.f32.gmra.mrb[0].mxu0 %v4111
        %v4244 = vpop.f32.mrb[0].mxu0
        %v4245 = vadd.f32 0.0, %v4244
        %v4246 = vpop.f32.mrb[0].mxu0
        %4247 = vmatprep.mubr.f32.mxu0 0.0
        %4248 = vmatmul.mubr.f32.gmra.mrb[0].mxu0 %v4113
        %v4249 = vpop.f32.mrb[0].mxu0
        %v4250 = vadd.f32 0.0, %v4249
        %v4251 = vpop.f32.mrb[0].mxu0
        %4252 = vmatprep.mubr.f32.mxu0 0.0
        %4253 = vmatmul.mubr.f32.gmra.mrb[0].mxu0 %v4115
        %v4254 = vpop.f32.mrb[0].mxu0
        %v4255 = vadd.f32 0.0, %v4254
        %v4256 = vpop.f32.mrb[0].mxu0
        %4257 = vmatprep.mubr.f32.mxu0 0.0
        %4258 = vmatmul.mubr.f32.gmra.mrb[0].mxu0 %v4117
        %v4259 = vpop.f32.mrb[0].mxu0
        %v4260 = vadd.f32 0.0, %v4259
        %v4261 = vpop.f32.mrb[0].mxu0
        %4262 = vdwg.mxu0
        %s4263 = scalar_lea.vmem %s8, 64
        %v4264 = vld [vmem:[%s4263] sm:$0xff]
        %v4265 = vld [vmem:[%s4263 + $0x8] sm:$0xff]
        %v4266 = vld [vmem:[%s4263 + $0x10] sm:$0xff]
        %v4267 = vld [vmem:[%s4263 + $0x18] sm:$0xff]
        %v4269 = vsel %vm1161, %v4185, 0
        %v4272 = vsel %vm1161, %v4190, 0
        %v4275 = vsel %vm1161, %v4195, 0
        %v4278 = vsel %vm1161, %v4200, 0
        %v4281 = vsel %vm1161, %v4205, 0
        %v4284 = vsel %vm1161, %v4210, 0
        %v4287 = vsel %vm1161, %v4215, 0
        %v4290 = vsel %vm1161, %v4220, 0
        %v4293 = vsel %vm1161, %v4225, 0
        %v4296 = vsel %vm1161, %v4230, 0
        %v4299 = vsel %vm1161, %v4235, 0
        %v4302 = vsel %vm1161, %v4240, 0
        %v4305 = vsel %vm1161, %v4245, 0
        %v4308 = vsel %vm1161, %v4250, 0
        %v4311 = vsel %vm1161, %v4255, 0
        %v4314 = vsel %vm1161, %v4260, 0
        %4316 = vmatprep.subr.mxu0 0.0
        %4317 = vmatpush1.msra.mxu0 %v4264
        %4318 = vmatprep.subr.mxu0 0.0
        %4319 = vmatpush1.msra.mxu0 %v4265
        %4320 = vmatprep.subr.mxu0 0.0
        %4321 = vmatpush1.msra.mxu0 %v4266
        %4322 = vmatprep.subr.mxu0 0.0
        %4323 = vmatpush1.msra.mxu0 %v4267
        %4324 = vmatprep.subr.mxu0 0.0
        %4325 = vmatpush1.msra.mxu0 0.0
        %4326 = vmatprep.subr.mxu0 0.0
        %4327 = vmatpush1.msra.mxu0 0.0
        %4328 = vmatprep.subr.mxu0 0.0
        %4329 = vmatpush1.msra.mxu0 0.0
        %4330 = vmatprep.subr.mxu0 0.0
        %4331 = vmatpush1.msra.mxu0 0.0
        %4332 = vmatprep.subr.mxu0 0.0
        %4333 = vmatpush1.msra.mxu0 0.0
        %4334 = vmatprep.subr.mxu0 0.0
        %4335 = vmatpush1.msra.mxu0 0.0
        %4336 = vmatprep.subr.mxu0 0.0
        %4337 = vmatpush1.msra.mxu0 0.0
        %4338 = vmatprep.subr.mxu0 0.0
        %4339 = vmatpush1.msra.mxu0 0.0
        %4340 = vmatprep.subr.mxu0 0.0
        %4341 = vmatpush1.msra.mxu0 0.0
        %4342 = vmatprep.subr.mxu0 0.0
        %4343 = vmatpush1.msra.mxu0 0.0
        %4344 = vmatprep.subr.mxu0 0.0
        %4345 = vmatpush1.msra.mxu0 0.0
        %4346 = vmatprep.subr.mxu0 0.0
        %4347 = vmatpush1.msra.mxu0 0.0
        %4348 = vmatprep.subr.mxu0 0.0
        %4349 = vmatpush1.msra.mxu0 0.0
        %4350 = vmatprep.subr.mxu0 0.0
        %4351 = vmatpush1.msra.mxu0 0.0
        %4352 = vmatprep.subr.mxu0 0.0
        %4353 = vmatpush1.msra.mxu0 0.0
        %4354 = vmatprep.subr.mxu0 0.0
        %4355 = vmatpush1.msra.mxu0 0.0
        %4356 = vmatprep.subr.mxu0 0.0
        %4357 = vmatpush1.msra.mxu0 0.0
        %4358 = vmatprep.subr.mxu0 0.0
        %4359 = vmatpush1.msra.mxu0 0.0
        %4360 = vmatprep.subr.mxu0 0.0
        %4361 = vmatpush1.msra.mxu0 0.0
        %4362 = vmatprep.subr.mxu0 0.0
        %4363 = vmatpush1.msra.mxu0 0.0
        %4364 = vmatprep.subr.mxu0 0.0
        %4365 = vmatpush1.msra.mxu0 0.0
        %4366 = vmatprep.subr.mxu0 0.0
        %4367 = vmatpush1.msra.mxu0 0.0
        %4368 = vmatprep.subr.mxu0 0.0
        %4369 = vmatpush1.msra.mxu0 0.0
        %4370 = vmatprep.subr.mxu0 0.0
        %4371 = vmatpush1.msra.mxu0 0.0
        %4372 = vmatprep.subr.mxu0 0.0
        %4373 = vmatpush1.msra.mxu0 0.0
        %4374 = vmatprep.subr.mxu0 0.0
        %4375 = vmatpush1.msra.mxu0 0.0
        %4376 = vmatprep.subr.mxu0 0.0
        %4377 = vmatpush1.msra.mxu0 0.0
        %4378 = vmatprep.subr.mxu0 0.0
        %4379 = vmatpush1.msra.mxu0 0.0
        %4380 = vmatprep.mubr.f32.mxu0 0.0
        %4381 = vmatmul.mubr.f32.gmra.mrb[0].mxu0 %v4269
        %v4382 = vpop.f32.mrb[0].mxu0
        %v4383 = vadd.f32 0.0, %v4382
        %v4384 = vpop.f32.mrb[0].mxu0
        %4385 = vmatprep.mubr.f32.mxu0 0.0
        %4386 = vmatmul.mubr.f32.gmra.mrb[0].mxu0 %v4272
        %v4387 = vpop.f32.mrb[0].mxu0
        %v4388 = vadd.f32 0.0, %v4387
        %v4389 = vpop.f32.mrb[0].mxu0
        %4390 = vmatprep.mubr.f32.mxu0 0.0
        %4391 = vmatmul.mubr.f32.gmra.mrb[0].mxu0 %v4275
        %v4392 = vpop.f32.mrb[0].mxu0
        %v4393 = vadd.f32 0.0, %v4392
        %v4394 = vpop.f32.mrb[0].mxu0
        %4395 = vmatprep.mubr.f32.mxu0 0.0
        %4396 = vmatmul.mubr.f32.gmra.mrb[0].mxu0 %v4278
        %v4397 = vpop.f32.mrb[0].mxu0
        %v4398 = vadd.f32 0.0, %v4397
        %v4399 = vpop.f32.mrb[0].mxu0
        %4400 = vmatprep.mubr.f32.mxu0 0.0
        %4401 = vmatmul.mubr.f32.gmra.mrb[0].mxu0 %v4281
        %v4402 = vpop.f32.mrb[0].mxu0
        %v4403 = vadd.f32 0.0, %v4402
        %v4404 = vpop.f32.mrb[0].mxu0
        %4405 = vmatprep.mubr.f32.mxu0 0.0
        %4406 = vmatmul.mubr.f32.gmra.mrb[0].mxu0 %v4284
        %v4407 = vpop.f32.mrb[0].mxu0
        %v4408 = vadd.f32 0.0, %v4407
        %v4409 = vpop.f32.mrb[0].mxu0
        %4410 = vmatprep.mubr.f32.mxu0 0.0
        %4411 = vmatmul.mubr.f32.gmra.mrb[0].mxu0 %v4287
        %v4412 = vpop.f32.mrb[0].mxu0
        %v4413 = vadd.f32 0.0, %v4412
        %v4414 = vpop.f32.mrb[0].mxu0
        %4415 = vmatprep.mubr.f32.mxu0 0.0
        %4416 = vmatmul.mubr.f32.gmra.mrb[0].mxu0 %v4290
        %v4417 = vpop.f32.mrb[0].mxu0
        %v4418 = vadd.f32 0.0, %v4417
        %v4419 = vpop.f32.mrb[0].mxu0
        %4420 = vmatprep.mubr.f32.mxu0 0.0
        %4421 = vmatmul.mubr.f32.gmra.mrb[0].mxu0 %v4293
        %v4422 = vpop.f32.mrb[0].mxu0
        %v4423 = vadd.f32 0.0, %v4422
        %v4424 = vpop.f32.mrb[0].mxu0
        %4425 = vmatprep.mubr.f32.mxu0 0.0
        %4426 = vmatmul.mubr.f32.gmra.mrb[0].mxu0 %v4296
        %v4427 = vpop.f32.mrb[0].mxu0
        %v4428 = vadd.f32 0.0, %v4427
        %v4429 = vpop.f32.mrb[0].mxu0
        %4430 = vmatprep.mubr.f32.mxu0 0.0
        %4431 = vmatmul.mubr.f32.gmra.mrb[0].mxu0 %v4299
        %v4432 = vpop.f32.mrb[0].mxu0
        %v4433 = vadd.f32 0.0, %v4432
        %v4434 = vpop.f32.mrb[0].mxu0
        %4435 = vmatprep.mubr.f32.mxu0 0.0
        %4436 = vmatmul.mubr.f32.gmra.mrb[0].mxu0 %v4302
        %v4437 = vpop.f32.mrb[0].mxu0
        %v4438 = vadd.f32 0.0, %v4437
        %v4439 = vpop.f32.mrb[0].mxu0
        %4440 = vmatprep.mubr.f32.mxu0 0.0
        %4441 = vmatmul.mubr.f32.gmra.mrb[0].mxu0 %v4305
        %v4442 = vpop.f32.mrb[0].mxu0
        %v4443 = vadd.f32 0.0, %v4442
        %v4444 = vpop.f32.mrb[0].mxu0
        %4445 = vmatprep.mubr.f32.mxu0 0.0
        %4446 = vmatmul.mubr.f32.gmra.mrb[0].mxu0 %v4308
        %v4447 = vpop.f32.mrb[0].mxu0
        %v4448 = vadd.f32 0.0, %v4447
        %v4449 = vpop.f32.mrb[0].mxu0
        %4450 = vmatprep.mubr.f32.mxu0 0.0
        %4451 = vmatmul.mubr.f32.gmra.mrb[0].mxu0 %v4311
        %v4452 = vpop.f32.mrb[0].mxu0
        %v4453 = vadd.f32 0.0, %v4452
        %v4454 = vpop.f32.mrb[0].mxu0
        %4455 = vmatprep.mubr.f32.mxu0 0.0
        %4456 = vmatmul.mubr.f32.gmra.mrb[0].mxu0 %v4314
        %v4457 = vpop.f32.mrb[0].mxu0
        %v4458 = vadd.f32 0.0, %v4457
        %v4459 = vpop.f32.mrb[0].mxu0
        %4460 = vdwg.mxu0
        %v4461 = vadd.f32 %v3113, %v4383
        %v4462 = vadd.f32 %v3118, %v4388
        %v4463 = vadd.f32 %v3123, %v4393
        %v4464 = vadd.f32 %v3128, %v4398
        %v4465 = vadd.f32 %v3133, %v4403
        %v4466 = vadd.f32 %v3138, %v4408
        %v4467 = vadd.f32 %v3143, %v4413
        %v4468 = vadd.f32 %v3148, %v4418
        %v4469 = vadd.f32 %v3153, %v4423
        %v4470 = vadd.f32 %v3158, %v4428
        %v4471 = vadd.f32 %v3163, %v4433
        %v4472 = vadd.f32 %v3168, %v4438
        %v4473 = vadd.f32 %v3173, %v4443
        %v4474 = vadd.f32 %v3178, %v4448
        %v4475 = vadd.f32 %v3183, %v4453
        %v4476 = vadd.f32 %v3188, %v4458
        %s4477 = scalar_lea.vmem %s2, 384
        %v4478 = vld [vmem:[%s4477] sm:$0xff]
        %v4479 = vld [vmem:[%s4477 + $0x8] sm:$0xff]
        %v4480 = vld [vmem:[%s4477 + $0x10] sm:$0xff]
        %v4481 = vld [vmem:[%s4477 + $0x18] sm:$0xff]
        %v4482 = vld [vmem:[%s4477 + $0x20] sm:$0xff]
        %v4483 = vld [vmem:[%s4477 + $0x28] sm:$0xff]
        %v4484 = vld [vmem:[%s4477 + $0x30] sm:$0xff]
        %v4485 = vld [vmem:[%s4477 + $0x38] sm:$0xff]
        %v4486 = vld [vmem:[%s4477 + $0x40] sm:$0xff]
        %v4487 = vld [vmem:[%s4477 + $0x48] sm:$0xff]
        %v4488 = vld [vmem:[%s4477 + $0x50] sm:$0xff]
        %v4489 = vld [vmem:[%s4477 + $0x58] sm:$0xff]
        %v4490 = vld [vmem:[%s4477 + $0x60] sm:$0xff]
        %v4491 = vld [vmem:[%s4477 + $0x68] sm:$0xff]
        %v4492 = vld [vmem:[%s4477 + $0x70] sm:$0xff]
        %v4493 = vld [vmem:[%s4477 + $0x78] sm:$0xff]
        %s4494 = scalar_lea.vmem %s3, 3
        %v4495 = vld [vmem:[%s4494] sm:$0x1]
        %v4497 = vlaneseq
        %v4498 = vshrl.u32 %v4497, 7
        %v4499 = vsub.s32 0, %v4498
        %v4500 = vrot.slane %v4495, %v4499
        %4502 = vmatprep.subr.mxu0 0.0
        %4503 = vmatpush1.msra.mxu0 %v4478
        %4504 = vmatprep.subr.mxu0 0.0
        %4505 = vmatpush1.msra.mxu0 %v4479
        %4506 = vmatprep.subr.mxu0 0.0
        %4507 = vmatpush1.msra.mxu0 %v4480
        %4508 = vmatprep.subr.mxu0 0.0
        %4509 = vmatpush1.msra.mxu0 %v4481
        %4510 = vmatprep.subr.mxu0 0.0
        %4511 = vmatpush1.msra.mxu0 %v4482
        %4512 = vmatprep.subr.mxu0 0.0
        %4513 = vmatpush1.msra.mxu0 %v4483
        %4514 = vmatprep.subr.mxu0 0.0
        %4515 = vmatpush1.msra.mxu0 %v4484
        %4516 = vmatprep.subr.mxu0 0.0
        %4517 = vmatpush1.msra.mxu0 %v4485
        %4518 = vmatprep.subr.mxu0 0.0
        %4519 = vmatpush1.msra.mxu0 %v4486
        %4520 = vmatprep.subr.mxu0 0.0
        %4521 = vmatpush1.msra.mxu0 %v4487
        %4522 = vmatprep.subr.mxu0 0.0
        %4523 = vmatpush1.msra.mxu0 %v4488
        %4524 = vmatprep.subr.mxu0 0.0
        %4525 = vmatpush1.msra.mxu0 %v4489
        %4526 = vmatprep.subr.mxu0 0.0
        %4527 = vmatpush1.msra.mxu0 %v4490
        %4528 = vmatprep.subr.mxu0 0.0
        %4529 = vmatpush1.msra.mxu0 %v4491
        %4530 = vmatprep.subr.mxu0 0.0
        %4531 = vmatpush1.msra.mxu0 %v4492
        %4532 = vmatprep.subr.mxu0 0.0
        %4533 = vmatpush1.msra.mxu0 %v4493
        %4534 = vmatprep.subr.mxu0 0.0
        %4535 = vmatpush1.msra.mxu0 0.0
        %4536 = vmatprep.subr.mxu0 0.0
        %4537 = vmatpush1.msra.mxu0 0.0
        %4538 = vmatprep.subr.mxu0 0.0
        %4539 = vmatpush1.msra.mxu0 0.0
        %4540 = vmatprep.subr.mxu0 0.0
        %4541 = vmatpush1.msra.mxu0 0.0
        %4542 = vmatprep.subr.mxu0 0.0
        %4543 = vmatpush1.msra.mxu0 0.0
        %4544 = vmatprep.subr.mxu0 0.0
        %4545 = vmatpush1.msra.mxu0 0.0
        %4546 = vmatprep.subr.mxu0 0.0
        %4547 = vmatpush1.msra.mxu0 0.0
        %4548 = vmatprep.subr.mxu0 0.0
        %4549 = vmatpush1.msra.mxu0 0.0
        %4550 = vmatprep.subr.mxu0 0.0
        %4551 = vmatpush1.msra.mxu0 0.0
        %4552 = vmatprep.subr.mxu0 0.0
        %4553 = vmatpush1.msra.mxu0 0.0
        %4554 = vmatprep.subr.mxu0 0.0
        %4555 = vmatpush1.msra.mxu0 0.0
        %4556 = vmatprep.subr.mxu0 0.0
        %4557 = vmatpush1.msra.mxu0 0.0
        %4558 = vmatprep.subr.mxu0 0.0
        %4559 = vmatpush1.msra.mxu0 0.0
        %4560 = vmatprep.subr.mxu0 0.0
        %4561 = vmatpush1.msra.mxu0 0.0
        %4562 = vmatprep.subr.mxu0 0.0
        %4563 = vmatpush1.msra.mxu0 0.0
        %4564 = vmatprep.subr.mxu0 0.0
        %4565 = vmatpush1.msra.mxu0 0.0
        %4566 = vmatprep.mubr.f32.mxu0 0.0
        %4567 = vmatmul.mubr.f32.gmra.mrb[0].mxu0 %v606
        %v4568 = vpop.f32.mrb[0].mxu0
        %v4569 = vadd.f32 %v4500, %v4568
        %v4570 = vpop.f32.mrb[0].mxu0
        %4571 = vmatprep.mubr.f32.mxu0 0.0
        %4572 = vmatmul.mubr.f32.gmra.mrb[0].mxu0 %v607
        %v4573 = vpop.f32.mrb[0].mxu0
        %v4574 = vadd.f32 %v4500, %v4573
        %v4575 = vpop.f32.mrb[0].mxu0
        %4576 = vmatprep.mubr.f32.mxu0 0.0
        %4577 = vmatmul.mubr.f32.gmra.mrb[0].mxu0 %v608
        %v4578 = vpop.f32.mrb[0].mxu0
        %v4579 = vadd.f32 %v4500, %v4578
        %v4580 = vpop.f32.mrb[0].mxu0
        %4581 = vmatprep.mubr.f32.mxu0 0.0
        %4582 = vmatmul.mubr.f32.gmra.mrb[0].mxu0 %v609
        %v4583 = vpop.f32.mrb[0].mxu0
        %v4584 = vadd.f32 %v4500, %v4583
        %v4585 = vpop.f32.mrb[0].mxu0
        %4586 = vmatprep.mubr.f32.mxu0 0.0
        %4587 = vmatmul.mubr.f32.gmra.mrb[0].mxu0 %v610
        %v4588 = vpop.f32.mrb[0].mxu0
        %v4589 = vadd.f32 %v4500, %v4588
        %v4590 = vpop.f32.mrb[0].mxu0
        %4591 = vmatprep.mubr.f32.mxu0 0.0
        %4592 = vmatmul.mubr.f32.gmra.mrb[0].mxu0 %v611
        %v4593 = vpop.f32.mrb[0].mxu0
        %v4594 = vadd.f32 %v4500, %v4593
        %v4595 = vpop.f32.mrb[0].mxu0
        %4596 = vmatprep.mubr.f32.mxu0 0.0
        %4597 = vmatmul.mubr.f32.gmra.mrb[0].mxu0 %v612
        %v4598 = vpop.f32.mrb[0].mxu0
        %v4599 = vadd.f32 %v4500, %v4598
        %v4600 = vpop.f32.mrb[0].mxu0
        %4601 = vmatprep.mubr.f32.mxu0 0.0
        %4602 = vmatmul.mubr.f32.gmra.mrb[0].mxu0 %v613
        %v4603 = vpop.f32.mrb[0].mxu0
        %v4604 = vadd.f32 %v4500, %v4603
        %v4605 = vpop.f32.mrb[0].mxu0
        %4606 = vmatprep.mubr.f32.mxu0 0.0
        %4607 = vmatmul.mubr.f32.gmra.mrb[0].mxu0 %v614
        %v4608 = vpop.f32.mrb[0].mxu0
        %v4609 = vadd.f32 %v4500, %v4608
        %v4610 = vpop.f32.mrb[0].mxu0
        %4611 = vmatprep.mubr.f32.mxu0 0.0
        %4612 = vmatmul.mubr.f32.gmra.mrb[0].mxu0 %v615
        %v4613 = vpop.f32.mrb[0].mxu0
        %v4614 = vadd.f32 %v4500, %v4613
        %v4615 = vpop.f32.mrb[0].mxu0
        %4616 = vmatprep.mubr.f32.mxu0 0.0
        %4617 = vmatmul.mubr.f32.gmra.mrb[0].mxu0 %v616
        %v4618 = vpop.f32.mrb[0].mxu0
        %v4619 = vadd.f32 %v4500, %v4618
        %v4620 = vpop.f32.mrb[0].mxu0
        %4621 = vmatprep.mubr.f32.mxu0 0.0
        %4622 = vmatmul.mubr.f32.gmra.mrb[0].mxu0 %v617
        %v4623 = vpop.f32.mrb[0].mxu0
        %v4624 = vadd.f32 %v4500, %v4623
        %v4625 = vpop.f32.mrb[0].mxu0
        %4626 = vmatprep.mubr.f32.mxu0 0.0
        %4627 = vmatmul.mubr.f32.gmra.mrb[0].mxu0 %v618
        %v4628 = vpop.f32.mrb[0].mxu0
        %v4629 = vadd.f32 %v4500, %v4628
        %v4630 = vpop.f32.mrb[0].mxu0
        %4631 = vmatprep.mubr.f32.mxu0 0.0
        %4632 = vmatmul.mubr.f32.gmra.mrb[0].mxu0 %v619
        %v4633 = vpop.f32.mrb[0].mxu0
        %v4634 = vadd.f32 %v4500, %v4633
        %v4635 = vpop.f32.mrb[0].mxu0
        %4636 = vmatprep.mubr.f32.mxu0 0.0
        %4637 = vmatmul.mubr.f32.gmra.mrb[0].mxu0 %v620
        %v4638 = vpop.f32.mrb[0].mxu0
        %v4639 = vadd.f32 %v4500, %v4638
        %v4640 = vpop.f32.mrb[0].mxu0
        %4641 = vmatprep.mubr.f32.mxu0 0.0
        %4642 = vmatmul.mubr.f32.gmra.mrb[0].mxu0 %v621
        %v4643 = vpop.f32.mrb[0].mxu0
        %v4644 = vadd.f32 %v4500, %v4643
        %v4645 = vpop.f32.mrb[0].mxu0
        %4646 = vdwg.mxu0
        %s4647 = scalar_lea.vmem %s4, 384
        %v4648 = vld [vmem:[%s4647] sm:$0xff]
        %v4649 = vld [vmem:[%s4647 + $0x8] sm:$0xff]
        %v4650 = vld [vmem:[%s4647 + $0x10] sm:$0xff]
        %v4651 = vld [vmem:[%s4647 + $0x18] sm:$0xff]
        %v4652 = vld [vmem:[%s4647 + $0x20] sm:$0xff]
        %v4653 = vld [vmem:[%s4647 + $0x28] sm:$0xff]
        %v4654 = vld [vmem:[%s4647 + $0x30] sm:$0xff]
        %v4655 = vld [vmem:[%s4647 + $0x38] sm:$0xff]
        %v4656 = vld [vmem:[%s4647 + $0x40] sm:$0xff]
        %v4657 = vld [vmem:[%s4647 + $0x48] sm:$0xff]
        %v4658 = vld [vmem:[%s4647 + $0x50] sm:$0xff]
        %v4659 = vld [vmem:[%s4647 + $0x58] sm:$0xff]
        %v4660 = vld [vmem:[%s4647 + $0x60] sm:$0xff]
        %v4661 = vld [vmem:[%s4647 + $0x68] sm:$0xff]
        %v4662 = vld [vmem:[%s4647 + $0x70] sm:$0xff]
        %v4663 = vld [vmem:[%s4647 + $0x78] sm:$0xff]
        %s4664 = scalar_lea.vmem %s5, 3
        %v4665 = vld [vmem:[%s4664] sm:$0x1]
        %v4667 = vlaneseq
        %v4668 = vshrl.u32 %v4667, 7
        %v4669 = vsub.s32 0, %v4668
        %v4670 = vrot.slane %v4665, %v4669
        %4672 = vmatprep.subr.mxu0 0.0
        %4673 = vmatpush1.msra.mxu0 %v4648
        %4674 = vmatprep.subr.mxu0 0.0
        %4675 = vmatpush1.msra.mxu0 %v4649
        %4676 = vmatprep.subr.mxu0 0.0
        %4677 = vmatpush1.msra.mxu0 %v4650
        %4678 = vmatprep.subr.mxu0 0.0
        %4679 = vmatpush1.msra.mxu0 %v4651
        %4680 = vmatprep.subr.mxu0 0.0
        %4681 = vmatpush1.msra.mxu0 %v4652
        %4682 = vmatprep.subr.mxu0 0.0
        %4683 = vmatpush1.msra.mxu0 %v4653
        %4684 = vmatprep.subr.mxu0 0.0
        %4685 = vmatpush1.msra.mxu0 %v4654
        %4686 = vmatprep.subr.mxu0 0.0
        %4687 = vmatpush1.msra.mxu0 %v4655
        %4688 = vmatprep.subr.mxu0 0.0
        %4689 = vmatpush1.msra.mxu0 %v4656
        %4690 = vmatprep.subr.mxu0 0.0
        %4691 = vmatpush1.msra.mxu0 %v4657
        %4692 = vmatprep.subr.mxu0 0.0
        %4693 = vmatpush1.msra.mxu0 %v4658
        %4694 = vmatprep.subr.mxu0 0.0
        %4695 = vmatpush1.msra.mxu0 %v4659
        %4696 = vmatprep.subr.mxu0 0.0
        %4697 = vmatpush1.msra.mxu0 %v4660
        %4698 = vmatprep.subr.mxu0 0.0
        %4699 = vmatpush1.msra.mxu0 %v4661
        %4700 = vmatprep.subr.mxu0 0.0
        %4701 = vmatpush1.msra.mxu0 %v4662
        %4702 = vmatprep.subr.mxu0 0.0
        %4703 = vmatpush1.msra.mxu0 %v4663
        %4704 = vmatprep.subr.mxu0 0.0
        %4705 = vmatpush1.msra.mxu0 0.0
        %4706 = vmatprep.subr.mxu0 0.0
        %4707 = vmatpush1.msra.mxu0 0.0
        %4708 = vmatprep.subr.mxu0 0.0
        %4709 = vmatpush1.msra.mxu0 0.0
        %4710 = vmatprep.subr.mxu0 0.0
        %4711 = vmatpush1.msra.mxu0 0.0
        %4712 = vmatprep.subr.mxu0 0.0
        %4713 = vmatpush1.msra.mxu0 0.0
        %4714 = vmatprep.subr.mxu0 0.0
        %4715 = vmatpush1.msra.mxu0 0.0
        %4716 = vmatprep.subr.mxu0 0.0
        %4717 = vmatpush1.msra.mxu0 0.0
        %4718 = vmatprep.subr.mxu0 0.0
        %4719 = vmatpush1.msra.mxu0 0.0
        %4720 = vmatprep.subr.mxu0 0.0
        %4721 = vmatpush1.msra.mxu0 0.0
        %4722 = vmatprep.subr.mxu0 0.0
        %4723 = vmatpush1.msra.mxu0 0.0
        %4724 = vmatprep.subr.mxu0 0.0
        %4725 = vmatpush1.msra.mxu0 0.0
        %4726 = vmatprep.subr.mxu0 0.0
        %4727 = vmatpush1.msra.mxu0 0.0
        %4728 = vmatprep.subr.mxu0 0.0
        %4729 = vmatpush1.msra.mxu0 0.0
        %4730 = vmatprep.subr.mxu0 0.0
        %4731 = vmatpush1.msra.mxu0 0.0
        %4732 = vmatprep.subr.mxu0 0.0
        %4733 = vmatpush1.msra.mxu0 0.0
        %4734 = vmatprep.subr.mxu0 0.0
        %4735 = vmatpush1.msra.mxu0 0.0
        %4736 = vmatprep.mubr.f32.mxu0 0.0
        %4737 = vmatmul.mubr.f32.gmra.mrb[0].mxu0 %v606
        %v4738 = vpop.f32.mrb[0].mxu0
        %v4739 = vadd.f32 %v4670, %v4738
        %v4740 = vpop.f32.mrb[0].mxu0
        %4741 = vmatprep.mubr.f32.mxu0 0.0
        %4742 = vmatmul.mubr.f32.gmra.mrb[0].mxu0 %v607
        %v4743 = vpop.f32.mrb[0].mxu0
        %v4744 = vadd.f32 %v4670, %v4743
        %v4745 = vpop.f32.mrb[0].mxu0
        %4746 = vmatprep.mubr.f32.mxu0 0.0
        %4747 = vmatmul.mubr.f32.gmra.mrb[0].mxu0 %v608
        %v4748 = vpop.f32.mrb[0].mxu0
        %v4749 = vadd.f32 %v4670, %v4748
        %v4750 = vpop.f32.mrb[0].mxu0
        %4751 = vmatprep.mubr.f32.mxu0 0.0
        %4752 = vmatmul.mubr.f32.gmra.mrb[0].mxu0 %v609
        %v4753 = vpop.f32.mrb[0].mxu0
        %v4754 = vadd.f32 %v4670, %v4753
        %v4755 = vpop.f32.mrb[0].mxu0
        %4756 = vmatprep.mubr.f32.mxu0 0.0
        %4757 = vmatmul.mubr.f32.gmra.mrb[0].mxu0 %v610
        %v4758 = vpop.f32.mrb[0].mxu0
        %v4759 = vadd.f32 %v4670, %v4758
        %v4760 = vpop.f32.mrb[0].mxu0
        %4761 = vmatprep.mubr.f32.mxu0 0.0
        %4762 = vmatmul.mubr.f32.gmra.mrb[0].mxu0 %v611
        %v4763 = vpop.f32.mrb[0].mxu0
        %v4764 = vadd.f32 %v4670, %v4763
        %v4765 = vpop.f32.mrb[0].mxu0
        %4766 = vmatprep.mubr.f32.mxu0 0.0
        %4767 = vmatmul.mubr.f32.gmra.mrb[0].mxu0 %v612
        %v4768 = vpop.f32.mrb[0].mxu0
        %v4769 = vadd.f32 %v4670, %v4768
        %v4770 = vpop.f32.mrb[0].mxu0
        %4771 = vmatprep.mubr.f32.mxu0 0.0
        %4772 = vmatmul.mubr.f32.gmra.mrb[0].mxu0 %v613
        %v4773 = vpop.f32.mrb[0].mxu0
        %v4774 = vadd.f32 %v4670, %v4773
        %v4775 = vpop.f32.mrb[0].mxu0
        %4776 = vmatprep.mubr.f32.mxu0 0.0
        %4777 = vmatmul.mubr.f32.gmra.mrb[0].mxu0 %v614
        %v4778 = vpop.f32.mrb[0].mxu0
        %v4779 = vadd.f32 %v4670, %v4778
        %v4780 = vpop.f32.mrb[0].mxu0
        %4781 = vmatprep.mubr.f32.mxu0 0.0
        %4782 = vmatmul.mubr.f32.gmra.mrb[0].mxu0 %v615
        %v4783 = vpop.f32.mrb[0].mxu0
        %v4784 = vadd.f32 %v4670, %v4783
        %v4785 = vpop.f32.mrb[0].mxu0
        %4786 = vmatprep.mubr.f32.mxu0 0.0
        %4787 = vmatmul.mubr.f32.gmra.mrb[0].mxu0 %v616
        %v4788 = vpop.f32.mrb[0].mxu0
        %v4789 = vadd.f32 %v4670, %v4788
        %v4790 = vpop.f32.mrb[0].mxu0
        %4791 = vmatprep.mubr.f32.mxu0 0.0
        %4792 = vmatmul.mubr.f32.gmra.mrb[0].mxu0 %v617
        %v4793 = vpop.f32.mrb[0].mxu0
        %v4794 = vadd.f32 %v4670, %v4793
        %v4795 = vpop.f32.mrb[0].mxu0
        %4796 = vmatprep.mubr.f32.mxu0 0.0
        %4797 = vmatmul.mubr.f32.gmra.mrb[0].mxu0 %v618
        %v4798 = vpop.f32.mrb[0].mxu0
        %v4799 = vadd.f32 %v4670, %v4798
        %v4800 = vpop.f32.mrb[0].mxu0
        %4801 = vmatprep.mubr.f32.mxu0 0.0
        %4802 = vmatmul.mubr.f32.gmra.mrb[0].mxu0 %v619
        %v4803 = vpop.f32.mrb[0].mxu0
        %v4804 = vadd.f32 %v4670, %v4803
        %v4805 = vpop.f32.mrb[0].mxu0
        %4806 = vmatprep.mubr.f32.mxu0 0.0
        %4807 = vmatmul.mubr.f32.gmra.mrb[0].mxu0 %v620
        %v4808 = vpop.f32.mrb[0].mxu0
        %v4809 = vadd.f32 %v4670, %v4808
        %v4810 = vpop.f32.mrb[0].mxu0
        %4811 = vmatprep.mubr.f32.mxu0 0.0
        %4812 = vmatmul.mubr.f32.gmra.mrb[0].mxu0 %v621
        %v4813 = vpop.f32.mrb[0].mxu0
        %v4814 = vadd.f32 %v4670, %v4813
        %v4815 = vpop.f32.mrb[0].mxu0
        %4816 = vdwg.mxu0
        %s4817 = scalar_lea.vmem %s6, 384
        %v4818 = vld [vmem:[%s4817] sm:$0xff]
        %v4819 = vld [vmem:[%s4817 + $0x8] sm:$0xff]
        %v4820 = vld [vmem:[%s4817 + $0x10] sm:$0xff]
        %v4821 = vld [vmem:[%s4817 + $0x18] sm:$0xff]
        %v4822 = vld [vmem:[%s4817 + $0x20] sm:$0xff]
        %v4823 = vld [vmem:[%s4817 + $0x28] sm:$0xff]
        %v4824 = vld [vmem:[%s4817 + $0x30] sm:$0xff]
        %v4825 = vld [vmem:[%s4817 + $0x38] sm:$0xff]
        %v4826 = vld [vmem:[%s4817 + $0x40] sm:$0xff]
        %v4827 = vld [vmem:[%s4817 + $0x48] sm:$0xff]
        %v4828 = vld [vmem:[%s4817 + $0x50] sm:$0xff]
        %v4829 = vld [vmem:[%s4817 + $0x58] sm:$0xff]
        %v4830 = vld [vmem:[%s4817 + $0x60] sm:$0xff]
        %v4831 = vld [vmem:[%s4817 + $0x68] sm:$0xff]
        %v4832 = vld [vmem:[%s4817 + $0x70] sm:$0xff]
        %v4833 = vld [vmem:[%s4817 + $0x78] sm:$0xff]
        %s4834 = scalar_lea.vmem %s7, 3
        %v4835 = vld [vmem:[%s4834] sm:$0x1]
        %v4837 = vlaneseq
        %v4838 = vshrl.u32 %v4837, 7
        %v4839 = vsub.s32 0, %v4838
        %v4840 = vrot.slane %v4835, %v4839
        %4842 = vmatprep.subr.mxu0 0.0
        %4843 = vmatpush1.msra.mxu0 %v4818
        %4844 = vmatprep.subr.mxu0 0.0
        %4845 = vmatpush1.msra.mxu0 %v4819
        %4846 = vmatprep.subr.mxu0 0.0
        %4847 = vmatpush1.msra.mxu0 %v4820
        %4848 = vmatprep.subr.mxu0 0.0
        %4849 = vmatpush1.msra.mxu0 %v4821
        %4850 = vmatprep.subr.mxu0 0.0
        %4851 = vmatpush1.msra.mxu0 %v4822
        %4852 = vmatprep.subr.mxu0 0.0
        %4853 = vmatpush1.msra.mxu0 %v4823
        %4854 = vmatprep.subr.mxu0 0.0
        %4855 = vmatpush1.msra.mxu0 %v4824
        %4856 = vmatprep.subr.mxu0 0.0
        %4857 = vmatpush1.msra.mxu0 %v4825
        %4858 = vmatprep.subr.mxu0 0.0
        %4859 = vmatpush1.msra.mxu0 %v4826
        %4860 = vmatprep.subr.mxu0 0.0
        %4861 = vmatpush1.msra.mxu0 %v4827
        %4862 = vmatprep.subr.mxu0 0.0
        %4863 = vmatpush1.msra.mxu0 %v4828
        %4864 = vmatprep.subr.mxu0 0.0
        %4865 = vmatpush1.msra.mxu0 %v4829
        %4866 = vmatprep.subr.mxu0 0.0
        %4867 = vmatpush1.msra.mxu0 %v4830
        %4868 = vmatprep.subr.mxu0 0.0
        %4869 = vmatpush1.msra.mxu0 %v4831
        %4870 = vmatprep.subr.mxu0 0.0
        %4871 = vmatpush1.msra.mxu0 %v4832
        %4872 = vmatprep.subr.mxu0 0.0
        %4873 = vmatpush1.msra.mxu0 %v4833
        %4874 = vmatprep.subr.mxu0 0.0
        %4875 = vmatpush1.msra.mxu0 0.0
        %4876 = vmatprep.subr.mxu0 0.0
        %4877 = vmatpush1.msra.mxu0 0.0
        %4878 = vmatprep.subr.mxu0 0.0
        %4879 = vmatpush1.msra.mxu0 0.0
        %4880 = vmatprep.subr.mxu0 0.0
        %4881 = vmatpush1.msra.mxu0 0.0
        %4882 = vmatprep.subr.mxu0 0.0
        %4883 = vmatpush1.msra.mxu0 0.0
        %4884 = vmatprep.subr.mxu0 0.0
        %4885 = vmatpush1.msra.mxu0 0.0
        %4886 = vmatprep.subr.mxu0 0.0
        %4887 = vmatpush1.msra.mxu0 0.0
        %4888 = vmatprep.subr.mxu0 0.0
        %4889 = vmatpush1.msra.mxu0 0.0
        %4890 = vmatprep.subr.mxu0 0.0
        %4891 = vmatpush1.msra.mxu0 0.0
        %4892 = vmatprep.subr.mxu0 0.0
        %4893 = vmatpush1.msra.mxu0 0.0
        %4894 = vmatprep.subr.mxu0 0.0
        %4895 = vmatpush1.msra.mxu0 0.0
        %4896 = vmatprep.subr.mxu0 0.0
        %4897 = vmatpush1.msra.mxu0 0.0
        %4898 = vmatprep.subr.mxu0 0.0
        %4899 = vmatpush1.msra.mxu0 0.0
        %4900 = vmatprep.subr.mxu0 0.0
        %4901 = vmatpush1.msra.mxu0 0.0
        %4902 = vmatprep.subr.mxu0 0.0
        %4903 = vmatpush1.msra.mxu0 0.0
        %4904 = vmatprep.subr.mxu0 0.0
        %4905 = vmatpush1.msra.mxu0 0.0
        %4906 = vmatprep.mubr.f32.mxu0 0.0
        %4907 = vmatmul.mubr.f32.gmra.mrb[0].mxu0 %v606
        %v4908 = vpop.f32.mrb[0].mxu0
        %v4909 = vadd.f32 %v4840, %v4908
        %v4910 = vpop.f32.mrb[0].mxu0
        %4911 = vmatprep.mubr.f32.mxu0 0.0
        %4912 = vmatmul.mubr.f32.gmra.mrb[0].mxu0 %v607
        %v4913 = vpop.f32.mrb[0].mxu0
        %v4914 = vadd.f32 %v4840, %v4913
        %v4915 = vpop.f32.mrb[0].mxu0
        %4916 = vmatprep.mubr.f32.mxu0 0.0
        %4917 = vmatmul.mubr.f32.gmra.mrb[0].mxu0 %v608
        %v4918 = vpop.f32.mrb[0].mxu0
        %v4919 = vadd.f32 %v4840, %v4918
        %v4920 = vpop.f32.mrb[0].mxu0
        %4921 = vmatprep.mubr.f32.mxu0 0.0
        %4922 = vmatmul.mubr.f32.gmra.mrb[0].mxu0 %v609
        %v4923 = vpop.f32.mrb[0].mxu0
        %v4924 = vadd.f32 %v4840, %v4923
        %v4925 = vpop.f32.mrb[0].mxu0
        %4926 = vmatprep.mubr.f32.mxu0 0.0
        %4927 = vmatmul.mubr.f32.gmra.mrb[0].mxu0 %v610
        %v4928 = vpop.f32.mrb[0].mxu0
        %v4929 = vadd.f32 %v4840, %v4928
        %v4930 = vpop.f32.mrb[0].mxu0
        %4931 = vmatprep.mubr.f32.mxu0 0.0
        %4932 = vmatmul.mubr.f32.gmra.mrb[0].mxu0 %v611
        %v4933 = vpop.f32.mrb[0].mxu0
        %v4934 = vadd.f32 %v4840, %v4933
        %v4935 = vpop.f32.mrb[0].mxu0
        %4936 = vmatprep.mubr.f32.mxu0 0.0
        %4937 = vmatmul.mubr.f32.gmra.mrb[0].mxu0 %v612
        %v4938 = vpop.f32.mrb[0].mxu0
        %v4939 = vadd.f32 %v4840, %v4938
        %v4940 = vpop.f32.mrb[0].mxu0
        %4941 = vmatprep.mubr.f32.mxu0 0.0
        %4942 = vmatmul.mubr.f32.gmra.mrb[0].mxu0 %v613
        %v4943 = vpop.f32.mrb[0].mxu0
        %v4944 = vadd.f32 %v4840, %v4943
        %v4945 = vpop.f32.mrb[0].mxu0
        %4946 = vmatprep.mubr.f32.mxu0 0.0
        %4947 = vmatmul.mubr.f32.gmra.mrb[0].mxu0 %v614
        %v4948 = vpop.f32.mrb[0].mxu0
        %v4949 = vadd.f32 %v4840, %v4948
        %v4950 = vpop.f32.mrb[0].mxu0
        %4951 = vmatprep.mubr.f32.mxu0 0.0
        %4952 = vmatmul.mubr.f32.gmra.mrb[0].mxu0 %v615
        %v4953 = vpop.f32.mrb[0].mxu0
        %v4954 = vadd.f32 %v4840, %v4953
        %v4955 = vpop.f32.mrb[0].mxu0
        %4956 = vmatprep.mubr.f32.mxu0 0.0
        %4957 = vmatmul.mubr.f32.gmra.mrb[0].mxu0 %v616
        %v4958 = vpop.f32.mrb[0].mxu0
        %v4959 = vadd.f32 %v4840, %v4958
        %v4960 = vpop.f32.mrb[0].mxu0
        %4961 = vmatprep.mubr.f32.mxu0 0.0
        %4962 = vmatmul.mubr.f32.gmra.mrb[0].mxu0 %v617
        %v4963 = vpop.f32.mrb[0].mxu0
        %v4964 = vadd.f32 %v4840, %v4963
        %v4965 = vpop.f32.mrb[0].mxu0
        %4966 = vmatprep.mubr.f32.mxu0 0.0
        %4967 = vmatmul.mubr.f32.gmra.mrb[0].mxu0 %v618
        %v4968 = vpop.f32.mrb[0].mxu0
        %v4969 = vadd.f32 %v4840, %v4968
        %v4970 = vpop.f32.mrb[0].mxu0
        %4971 = vmatprep.mubr.f32.mxu0 0.0
        %4972 = vmatmul.mubr.f32.gmra.mrb[0].mxu0 %v619
        %v4973 = vpop.f32.mrb[0].mxu0
        %v4974 = vadd.f32 %v4840, %v4973
        %v4975 = vpop.f32.mrb[0].mxu0
        %4976 = vmatprep.mubr.f32.mxu0 0.0
        %4977 = vmatmul.mubr.f32.gmra.mrb[0].mxu0 %v620
        %v4978 = vpop.f32.mrb[0].mxu0
        %v4979 = vadd.f32 %v4840, %v4978
        %v4980 = vpop.f32.mrb[0].mxu0
        %4981 = vmatprep.mubr.f32.mxu0 0.0
        %4982 = vmatmul.mubr.f32.gmra.mrb[0].mxu0 %v621
        %v4983 = vpop.f32.mrb[0].mxu0
        %v4984 = vadd.f32 %v4840, %v4983
        %v4985 = vpop.f32.mrb[0].mxu0
        %4986 = vdwg.mxu0
        %v4988 = vsel %vm1161, %v4569, 0
        %v4991 = vsel %vm1161, %v4574, 0
        %v4994 = vsel %vm1161, %v4579, 0
        %v4997 = vsel %vm1161, %v4584, 0
        %v5000 = vsel %vm1161, %v4589, 0
        %v5003 = vsel %vm1161, %v4594, 0
        %v5006 = vsel %vm1161, %v4599, 0
        %v5009 = vsel %vm1161, %v4604, 0
        %v5012 = vsel %vm1161, %v4609, 0
        %v5015 = vsel %vm1161, %v4614, 0
        %v5018 = vsel %vm1161, %v4619, 0
        %v5021 = vsel %vm1161, %v4624, 0
        %v5024 = vsel %vm1161, %v4629, 0
        %v5027 = vsel %vm1161, %v4634, 0
        %v5030 = vsel %vm1161, %v4639, 0
        %v5033 = vsel %vm1161, %v4644, 0
        %v5036 = vsel %vm1161, %v4739, 0
        %v5039 = vsel %vm1161, %v4744, 0
        %v5042 = vsel %vm1161, %v4749, 0
        %v5045 = vsel %vm1161, %v4754, 0
        %v5048 = vsel %vm1161, %v4759, 0
        %v5051 = vsel %vm1161, %v4764, 0
        %v5054 = vsel %vm1161, %v4769, 0
        %v5057 = vsel %vm1161, %v4774, 0
        %v5060 = vsel %vm1161, %v4779, 0
        %v5063 = vsel %vm1161, %v4784, 0
        %v5066 = vsel %vm1161, %v4789, 0
        %v5069 = vsel %vm1161, %v4794, 0
        %v5072 = vsel %vm1161, %v4799, 0
        %v5075 = vsel %vm1161, %v4804, 0
        %v5078 = vsel %vm1161, %v4809, 0
        %v5081 = vsel %vm1161, %v4814, 0
        %5083 = vmatprep.subr.mxu0 0.0
        %5084 = vmatpush1.xpose.msra.mxu0 %v5036
        %5085 = vmatprep.subr.mxu0 0.0
        %5086 = vmatpush1.xpose.msra.mxu0 %v5039
        %5087 = vmatprep.subr.mxu0 0.0
        %5088 = vmatpush1.xpose.msra.mxu0 %v5042
        %5089 = vmatprep.subr.mxu0 0.0
        %5090 = vmatpush1.xpose.msra.mxu0 %v5045
        %5091 = vmatprep.subr.mxu0 0.0
        %5092 = vmatpush1.xpose.msra.mxu0 %v5048
        %5093 = vmatprep.subr.mxu0 0.0
        %5094 = vmatpush1.xpose.msra.mxu0 %v5051
        %5095 = vmatprep.subr.mxu0 0.0
        %5096 = vmatpush1.xpose.msra.mxu0 %v5054
        %5097 = vmatprep.subr.mxu0 0.0
        %5098 = vmatpush1.xpose.msra.mxu0 %v5057
        %5099 = vmatprep.subr.mxu0 0.0
        %5100 = vmatpush1.xpose.msra.mxu0 %v5060
        %5101 = vmatprep.subr.mxu0 0.0
        %5102 = vmatpush1.xpose.msra.mxu0 %v5063
        %5103 = vmatprep.subr.mxu0 0.0
        %5104 = vmatpush1.xpose.msra.mxu0 %v5066
        %5105 = vmatprep.subr.mxu0 0.0
        %5106 = vmatpush1.xpose.msra.mxu0 %v5069
        %5107 = vmatprep.subr.mxu0 0.0
        %5108 = vmatpush1.xpose.msra.mxu0 %v5072
        %5109 = vmatprep.subr.mxu0 0.0
        %5110 = vmatpush1.xpose.msra.mxu0 %v5075
        %5111 = vmatprep.subr.mxu0 0.0
        %5112 = vmatpush1.xpose.msra.mxu0 %v5078
        %5113 = vmatprep.subr.mxu0 0.0
        %5114 = vmatpush1.xpose.msra.mxu0 %v5081
        %5115 = vmatprep.subr.mxu0 0.0
        %5116 = vmatpush1.xpose.msra.mxu0 0.0
        %5117 = vmatprep.subr.mxu0 0.0
        %5118 = vmatpush1.xpose.msra.mxu0 0.0
        %5119 = vmatprep.subr.mxu0 0.0
        %5120 = vmatpush1.xpose.msra.mxu0 0.0
        %5121 = vmatprep.subr.mxu0 0.0
        %5122 = vmatpush1.xpose.msra.mxu0 0.0
        %5123 = vmatprep.subr.mxu0 0.0
        %5124 = vmatpush1.xpose.msra.mxu0 0.0
        %5125 = vmatprep.subr.mxu0 0.0
        %5126 = vmatpush1.xpose.msra.mxu0 0.0
        %5127 = vmatprep.subr.mxu0 0.0
        %5128 = vmatpush1.xpose.msra.mxu0 0.0
        %5129 = vmatprep.subr.mxu0 0.0
        %5130 = vmatpush1.xpose.msra.mxu0 0.0
        %5131 = vmatprep.subr.mxu0 0.0
        %5132 = vmatpush1.xpose.msra.mxu0 0.0
        %5133 = vmatprep.subr.mxu0 0.0
        %5134 = vmatpush1.xpose.msra.mxu0 0.0
        %5135 = vmatprep.subr.mxu0 0.0
        %5136 = vmatpush1.xpose.msra.mxu0 0.0
        %5137 = vmatprep.subr.mxu0 0.0
        %5138 = vmatpush1.xpose.msra.mxu0 0.0
        %5139 = vmatprep.subr.mxu0 0.0
        %5140 = vmatpush1.xpose.msra.mxu0 0.0
        %5141 = vmatprep.subr.mxu0 0.0
        %5142 = vmatpush1.xpose.msra.mxu0 0.0
        %5143 = vmatprep.subr.mxu0 0.0
        %5144 = vmatpush1.xpose.msra.mxu0 0.0
        %5145 = vmatprep.subr.mxu0 0.0
        %5146 = vmatpush1.xpose.msra.mxu0 0.0
        %5147 = vmatprep.mubr.f32.mxu0 0.0
        %5148 = vmatmul.mubr.f32.gmra.mrb[0].mxu0 %v4988
        %v5149 = vpop.f32.mrb[0].mxu0
        %v5150 = vadd.f32 0.0, %v5149
        %v5151 = vpop.f32.mrb[0].mxu0
        %5152 = vmatprep.mubr.f32.mxu0 0.0
        %5153 = vmatmul.mubr.f32.gmra.mrb[0].mxu0 %v4991
        %v5154 = vpop.f32.mrb[0].mxu0
        %v5155 = vadd.f32 0.0, %v5154
        %v5156 = vpop.f32.mrb[0].mxu0
        %5157 = vmatprep.mubr.f32.mxu0 0.0
        %5158 = vmatmul.mubr.f32.gmra.mrb[0].mxu0 %v4994
        %v5159 = vpop.f32.mrb[0].mxu0
        %v5160 = vadd.f32 0.0, %v5159
        %v5161 = vpop.f32.mrb[0].mxu0
        %5162 = vmatprep.mubr.f32.mxu0 0.0
        %5163 = vmatmul.mubr.f32.gmra.mrb[0].mxu0 %v4997
        %v5164 = vpop.f32.mrb[0].mxu0
        %v5165 = vadd.f32 0.0, %v5164
        %v5166 = vpop.f32.mrb[0].mxu0
        %5167 = vmatprep.mubr.f32.mxu0 0.0
        %5168 = vmatmul.mubr.f32.gmra.mrb[0].mxu0 %v5000
        %v5169 = vpop.f32.mrb[0].mxu0
        %v5170 = vadd.f32 0.0, %v5169
        %v5171 = vpop.f32.mrb[0].mxu0
        %5172 = vmatprep.mubr.f32.mxu0 0.0
        %5173 = vmatmul.mubr.f32.gmra.mrb[0].mxu0 %v5003
        %v5174 = vpop.f32.mrb[0].mxu0
        %v5175 = vadd.f32 0.0, %v5174
        %v5176 = vpop.f32.mrb[0].mxu0
        %5177 = vmatprep.mubr.f32.mxu0 0.0
        %5178 = vmatmul.mubr.f32.gmra.mrb[0].mxu0 %v5006
        %v5179 = vpop.f32.mrb[0].mxu0
        %v5180 = vadd.f32 0.0, %v5179
        %v5181 = vpop.f32.mrb[0].mxu0
        %5182 = vmatprep.mubr.f32.mxu0 0.0
        %5183 = vmatmul.mubr.f32.gmra.mrb[0].mxu0 %v5009
        %v5184 = vpop.f32.mrb[0].mxu0
        %v5185 = vadd.f32 0.0, %v5184
        %v5186 = vpop.f32.mrb[0].mxu0
        %5187 = vmatprep.mubr.f32.mxu0 0.0
        %5188 = vmatmul.mubr.f32.gmra.mrb[0].mxu0 %v5012
        %v5189 = vpop.f32.mrb[0].mxu0
        %v5190 = vadd.f32 0.0, %v5189
        %v5191 = vpop.f32.mrb[0].mxu0
        %5192 = vmatprep.mubr.f32.mxu0 0.0
        %5193 = vmatmul.mubr.f32.gmra.mrb[0].mxu0 %v5015
        %v5194 = vpop.f32.mrb[0].mxu0
        %v5195 = vadd.f32 0.0, %v5194
        %v5196 = vpop.f32.mrb[0].mxu0
        %5197 = vmatprep.mubr.f32.mxu0 0.0
        %5198 = vmatmul.mubr.f32.gmra.mrb[0].mxu0 %v5018
        %v5199 = vpop.f32.mrb[0].mxu0
        %v5200 = vadd.f32 0.0, %v5199
        %v5201 = vpop.f32.mrb[0].mxu0
        %5202 = vmatprep.mubr.f32.mxu0 0.0
        %5203 = vmatmul.mubr.f32.gmra.mrb[0].mxu0 %v5021
        %v5204 = vpop.f32.mrb[0].mxu0
        %v5205 = vadd.f32 0.0, %v5204
        %v5206 = vpop.f32.mrb[0].mxu0
        %5207 = vmatprep.mubr.f32.mxu0 0.0
        %5208 = vmatmul.mubr.f32.gmra.mrb[0].mxu0 %v5024
        %v5209 = vpop.f32.mrb[0].mxu0
        %v5210 = vadd.f32 0.0, %v5209
        %v5211 = vpop.f32.mrb[0].mxu0
        %5212 = vmatprep.mubr.f32.mxu0 0.0
        %5213 = vmatmul.mubr.f32.gmra.mrb[0].mxu0 %v5027
        %v5214 = vpop.f32.mrb[0].mxu0
        %v5215 = vadd.f32 0.0, %v5214
        %v5216 = vpop.f32.mrb[0].mxu0
        %5217 = vmatprep.mubr.f32.mxu0 0.0
        %5218 = vmatmul.mubr.f32.gmra.mrb[0].mxu0 %v5030
        %v5219 = vpop.f32.mrb[0].mxu0
        %v5220 = vadd.f32 0.0, %v5219
        %v5221 = vpop.f32.mrb[0].mxu0
        %5222 = vmatprep.mubr.f32.mxu0 0.0
        %5223 = vmatmul.mubr.f32.gmra.mrb[0].mxu0 %v5033
        %v5224 = vpop.f32.mrb[0].mxu0
        %v5225 = vadd.f32 0.0, %v5224
        %v5226 = vpop.f32.mrb[0].mxu0
        %5227 = vdwg.mxu0
        %v5228 = vmul.f32 %v5150, 0.17677669
        %v5229 = vmul.f32 %v5155, 0.17677669
        %v5230 = vmul.f32 %v5160, 0.17677669
        %v5231 = vmul.f32 %v5165, 0.17677669
        %v5232 = vmul.f32 %v5170, 0.17677669
        %v5233 = vmul.f32 %v5175, 0.17677669
        %v5234 = vmul.f32 %v5180, 0.17677669
        %v5235 = vmul.f32 %v5185, 0.17677669
        %v5236 = vmul.f32 %v5190, 0.17677669
        %v5237 = vmul.f32 %v5195, 0.17677669
        %v5238 = vmul.f32 %v5200, 0.17677669
        %v5239 = vmul.f32 %v5205, 0.17677669
        %v5240 = vmul.f32 %v5210, 0.17677669
        %v5241 = vmul.f32 %v5215, 0.17677669
        %v5242 = vmul.f32 %v5220, 0.17677669
        %v5243 = vmul.f32 %v5225, 0.17677669
        %v5244 = vsel %vm641, %v5228, -1e+30
        %v5245 = vsel %vm642, %v5229, -1e+30
        %v5246 = vsel %vm643, %v5230, -1e+30
        %v5247 = vsel %vm644, %v5231, -1e+30
        %v5248 = vsel %vm645, %v5232, -1e+30
        %v5249 = vsel %vm646, %v5233, -1e+30
        %v5250 = vsel %vm647, %v5234, -1e+30
        %v5251 = vsel %vm648, %v5235, -1e+30
        %v5252 = vsel %vm649, %v5236, -1e+30
        %v5253 = vsel %vm650, %v5237, -1e+30
        %v5254 = vsel %vm651, %v5238, -1e+30
        %v5255 = vsel %vm652, %v5239, -1e+30
        %v5256 = vsel %vm653, %v5240, -1e+30
        %v5257 = vsel %vm654, %v5241, -1e+30
        %v5258 = vsel %vm655, %v5242, -1e+30
        %v5259 = vsel %vm656, %v5243, -1e+30
        %5260 = vmax.xlane.f32.xlu0 %v5244
        %v5261 = vpop.xlane.xlu0 %5260
        %5262 = vmax.xlane.f32.xlu0 %v5245
        %v5263 = vpop.xlane.xlu0 %5262
        %5264 = vmax.xlane.f32.xlu0 %v5246
        %v5265 = vpop.xlane.xlu0 %5264
        %5266 = vmax.xlane.f32.xlu0 %v5247
        %v5267 = vpop.xlane.xlu0 %5266
        %5268 = vmax.xlane.f32.xlu0 %v5248
        %v5269 = vpop.xlane.xlu0 %5268
        %5270 = vmax.xlane.f32.xlu0 %v5249
        %v5271 = vpop.xlane.xlu0 %5270
        %5272 = vmax.xlane.f32.xlu0 %v5250
        %v5273 = vpop.xlane.xlu0 %5272
        %5274 = vmax.xlane.f32.xlu0 %v5251
        %v5275 = vpop.xlane.xlu0 %5274
        %5276 = vmax.xlane.f32.xlu0 %v5252
        %v5277 = vpop.xlane.xlu0 %5276
        %5278 = vmax.xlane.f32.xlu0 %v5253
        %v5279 = vpop.xlane.xlu0 %5278
        %5280 = vmax.xlane.f32.xlu0 %v5254
        %v5281 = vpop.xlane.xlu0 %5280
        %5282 = vmax.xlane.f32.xlu0 %v5255
        %v5283 = vpop.xlane.xlu0 %5282
        %5284 = vmax.xlane.f32.xlu0 %v5256
        %v5285 = vpop.xlane.xlu0 %5284
        %5286 = vmax.xlane.f32.xlu0 %v5257
        %v5287 = vpop.xlane.xlu0 %5286
        %5288 = vmax.xlane.f32.xlu0 %v5258
        %v5289 = vpop.xlane.xlu0 %5288
        %5290 = vmax.xlane.f32.xlu0 %v5259
        %v5291 = vpop.xlane.xlu0 %5290
        %v5292 = vsub.f32 %v5244, %v5261
        %v5293 = vsub.f32 %v5245, %v5263
        %v5294 = vsub.f32 %v5246, %v5265
        %v5295 = vsub.f32 %v5247, %v5267
        %v5296 = vsub.f32 %v5248, %v5269
        %v5297 = vsub.f32 %v5249, %v5271
        %v5298 = vsub.f32 %v5250, %v5273
        %v5299 = vsub.f32 %v5251, %v5275
        %v5300 = vsub.f32 %v5252, %v5277
        %v5301 = vsub.f32 %v5253, %v5279
        %v5302 = vsub.f32 %v5254, %v5281
        %v5303 = vsub.f32 %v5255, %v5283
        %v5304 = vsub.f32 %v5256, %v5285
        %v5305 = vsub.f32 %v5257, %v5287
        %v5306 = vsub.f32 %v5258, %v5289
        %v5307 = vsub.f32 %v5259, %v5291
        %v5308 = vmul.f32 %v5292, 1.442695
        %v5309 = vpow.pop %v5308
        %v5310 = vmul.f32 %v5293, 1.442695
        %v5311 = vpow.pop %v5310
        %v5312 = vmul.f32 %v5294, 1.442695
        %v5313 = vpow.pop %v5312
        %v5314 = vmul.f32 %v5295, 1.442695
        %v5315 = vpow.pop %v5314
        %v5316 = vmul.f32 %v5296, 1.442695
        %v5317 = vpow.pop %v5316
        %v5318 = vmul.f32 %v5297, 1.442695
        %v5319 = vpow.pop %v5318
        %v5320 = vmul.f32 %v5298, 1.442695
        %v5321 = vpow.pop %v5320
        %v5322 = vmul.f32 %v5299, 1.442695
        %v5323 = vpow.pop %v5322
        %v5324 = vmul.f32 %v5300, 1.442695
        %v5325 = vpow.pop %v5324
        %v5326 = vmul.f32 %v5301, 1.442695
        %v5327 = vpow.pop %v5326
        %v5328 = vmul.f32 %v5302, 1.442695
        %v5329 = vpow.pop %v5328
        %v5330 = vmul.f32 %v5303, 1.442695
        %v5331 = vpow.pop %v5330
        %v5332 = vmul.f32 %v5304, 1.442695
        %v5333 = vpow.pop %v5332
        %v5334 = vmul.f32 %v5305, 1.442695
        %v5335 = vpow.pop %v5334
        %v5336 = vmul.f32 %v5306, 1.442695
        %v5337 = vpow.pop %v5336
        %v5338 = vmul.f32 %v5307, 1.442695
        %v5339 = vpow.pop %v5338
        %5340 = vadd.xlane.f32.xlu0 %v5309
        %v5341 = vpop.xlane.xlu0 %5340
        %5342 = vadd.xlane.f32.xlu0 %v5311
        %v5343 = vpop.xlane.xlu0 %5342
        %5344 = vadd.xlane.f32.xlu0 %v5313
        %v5345 = vpop.xlane.xlu0 %5344
        %5346 = vadd.xlane.f32.xlu0 %v5315
        %v5347 = vpop.xlane.xlu0 %5346
        %5348 = vadd.xlane.f32.xlu0 %v5317
        %v5349 = vpop.xlane.xlu0 %5348
        %5350 = vadd.xlane.f32.xlu0 %v5319
        %v5351 = vpop.xlane.xlu0 %5350
        %5352 = vadd.xlane.f32.xlu0 %v5321
        %v5353 = vpop.xlane.xlu0 %5352
        %5354 = vadd.xlane.f32.xlu0 %v5323
        %v5355 = vpop.xlane.xlu0 %5354
        %5356 = vadd.xlane.f32.xlu0 %v5325
        %v5357 = vpop.xlane.xlu0 %5356
        %5358 = vadd.xlane.f32.xlu0 %v5327
        %v5359 = vpop.xlane.xlu0 %5358
        %5360 = vadd.xlane.f32.xlu0 %v5329
        %v5361 = vpop.xlane.xlu0 %5360
        %5362 = vadd.xlane.f32.xlu0 %v5331
        %v5363 = vpop.xlane.xlu0 %5362
        %5364 = vadd.xlane.f32.xlu0 %v5333
        %v5365 = vpop.xlane.xlu0 %5364
        %5366 = vadd.xlane.f32.xlu0 %v5335
        %v5367 = vpop.xlane.xlu0 %5366
        %5368 = vadd.xlane.f32.xlu0 %v5337
        %v5369 = vpop.xlane.xlu0 %5368
        %5370 = vadd.xlane.f32.xlu0 %v5339
        %v5371 = vpop.xlane.xlu0 %5370
        %v5372 = vrcp.pop %v5341
        %v5373 = vmul.f32 %v5309, %v5372
        %v5374 = vrcp.pop %v5343
        %v5375 = vmul.f32 %v5311, %v5374
        %v5376 = vrcp.pop %v5345
        %v5377 = vmul.f32 %v5313, %v5376
        %v5378 = vrcp.pop %v5347
        %v5379 = vmul.f32 %v5315, %v5378
        %v5380 = vrcp.pop %v5349
        %v5381 = vmul.f32 %v5317, %v5380
        %v5382 = vrcp.pop %v5351
        %v5383 = vmul.f32 %v5319, %v5382
        %v5384 = vrcp.pop %v5353
        %v5385 = vmul.f32 %v5321, %v5384
        %v5386 = vrcp.pop %v5355
        %v5387 = vmul.f32 %v5323, %v5386
        %v5388 = vrcp.pop %v5357
        %v5389 = vmul.f32 %v5325, %v5388
        %v5390 = vrcp.pop %v5359
        %v5391 = vmul.f32 %v5327, %v5390
        %v5392 = vrcp.pop %v5361
        %v5393 = vmul.f32 %v5329, %v5392
        %v5394 = vrcp.pop %v5363
        %v5395 = vmul.f32 %v5331, %v5394
        %v5396 = vrcp.pop %v5365
        %v5397 = vmul.f32 %v5333, %v5396
        %v5398 = vrcp.pop %v5367
        %v5399 = vmul.f32 %v5335, %v5398
        %v5400 = vrcp.pop %v5369
        %v5401 = vmul.f32 %v5337, %v5400
        %v5402 = vrcp.pop %v5371
        %v5403 = vmul.f32 %v5339, %v5402
        %5404 = vmatprep.subr.mxu0 0.0
        %5405 = vmatpush1.msra.mxu0 %v4909
        %5406 = vmatprep.subr.mxu0 0.0
        %5407 = vmatpush1.msra.mxu0 %v4914
        %5408 = vmatprep.subr.mxu0 0.0
        %5409 = vmatpush1.msra.mxu0 %v4919
        %5410 = vmatprep.subr.mxu0 0.0
        %5411 = vmatpush1.msra.mxu0 %v4924
        %5412 = vmatprep.subr.mxu0 0.0
        %5413 = vmatpush1.msra.mxu0 %v4929
        %5414 = vmatprep.subr.mxu0 0.0
        %5415 = vmatpush1.msra.mxu0 %v4934
        %5416 = vmatprep.subr.mxu0 0.0
        %5417 = vmatpush1.msra.mxu0 %v4939
        %5418 = vmatprep.subr.mxu0 0.0
        %5419 = vmatpush1.msra.mxu0 %v4944
        %5420 = vmatprep.subr.mxu0 0.0
        %5421 = vmatpush1.msra.mxu0 %v4949
        %5422 = vmatprep.subr.mxu0 0.0
        %5423 = vmatpush1.msra.mxu0 %v4954
        %5424 = vmatprep.subr.mxu0 0.0
        %5425 = vmatpush1.msra.mxu0 %v4959
        %5426 = vmatprep.subr.mxu0 0.0
        %5427 = vmatpush1.msra.mxu0 %v4964
        %5428 = vmatprep.subr.mxu0 0.0
        %5429 = vmatpush1.msra.mxu0 %v4969
        %5430 = vmatprep.subr.mxu0 0.0
        %5431 = vmatpush1.msra.mxu0 %v4974
        %5432 = vmatprep.subr.mxu0 0.0
        %5433 = vmatpush1.msra.mxu0 %v4979
        %5434 = vmatprep.subr.mxu0 0.0
        %5435 = vmatpush1.msra.mxu0 %v4984
        %5436 = vmatprep.subr.mxu0 0.0
        %5437 = vmatpush1.msra.mxu0 0.0
        %5438 = vmatprep.subr.mxu0 0.0
        %5439 = vmatpush1.msra.mxu0 0.0
        %5440 = vmatprep.subr.mxu0 0.0
        %5441 = vmatpush1.msra.mxu0 0.0
        %5442 = vmatprep.subr.mxu0 0.0
        %5443 = vmatpush1.msra.mxu0 0.0
        %5444 = vmatprep.subr.mxu0 0.0
        %5445 = vmatpush1.msra.mxu0 0.0
        %5446 = vmatprep.subr.mxu0 0.0
        %5447 = vmatpush1.msra.mxu0 0.0
        %5448 = vmatprep.subr.mxu0 0.0
        %5449 = vmatpush1.msra.mxu0 0.0
        %5450 = vmatprep.subr.mxu0 0.0
        %5451 = vmatpush1.msra.mxu0 0.0
        %5452 = vmatprep.subr.mxu0 0.0
        %5453 = vmatpush1.msra.mxu0 0.0
        %5454 = vmatprep.subr.mxu0 0.0
        %5455 = vmatpush1.msra.mxu0 0.0
        %5456 = vmatprep.subr.mxu0 0.0
        %5457 = vmatpush1.msra.mxu0 0.0
        %5458 = vmatprep.subr.mxu0 0.0
        %5459 = vmatpush1.msra.mxu0 0.0
        %5460 = vmatprep.subr.mxu0 0.0
        %5461 = vmatpush1.msra.mxu0 0.0
        %5462 = vmatprep.subr.mxu0 0.0
        %5463 = vmatpush1.msra.mxu0 0.0
        %5464 = vmatprep.subr.mxu0 0.0
        %5465 = vmatpush1.msra.mxu0 0.0
        %5466 = vmatprep.subr.mxu0 0.0
        %5467 = vmatpush1.msra.mxu0 0.0
        %5468 = vmatprep.mubr.f32.mxu0 0.0
        %5469 = vmatmul.mubr.f32.gmra.mrb[0].mxu0 %v5373
        %v5470 = vpop.f32.mrb[0].mxu0
        %v5471 = vadd.f32 0.0, %v5470
        %v5472 = vpop.f32.mrb[0].mxu0
        %5473 = vmatprep.mubr.f32.mxu0 0.0
        %5474 = vmatmul.mubr.f32.gmra.mrb[0].mxu0 %v5375
        %v5475 = vpop.f32.mrb[0].mxu0
        %v5476 = vadd.f32 0.0, %v5475
        %v5477 = vpop.f32.mrb[0].mxu0
        %5478 = vmatprep.mubr.f32.mxu0 0.0
        %5479 = vmatmul.mubr.f32.gmra.mrb[0].mxu0 %v5377
        %v5480 = vpop.f32.mrb[0].mxu0
        %v5481 = vadd.f32 0.0, %v5480
        %v5482 = vpop.f32.mrb[0].mxu0
        %5483 = vmatprep.mubr.f32.mxu0 0.0
        %5484 = vmatmul.mubr.f32.gmra.mrb[0].mxu0 %v5379
        %v5485 = vpop.f32.mrb[0].mxu0
        %v5486 = vadd.f32 0.0, %v5485
        %v5487 = vpop.f32.mrb[0].mxu0
        %5488 = vmatprep.mubr.f32.mxu0 0.0
        %5489 = vmatmul.mubr.f32.gmra.mrb[0].mxu0 %v5381
        %v5490 = vpop.f32.mrb[0].mxu0
        %v5491 = vadd.f32 0.0, %v5490
        %v5492 = vpop.f32.mrb[0].mxu0
        %5493 = vmatprep.mubr.f32.mxu0 0.0
        %5494 = vmatmul.mubr.f32.gmra.mrb[0].mxu0 %v5383
        %v5495 = vpop.f32.mrb[0].mxu0
        %v5496 = vadd.f32 0.0, %v5495
        %v5497 = vpop.f32.mrb[0].mxu0
        %5498 = vmatprep.mubr.f32.mxu0 0.0
        %5499 = vmatmul.mubr.f32.gmra.mrb[0].mxu0 %v5385
        %v5500 = vpop.f32.mrb[0].mxu0
        %v5501 = vadd.f32 0.0, %v5500
        %v5502 = vpop.f32.mrb[0].mxu0
        %5503 = vmatprep.mubr.f32.mxu0 0.0
        %5504 = vmatmul.mubr.f32.gmra.mrb[0].mxu0 %v5387
        %v5505 = vpop.f32.mrb[0].mxu0
        %v5506 = vadd.f32 0.0, %v5505
        %v5507 = vpop.f32.mrb[0].mxu0
        %5508 = vmatprep.mubr.f32.mxu0 0.0
        %5509 = vmatmul.mubr.f32.gmra.mrb[0].mxu0 %v5389
        %v5510 = vpop.f32.mrb[0].mxu0
        %v5511 = vadd.f32 0.0, %v5510
        %v5512 = vpop.f32.mrb[0].mxu0
        %5513 = vmatprep.mubr.f32.mxu0 0.0
        %5514 = vmatmul.mubr.f32.gmra.mrb[0].mxu0 %v5391
        %v5515 = vpop.f32.mrb[0].mxu0
        %v5516 = vadd.f32 0.0, %v5515
        %v5517 = vpop.f32.mrb[0].mxu0
        %5518 = vmatprep.mubr.f32.mxu0 0.0
        %5519 = vmatmul.mubr.f32.gmra.mrb[0].mxu0 %v5393
        %v5520 = vpop.f32.mrb[0].mxu0
        %v5521 = vadd.f32 0.0, %v5520
        %v5522 = vpop.f32.mrb[0].mxu0
        %5523 = vmatprep.mubr.f32.mxu0 0.0
        %5524 = vmatmul.mubr.f32.gmra.mrb[0].mxu0 %v5395
        %v5525 = vpop.f32.mrb[0].mxu0
        %v5526 = vadd.f32 0.0, %v5525
        %v5527 = vpop.f32.mrb[0].mxu0
        %5528 = vmatprep.mubr.f32.mxu0 0.0
        %5529 = vmatmul.mubr.f32.gmra.mrb[0].mxu0 %v5397
        %v5530 = vpop.f32.mrb[0].mxu0
        %v5531 = vadd.f32 0.0, %v5530
        %v5532 = vpop.f32.mrb[0].mxu0
        %5533 = vmatprep.mubr.f32.mxu0 0.0
        %5534 = vmatmul.mubr.f32.gmra.mrb[0].mxu0 %v5399
        %v5535 = vpop.f32.mrb[0].mxu0
        %v5536 = vadd.f32 0.0, %v5535
        %v5537 = vpop.f32.mrb[0].mxu0
        %5538 = vmatprep.mubr.f32.mxu0 0.0
        %5539 = vmatmul.mubr.f32.gmra.mrb[0].mxu0 %v5401
        %v5540 = vpop.f32.mrb[0].mxu0
        %v5541 = vadd.f32 0.0, %v5540
        %v5542 = vpop.f32.mrb[0].mxu0
        %5543 = vmatprep.mubr.f32.mxu0 0.0
        %5544 = vmatmul.mubr.f32.gmra.mrb[0].mxu0 %v5403
        %v5545 = vpop.f32.mrb[0].mxu0
        %v5546 = vadd.f32 0.0, %v5545
        %v5547 = vpop.f32.mrb[0].mxu0
        %5548 = vdwg.mxu0
        %s5549 = scalar_lea.vmem %s8, 96
        %v5550 = vld [vmem:[%s5549] sm:$0xff]
        %v5551 = vld [vmem:[%s5549 + $0x8] sm:$0xff]
        %v5552 = vld [vmem:[%s5549 + $0x10] sm:$0xff]
        %v5553 = vld [vmem:[%s5549 + $0x18] sm:$0xff]
        %v5555 = vsel %vm1161, %v5471, 0
        %v5558 = vsel %vm1161, %v5476, 0
        %v5561 = vsel %vm1161, %v5481, 0
        %v5564 = vsel %vm1161, %v5486, 0
        %v5567 = vsel %vm1161, %v5491, 0
        %v5570 = vsel %vm1161, %v5496, 0
        %v5573 = vsel %vm1161, %v5501, 0
        %v5576 = vsel %vm1161, %v5506, 0
        %v5579 = vsel %vm1161, %v5511, 0
        %v5582 = vsel %vm1161, %v5516, 0
        %v5585 = vsel %vm1161, %v5521, 0
        %v5588 = vsel %vm1161, %v5526, 0
        %v5591 = vsel %vm1161, %v5531, 0
        %v5594 = vsel %vm1161, %v5536, 0
        %v5597 = vsel %vm1161, %v5541, 0
        %v5600 = vsel %vm1161, %v5546, 0
        %5602 = vmatprep.subr.mxu0 0.0
        %5603 = vmatpush1.msra.mxu0 %v5550
        %5604 = vmatprep.subr.mxu0 0.0
        %5605 = vmatpush1.msra.mxu0 %v5551
        %5606 = vmatprep.subr.mxu0 0.0
        %5607 = vmatpush1.msra.mxu0 %v5552
        %5608 = vmatprep.subr.mxu0 0.0
        %5609 = vmatpush1.msra.mxu0 %v5553
        %5610 = vmatprep.subr.mxu0 0.0
        %5611 = vmatpush1.msra.mxu0 0.0
        %5612 = vmatprep.subr.mxu0 0.0
        %5613 = vmatpush1.msra.mxu0 0.0
        %5614 = vmatprep.subr.mxu0 0.0
        %5615 = vmatpush1.msra.mxu0 0.0
        %5616 = vmatprep.subr.mxu0 0.0
        %5617 = vmatpush1.msra.mxu0 0.0
        %5618 = vmatprep.subr.mxu0 0.0
        %5619 = vmatpush1.msra.mxu0 0.0
        %5620 = vmatprep.subr.mxu0 0.0
        %5621 = vmatpush1.msra.mxu0 0.0
        %5622 = vmatprep.subr.mxu0 0.0
        %5623 = vmatpush1.msra.mxu0 0.0
        %5624 = vmatprep.subr.mxu0 0.0
        %5625 = vmatpush1.msra.mxu0 0.0
        %5626 = vmatprep.subr.mxu0 0.0
        %5627 = vmatpush1.msra.mxu0 0.0
        %5628 = vmatprep.subr.mxu0 0.0
        %5629 = vmatpush1.msra.mxu0 0.0
        %5630 = vmatprep.subr.mxu0 0.0
        %5631 = vmatpush1.msra.mxu0 0.0
        %5632 = vmatprep.subr.mxu0 0.0
        %5633 = vmatpush1.msra.mxu0 0.0
        %5634 = vmatprep.subr.mxu0 0.0
        %5635 = vmatpush1.msra.mxu0 0.0
        %5636 = vmatprep.subr.mxu0 0.0
        %5637 = vmatpush1.msra.mxu0 0.0
        %5638 = vmatprep.subr.mxu0 0.0
        %5639 = vmatpush1.msra.mxu0 0.0
        %5640 = vmatprep.subr.mxu0 0.0
        %5641 = vmatpush1.msra.mxu0 0.0
        %5642 = vmatprep.subr.mxu0 0.0
        %5643 = vmatpush1.msra.mxu0 0.0
        %5644 = vmatprep.subr.mxu0 0.0
        %5645 = vmatpush1.msra.mxu0 0.0
        %5646 = vmatprep.subr.mxu0 0.0
        %5647 = vmatpush1.msra.mxu0 0.0
        %5648 = vmatprep.subr.mxu0 0.0
        %5649 = vmatpush1.msra.mxu0 0.0
        %5650 = vmatprep.subr.mxu0 0.0
        %5651 = vmatpush1.msra.mxu0 0.0
        %5652 = vmatprep.subr.mxu0 0.0
        %5653 = vmatpush1.msra.mxu0 0.0
        %5654 = vmatprep.subr.mxu0 0.0
        %5655 = vmatpush1.msra.mxu0 0.0
        %5656 = vmatprep.subr.mxu0 0.0
        %5657 = vmatpush1.msra.mxu0 0.0
        %5658 = vmatprep.subr.mxu0 0.0
        %5659 = vmatpush1.msra.mxu0 0.0
        %5660 = vmatprep.subr.mxu0 0.0
        %5661 = vmatpush1.msra.mxu0 0.0
        %5662 = vmatprep.subr.mxu0 0.0
        %5663 = vmatpush1.msra.mxu0 0.0
        %5664 = vmatprep.subr.mxu0 0.0
        %5665 = vmatpush1.msra.mxu0 0.0
        %5666 = vmatprep.mubr.f32.mxu0 0.0
        %5667 = vmatmul.mubr.f32.gmra.mrb[0].mxu0 %v5555
        %v5668 = vpop.f32.mrb[0].mxu0
        %v5669 = vadd.f32 0.0, %v5668
        %v5670 = vpop.f32.mrb[0].mxu0
        %5671 = vmatprep.mubr.f32.mxu0 0.0
        %5672 = vmatmul.mubr.f32.gmra.mrb[0].mxu0 %v5558
        %v5673 = vpop.f32.mrb[0].mxu0
        %v5674 = vadd.f32 0.0, %v5673
        %v5675 = vpop.f32.mrb[0].mxu0
        %5676 = vmatprep.mubr.f32.mxu0 0.0
        %5677 = vmatmul.mubr.f32.gmra.mrb[0].mxu0 %v5561
        %v5678 = vpop.f32.mrb[0].mxu0
        %v5679 = vadd.f32 0.0, %v5678
        %v5680 = vpop.f32.mrb[0].mxu0
        %5681 = vmatprep.mubr.f32.mxu0 0.0
        %5682 = vmatmul.mubr.f32.gmra.mrb[0].mxu0 %v5564
        %v5683 = vpop.f32.mrb[0].mxu0
        %v5684 = vadd.f32 0.0, %v5683
        %v5685 = vpop.f32.mrb[0].mxu0
        %5686 = vmatprep.mubr.f32.mxu0 0.0
        %5687 = vmatmul.mubr.f32.gmra.mrb[0].mxu0 %v5567
        %v5688 = vpop.f32.mrb[0].mxu0
        %v5689 = vadd.f32 0.0, %v5688
        %v5690 = vpop.f32.mrb[0].mxu0
        %5691 = vmatprep.mubr.f32.mxu0 0.0
        %5692 = vmatmul.mubr.f32.gmra.mrb[0].mxu0 %v5570
        %v5693 = vpop.f32.mrb[0].mxu0
        %v5694 = vadd.f32 0.0, %v5693
        %v5695 = vpop.f32.mrb[0].mxu0
        %5696 = vmatprep.mubr.f32.mxu0 0.0
        %5697 = vmatmul.mubr.f32.gmra.mrb[0].mxu0 %v5573
        %v5698 = vpop.f32.mrb[0].mxu0
        %v5699 = vadd.f32 0.0, %v5698
        %v5700 = vpop.f32.mrb[0].mxu0
        %5701 = vmatprep.mubr.f32.mxu0 0.0
        %5702 = vmatmul.mubr.f32.gmra.mrb[0].mxu0 %v5576
        %v5703 = vpop.f32.mrb[0].mxu0
        %v5704 = vadd.f32 0.0, %v5703
        %v5705 = vpop.f32.mrb[0].mxu0
        %5706 = vmatprep.mubr.f32.mxu0 0.0
        %5707 = vmatmul.mubr.f32.gmra.mrb[0].mxu0 %v5579
        %v5708 = vpop.f32.mrb[0].mxu0
        %v5709 = vadd.f32 0.0, %v5708
        %v5710 = vpop.f32.mrb[0].mxu0
        %5711 = vmatprep.mubr.f32.mxu0 0.0
        %5712 = vmatmul.mubr.f32.gmra.mrb[0].mxu0 %v5582
        %v5713 = vpop.f32.mrb[0].mxu0
        %v5714 = vadd.f32 0.0, %v5713
        %v5715 = vpop.f32.mrb[0].mxu0
        %5716 = vmatprep.mubr.f32.mxu0 0.0
        %5717 = vmatmul.mubr.f32.gmra.mrb[0].mxu0 %v5585
        %v5718 = vpop.f32.mrb[0].mxu0
        %v5719 = vadd.f32 0.0, %v5718
        %v5720 = vpop.f32.mrb[0].mxu0
        %5721 = vmatprep.mubr.f32.mxu0 0.0
        %5722 = vmatmul.mubr.f32.gmra.mrb[0].mxu0 %v5588
        %v5723 = vpop.f32.mrb[0].mxu0
        %v5724 = vadd.f32 0.0, %v5723
        %v5725 = vpop.f32.mrb[0].mxu0
        %5726 = vmatprep.mubr.f32.mxu0 0.0
        %5727 = vmatmul.mubr.f32.gmra.mrb[0].mxu0 %v5591
        %v5728 = vpop.f32.mrb[0].mxu0
        %v5729 = vadd.f32 0.0, %v5728
        %v5730 = vpop.f32.mrb[0].mxu0
        %5731 = vmatprep.mubr.f32.mxu0 0.0
        %5732 = vmatmul.mubr.f32.gmra.mrb[0].mxu0 %v5594
        %v5733 = vpop.f32.mrb[0].mxu0
        %v5734 = vadd.f32 0.0, %v5733
        %v5735 = vpop.f32.mrb[0].mxu0
        %5736 = vmatprep.mubr.f32.mxu0 0.0
        %5737 = vmatmul.mubr.f32.gmra.mrb[0].mxu0 %v5597
        %v5738 = vpop.f32.mrb[0].mxu0
        %v5739 = vadd.f32 0.0, %v5738
        %v5740 = vpop.f32.mrb[0].mxu0
        %5741 = vmatprep.mubr.f32.mxu0 0.0
        %5742 = vmatmul.mubr.f32.gmra.mrb[0].mxu0 %v5600
        %v5743 = vpop.f32.mrb[0].mxu0
        %v5744 = vadd.f32 0.0, %v5743
        %v5745 = vpop.f32.mrb[0].mxu0
        %5746 = vdwg.mxu0
        %v5747 = vadd.f32 %v4461, %v5669
        %v5748 = vadd.f32 %v4462, %v5674
        %v5749 = vadd.f32 %v4463, %v5679
        %v5750 = vadd.f32 %v4464, %v5684
        %v5751 = vadd.f32 %v4465, %v5689
        %v5752 = vadd.f32 %v4466, %v5694
        %v5753 = vadd.f32 %v4467, %v5699
        %v5754 = vadd.f32 %v4468, %v5704
        %v5755 = vadd.f32 %v4469, %v5709
        %v5756 = vadd.f32 %v4470, %v5714
        %v5757 = vadd.f32 %v4471, %v5719
        %v5758 = vadd.f32 %v4472, %v5724
        %v5759 = vadd.f32 %v4473, %v5729
        %v5760 = vadd.f32 %v4474, %v5734
        %v5761 = vadd.f32 %v4475, %v5739
        %v5762 = vadd.f32 %v4476, %v5744
        %v5763 = vadd.f32 %v358, %v5747
        %v5764 = vadd.f32 %v359, %v5748
        %v5765 = vadd.f32 %v360, %v5749
        %v5766 = vadd.f32 %v361, %v5750
        %v5767 = vadd.f32 %v362, %v5751
        %v5768 = vadd.f32 %v363, %v5752
        %v5769 = vadd.f32 %v364, %v5753
        %v5770 = vadd.f32 %v365, %v5754
        %v5771 = vadd.f32 %v366, %v5755
        %v5772 = vadd.f32 %v367, %v5756
        %v5773 = vadd.f32 %v368, %v5757
        %v5774 = vadd.f32 %v369, %v5758
        %v5775 = vadd.f32 %v370, %v5759
        %v5776 = vadd.f32 %v371, %v5760
        %v5777 = vadd.f32 %v372, %v5761
        %v5778 = vadd.f32 %v373, %v5762
        %v5779 = vld [vmem:[%s9] sm:$0x1]
        %v5781 = vlaneseq
        %v5782 = vshrl.u32 %v5781, 7
        %v5783 = vsub.s32 0, %v5782
        %v5784 = vrot.slane %v5779, %v5783
        %v5786 = vadd.f32 %v5763, %v5784
        %v5787 = vadd.f32 %v5764, %v5784
        %v5788 = vadd.f32 %v5765, %v5784
        %v5789 = vadd.f32 %v5766, %v5784
        %v5790 = vadd.f32 %v5767, %v5784
        %v5791 = vadd.f32 %v5768, %v5784
        %v5792 = vadd.f32 %v5769, %v5784
        %v5793 = vadd.f32 %v5770, %v5784
        %v5794 = vadd.f32 %v5771, %v5784
        %v5795 = vadd.f32 %v5772, %v5784
        %v5796 = vadd.f32 %v5773, %v5784
        %v5797 = vadd.f32 %v5774, %v5784
        %v5798 = vadd.f32 %v5775, %v5784
        %v5799 = vadd.f32 %v5776, %v5784
        %v5800 = vadd.f32 %v5777, %v5784
        %v5801 = vadd.f32 %v5778, %v5784
        %5802 = vst [vmem:[%s352] sm:$0xff] %v5786
        %5803 = vst [vmem:[%s352 + $0x8] sm:$0xff] %v5787
        %5804 = vst [vmem:[%s352 + $0x10] sm:$0xff] %v5788
        %5805 = vst [vmem:[%s352 + $0x18] sm:$0xff] %v5789
        %5806 = vst [vmem:[%s352 + $0x20] sm:$0xff] %v5790
        %5807 = vst [vmem:[%s352 + $0x28] sm:$0xff] %v5791
        %5808 = vst [vmem:[%s352 + $0x30] sm:$0xff] %v5792
        %5809 = vst [vmem:[%s352 + $0x38] sm:$0xff] %v5793
        %5810 = vst [vmem:[%s352 + $0x40] sm:$0xff] %v5794
        %5811 = vst [vmem:[%s352 + $0x48] sm:$0xff] %v5795
        %5812 = vst [vmem:[%s352 + $0x50] sm:$0xff] %v5796
        %5813 = vst [vmem:[%s352 + $0x58] sm:$0xff] %v5797
        %5814 = vst [vmem:[%s352 + $0x60] sm:$0xff] %v5798
        %5815 = vst [vmem:[%s352 + $0x68] sm:$0xff] %v5799
        %5816 = vst [vmem:[%s352 + $0x70] sm:$0xff] %v5800
        %5817 = vst [vmem:[%s352 + $0x78] sm:$0xff] %v5801
        %s5818 = sand.u32 %s247, 1
        %s5819 = scalar_lea.sflag [#allocation3], %s5818
        %s5820 = sand.u32 %s247, 1
        %s5821 = smul.addr %s5820, 128
        %s5822 = scalar_lea.vmem [#allocation2], %s5821
        // Predicated region
        $region61: #{tpu_custom_call.1} parent=59 // pred_check
          %p5823 = pneg %p257
        $region62: #{tpu_custom_call.1} parent=59 // pred_check_branch
          %5825 = sbr.rel (%p5823) target = $region64
        $region63: #{tpu_custom_call.1} parent=59 // pred_region
          %s5827 = ssub.s32 2048, 2048
          %5828 = vsyncadd %s5819, %s5827
          %s5829 = smul.addr %s24, 16
          %s5830 = smul.addr %s5829, 128
          %s5831 = scalar_lea.hbm %s10, %s5830
          %s5832 = sshll.u32 %s5822, 4
          %s5833 = int_to_ptr.vmem [resolvable:$true] %s5832
          %5838 = dma.vmem_to_hbm [thread:$0]  %s5833, 2048, %s5831, %s5819, 128, 128, 8
        $region64: #{tpu_custom_call.1} parent=59 // pred_fallthru
          _
      $region60: #{tpu_custom_call.1} parent=5 // pred_fallthru
        _
      %p5839 = scmp.le.s32.totalorder 2, %s19
      // Predicated region
      $region65: #{tpu_custom_call.1} parent=5 // pred_check
        %p5840 = pneg %p5839
      $region66: #{tpu_custom_call.1} parent=5 // pred_check_branch
        %5842 = sbr.rel (%p5840) target = $region68
      $region67: #{tpu_custom_call.1} parent=5 // pred_region
        %s5843 = ssub.s32 %s19, 2
        // Predicated region
        $region69: #{tpu_custom_call.1} parent=67 // pred_check
          %p5844 = pneg %p263
        $region70: #{tpu_custom_call.1} parent=67 // pred_check_branch
          %5846 = sbr.rel (%p5844) target = $region72
        $region71: #{tpu_custom_call.1} parent=67 // pred_region
          %s5847 = sand.u32 %s248, 1
          %s5848 = scalar_lea.sflag [#allocation3], %s5847
          %s5849 = sand.u32 %s248, 1
          %s5850 = smul.addr %s5849, 128
          %s5851 = scalar_lea.vmem [#allocation2], %s5850
          %5852 = dma.done %s5848, 2048
        $region72: #{tpu_custom_call.1} parent=67 // pred_fallthru
          _
      $region68: #{tpu_custom_call.1} parent=5 // pred_fallthru
        _
    $region6: #{tpu_custom_call.1} parent=1 // loop_footer
      %s23 = sadd.s32 1, %s19
    $region7: #{tpu_custom_call.1} parent=1 // loop_footer_branch
      %18 = sbr.rel target = $region3
    $region8: #{tpu_custom_call.1} parent=1 // loop_exit
      _
    %5853 = vsyncpa [#allocation3], 1
    %s5854 = scalar_lea.sflag [#allocation3], 1
    %5855 = vsyncpa %s5854, 1

</llo_original>
